<compile_context>
chip_gen: v7x
topology: tpu7x:2x2x1
jax: 0.10.0
libtpu: 0.0.40
codegen_flags: <defaults>
</compile_context>

<pallas_src>
import functools

import jax
import jax.numpy as jnp
from jax.experimental import pallas as pl
from jax.experimental.pallas import tpu as pltpu


def _round_up(x: int, m: int) -> int:
    return (x + m - 1) // m * m


def cbow_kernel(idx_ref,                   # SMEM (scalar prefetch): (B_pad*C,) int32
                emb_ref, w1_ref, b1_ref,   # grid-invariant VMEM blocks
                w2_ref, b2_ref,            # vocab-tiled VMEM blocks
                out_ref,                   # output tile (tb, tv) f32
                emb_acc_ref, h_ref,        # VMEM scratch (tb, E_pad) / (tb, H_pad)
                *, ctx: int):
    bt = pl.program_id(0)
    vt = pl.program_id(1)
    tb, _ = emb_acc_ref.shape
    inv_c = 1.0 / ctx

    # Gather + mean + linear1 + relu only once per batch tile; the activations
    # stay resident in scratch across the sequential ("arbitrary") vocab axis.
    @pl.when(vt == 0)
    def _():
        base = bt * tb
        # Static unrolled gather: groups of 8 rows -> one aligned (8, 128) store.
        for g in range(tb // 8):
            rows = []
            for r in range(8):
                flat = (base + g * 8 + r) * ctx
                acc = emb_ref[pl.ds(idx_ref[flat], 1), :]
                for c in range(1, ctx):
                    acc = acc + emb_ref[pl.ds(idx_ref[flat + c], 1), :]
                rows.append(acc)
            emb_acc_ref[g * 8:(g + 1) * 8, :] = jnp.concatenate(rows, axis=0) * inv_c

        h = jnp.dot(emb_acc_ref[...].astype(w1_ref.dtype), w1_ref[...],
                    preferred_element_type=jnp.float32)
        h_ref[...] = jnp.maximum(h + b1_ref[...], 0.0)

    # Per-vocab-tile second linear (+ bias in the tile epilogue).
    out = jnp.dot(h_ref[...].astype(w2_ref.dtype), w2_ref[...],
                  preferred_element_type=jnp.float32)
    out_ref[...] = out + b2_ref[...]


def cbow_forward(inputs, emb_table, w1, b1, w2, b2, *, tb=None, tv=None):
    B, C = inputs.shape
    V, E = emb_table.shape
    H = w1.shape[1]
    assert w1.shape[0] == E and w2.shape == (H, V)
    assert b1.shape == (H,) and b2.shape == (V,)

    # Lane-dense / MXU-friendly padding.
    E_pad = _round_up(E, 128)
    H_pad = _round_up(H, 128)

    B_pad = _round_up(B, 8)
    if tb is None:
        tb = min(B_pad, 128)          # keeps the static gather unroll modest
    tb = _round_up(tb, 8)
    B_pad = _round_up(B_pad, tb)

    V_pad = _round_up(V, 128)
    if tv is None:
        tv = min(V_pad, 512)          # double-buffered w2/out tiles stay small
    tv = _round_up(tv, 128)
    V_pad = _round_up(V_pad, tv)

    f32, bf16 = jnp.float32, jnp.bfloat16
    idx_p = jnp.zeros((B_pad * C,), jnp.int32).at[:B * C].set(
        inputs.astype(jnp.int32).reshape(-1))
    emb_p = jnp.zeros((V_pad, E_pad), f32).at[:V, :E].set(emb_table.astype(f32))
    w1_p = jnp.zeros((E_pad, H_pad), bf16).at[:E, :H].set(w1.astype(bf16))
    b1_p = jnp.zeros((1, H_pad), f32).at[0, :H].set(b1.astype(f32))
    w2_p = jnp.zeros((H_pad, V_pad), bf16).at[:H, :V].set(w2.astype(bf16))
    b2_p = jnp.zeros((1, V_pad), f32).at[0, :V].set(b2.astype(f32))

    grid = (B_pad // tb, V_pad // tv)

    flops = 2 * B_pad * (C * E_pad + E_pad * H_pad + H_pad * V_pad)
    bytes_accessed = (idx_p.size * 4 + emb_p.size * 4 + w1_p.size * 2
                      + b1_p.size * 4 + w2_p.size * 2 + b2_p.size * 4
                      + B_pad * V_pad * 4)

    out_p = pl.pallas_call(
        functools.partial(cbow_kernel, ctx=C),
        out_shape=jax.ShapeDtypeStruct((B_pad, V_pad), jnp.float32),
        grid_spec=pltpu.PrefetchScalarGridSpec(
            num_scalar_prefetch=1,              # flat token ids -> SMEM
            grid=grid,
            in_specs=[
                pl.BlockSpec((V_pad, E_pad), lambda bt, vt, idx: (0, 0)),
                pl.BlockSpec((E_pad, H_pad), lambda bt, vt, idx: (0, 0)),
                pl.BlockSpec((1, H_pad), lambda bt, vt, idx: (0, 0)),
                pl.BlockSpec((H_pad, tv), lambda bt, vt, idx: (0, vt)),
                pl.BlockSpec((1, tv), lambda bt, vt, idx: (0, vt)),
            ],
            out_specs=pl.BlockSpec((tb, tv), lambda bt, vt, idx: (bt, vt)),
            scratch_shapes=[
                pltpu.VMEM((tb, E_pad), jnp.float32),   # mean context embeddings
                pltpu.VMEM((tb, H_pad), jnp.float32),   # relu(linear1) activations
            ],
        ),
        compiler_params=pltpu.CompilerParams(
            dimension_semantics=("parallel", "arbitrary"),
        ),
        cost_estimate=pl.CostEstimate(
            flops=flops, transcendentals=0, bytes_accessed=bytes_accessed),
    )(idx_p, emb_p, w1_p, b1_p, w2_p, b2_p)

    return out_p[:B, :V]


if __name__ == "__main__":
    # Small deterministic problem (2 batch tiles x 2 vocab tiles after padding).
    B = 128         # batch
    C = 4           # context window (2 * CONTEXT_SIZE)
    V = 1000        # vocab_size
    E = 10          # embedding_dim
    H = 128         # hidden width of linear1

    key = jax.random.PRNGKey(0)
    k_idx, k_emb, k_w1, k_b1, k_w2, k_b2 = jax.random.split(key, 6)

    inputs = jax.random.randint(k_idx, (B, C), 0, V, dtype=jnp.int32)
    emb_table = jax.random.normal(k_emb, (V, E), dtype=jnp.float32)
    w1 = jax.random.normal(k_w1, (E, H), dtype=jnp.float32) * 0.1
    b1 = jax.random.normal(k_b1, (H,), dtype=jnp.float32) * 0.1
    w2 = jax.random.normal(k_w2, (H, V), dtype=jnp.float32) * 0.1
    b2 = jax.random.normal(k_b2, (V,), dtype=jnp.float32) * 0.1

    out = cbow_forward(inputs, emb_table, w1, b1, w2, b2, tb=64)
    out = jax.block_until_ready(out)

    # Pure-JAX f32 reference (the PyTorch module's forward semantics).
    embeds_ref = emb_table[inputs].mean(axis=1)
    h_ref = jnp.maximum(embeds_ref @ w1 + b1, 0.0)
    ref = h_ref @ w2 + b2

    assert out.shape == (B, V)
    max_err = float(jnp.max(jnp.abs(out - ref)))
    assert jnp.allclose(out, ref, atol=2e-2, rtol=2e-2), max_err

    print("KERNEL_OK")
</pallas_src>

<mosaic_0001>
module attributes {stable_mosaic.version = 11 : i64} {
  func.func @cbow_kernel(%arg0: i32, %arg1: i32, %arg2: memref<512xi32, #tpu.memory_space<smem>>, %arg3: memref<1024x128xf32, #tpu.memory_space<vmem>>, %arg4: memref<128x128xbf16, #tpu.memory_space<vmem>>, %arg5: memref<1x128xf32, #tpu.memory_space<vmem>>, %arg6: memref<128x512xbf16, #tpu.memory_space<vmem>>, %arg7: memref<1x512xf32, #tpu.memory_space<vmem>>, %arg8: memref<64x512xf32, #tpu.memory_space<vmem>>, %arg9: memref<64x128xf32, #tpu.memory_space<vmem>>, %arg10: memref<64x128xf32, #tpu.memory_space<vmem>>) attributes {dimension_semantics = [#tpu.dimension_semantics<parallel>, #tpu.dimension_semantics<arbitrary>], iteration_bounds = array<i64: 2, 2>, scalar_prefetch = 1 : i64, scratch_operands = 2 : i64, tpu.core_type = #tpu.core_type<tc>, window_params = [{pipeline_mode = #tpu.pipeline_mode<synchronous>, transform_indices = @transform_0, window_bounds = array<i64: 1024, 128>}, {pipeline_mode = #tpu.pipeline_mode<synchronous>, transform_indices = @transform_1, window_bounds = array<i64: 128, 128>}, {pipeline_mode = #tpu.pipeline_mode<synchronous>, transform_indices = @transform_2, window_bounds = array<i64: 1, 128>}, {transform_indices = @transform_3, window_bounds = array<i64: 128, 512>}, {transform_indices = @transform_4, window_bounds = array<i64: 1, 512>}, {transform_indices = @transform_5, window_bounds = array<i64: 64, 512>}]} {
    %c0_i32 = arith.constant 0 : i32
    %0 = arith.cmpi eq, %arg1, %c0_i32 : i32
    %1 = arith.extui %0 : i1 to i32
    %c0_i32_0 = arith.constant 0 : i32
    %2 = arith.cmpi ne, %1, %c0_i32_0 : i32
    scf.if %2 {
      %c64_i32 = arith.constant 64 : i32
      %11 = arith.muli %arg0, %c64_i32 : i32
      %c0_i32_8 = arith.constant 0 : i32
      %12 = arith.addi %11, %c0_i32_8 : i32
      %c0_i32_9 = arith.constant 0 : i32
      %13 = arith.addi %12, %c0_i32_9 : i32
      %c4_i32 = arith.constant 4 : i32
      %14 = arith.muli %13, %c4_i32 : i32
      %15 = arith.index_cast %14 : i32 to index
      %16 = memref.load %arg2[%15] : memref<512xi32, #tpu.memory_space<smem>>
      %17 = arith.index_cast %16 : i32 to index
      %c0_10 = arith.constant 0 : index
      %18 = vector.load %arg3[%17, %c0_10] : memref<1024x128xf32, #tpu.memory_space<vmem>>, vector<1x128xf32>
      %c1_i32 = arith.constant 1 : i32
      %19 = arith.addi %14, %c1_i32 : i32
      %20 = arith.index_cast %19 : i32 to index
      %21 = memref.load %arg2[%20] : memref<512xi32, #tpu.memory_space<smem>>
      %22 = arith.index_cast %21 : i32 to index
      %c0_11 = arith.constant 0 : index
      %23 = vector.load %arg3[%22, %c0_11] : memref<1024x128xf32, #tpu.memory_space<vmem>>, vector<1x128xf32>
      %24 = arith.addf %18, %23 : vector<1x128xf32>
      %c2_i32 = arith.constant 2 : i32
      %25 = arith.addi %14, %c2_i32 : i32
      %26 = arith.index_cast %25 : i32 to index
      %27 = memref.load %arg2[%26] : memref<512xi32, #tpu.memory_space<smem>>
      %28 = arith.index_cast %27 : i32 to index
      %c0_12 = arith.constant 0 : index
      %29 = vector.load %arg3[%28, %c0_12] : memref<1024x128xf32, #tpu.memory_space<vmem>>, vector<1x128xf32>
      %30 = arith.addf %24, %29 : vector<1x128xf32>
      %c3_i32 = arith.constant 3 : i32
      %31 = arith.addi %14, %c3_i32 : i32
      %32 = arith.index_cast %31 : i32 to index
      %33 = memref.load %arg2[%32] : memref<512xi32, #tpu.memory_space<smem>>
      %34 = arith.index_cast %33 : i32 to index
      %c0_13 = arith.constant 0 : index
      %35 = vector.load %arg3[%34, %c0_13] : memref<1024x128xf32, #tpu.memory_space<vmem>>, vector<1x128xf32>
      %36 = arith.addf %30, %35 : vector<1x128xf32>
      %c0_i32_14 = arith.constant 0 : i32
      %37 = arith.addi %11, %c0_i32_14 : i32
      %c1_i32_15 = arith.constant 1 : i32
      %38 = arith.addi %37, %c1_i32_15 : i32
      %c4_i32_16 = arith.constant 4 : i32
      %39 = arith.muli %38, %c4_i32_16 : i32
      %40 = arith.index_cast %39 : i32 to index
      %41 = memref.load %arg2[%40] : memref<512xi32, #tpu.memory_space<smem>>
      %42 = arith.index_cast %41 : i32 to index
      %c0_17 = arith.constant 0 : index
      %43 = vector.load %arg3[%42, %c0_17] : memref<1024x128xf32, #tpu.memory_space<vmem>>, vector<1x128xf32>
      %c1_i32_18 = arith.constant 1 : i32
      %44 = arith.addi %39, %c1_i32_18 : i32
      %45 = arith.index_cast %44 : i32 to index
      %46 = memref.load %arg2[%45] : memref<512xi32, #tpu.memory_space<smem>>
      %47 = arith.index_cast %46 : i32 to index
      %c0_19 = arith.constant 0 : index
      %48 = vector.load %arg3[%47, %c0_19] : memref<1024x128xf32, #tpu.memory_space<vmem>>, vector<1x128xf32>
      %49 = arith.addf %43, %48 : vector<1x128xf32>
      %c2_i32_20 = arith.constant 2 : i32
      %50 = arith.addi %39, %c2_i32_20 : i32
      %51 = arith.index_cast %50 : i32 to index
      %52 = memref.load %arg2[%51] : memref<512xi32, #tpu.memory_space<smem>>
      %53 = arith.index_cast %52 : i32 to index
      %c0_21 = arith.constant 0 : index
      %54 = vector.load %arg3[%53, %c0_21] : memref<1024x128xf32, #tpu.memory_space<vmem>>, vector<1x128xf32>
      %55 = arith.addf %49, %54 : vector<1x128xf32>
      %c3_i32_22 = arith.constant 3 : i32
      %56 = arith.addi %39, %c3_i32_22 : i32
      %57 = arith.index_cast %56 : i32 to index
      %58 = memref.load %arg2[%57] : memref<512xi32, #tpu.memory_space<smem>>
      %59 = arith.index_cast %58 : i32 to index
      %c0_23 = arith.constant 0 : index
      %60 = vector.load %arg3[%59, %c0_23] : memref<1024x128xf32, #tpu.memory_space<vmem>>, vector<1x128xf32>
      %61 = arith.addf %55, %60 : vector<1x128xf32>
      %c0_i32_24 = arith.constant 0 : i32
      %62 = arith.addi %11, %c0_i32_24 : i32
      %c2_i32_25 = arith.constant 2 : i32
      %63 = arith.addi %62, %c2_i32_25 : i32
      %c4_i32_26 = arith.constant 4 : i32
      %64 = arith.muli %63, %c4_i32_26 : i32
      %65 = arith.index_cast %64 : i32 to index
      %66 = memref.load %arg2[%65] : memref<512xi32, #tpu.memory_space<smem>>
      %67 = arith.index_cast %66 : i32 to index
      %c0_27 = arith.constant 0 : index
      %68 = vector.load %arg3[%67, %c0_27] : memref<1024x128xf32, #tpu.memory_space<vmem>>, vector<1x128xf32>
      %c1_i32_28 = arith.constant 1 : i32
      %69 = arith.addi %64, %c1_i32_28 : i32
      %70 = arith.index_cast %69 : i32 to index
      %71 = memref.load %arg2[%70] : memref<512xi32, #tpu.memory_space<smem>>
      %72 = arith.index_cast %71 : i32 to index
      %c0_29 = arith.constant 0 : index
      %73 = vector.load %arg3[%72, %c0_29] : memref<1024x128xf32, #tpu.memory_space<vmem>>, vector<1x128xf32>
      %74 = arith.addf %68, %73 : vector<1x128xf32>
      %c2_i32_30 = arith.constant 2 : i32
      %75 = arith.addi %64, %c2_i32_30 : i32
      %76 = arith.index_cast %75 : i32 to index
      %77 = memref.load %arg2[%76] : memref<512xi32, #tpu.memory_space<smem>>
      %78 = arith.index_cast %77 : i32 to index
      %c0_31 = arith.constant 0 : index
      %79 = vector.load %arg3[%78, %c0_31] : memref<1024x128xf32, #tpu.memory_space<vmem>>, vector<1x128xf32>
      %80 = arith.addf %74, %79 : vector<1x128xf32>
      %c3_i32_32 = arith.constant 3 : i32
      %81 = arith.addi %64, %c3_i32_32 : i32
      %82 = arith.index_cast %81 : i32 to index
      %83 = memref.load %arg2[%82] : memref<512xi32, #tpu.memory_space<smem>>
      %84 = arith.index_cast %83 : i32 to index
      %c0_33 = arith.constant 0 : index
      %85 = vector.load %arg3[%84, %c0_33] : memref<1024x128xf32, #tpu.memory_space<vmem>>, vector<1x128xf32>
      %86 = arith.addf %80, %85 : vector<1x128xf32>
      %c0_i32_34 = arith.constant 0 : i32
      %87 = arith.addi %11, %c0_i32_34 : i32
      %c3_i32_35 = arith.constant 3 : i32
      %88 = arith.addi %87, %c3_i32_35 : i32
      %c4_i32_36 = arith.constant 4 : i32
      %89 = arith.muli %88, %c4_i32_36 : i32
      %90 = arith.index_cast %89 : i32 to index
      %91 = memref.load %arg2[%90] : memref<512xi32, #tpu.memory_space<smem>>
      %92 = arith.index_cast %91 : i32 to index
      %c0_37 = arith.constant 0 : index
      %93 = vector.load %arg3[%92, %c0_37] : memref<1024x128xf32, #tpu.memory_space<vmem>>, vector<1x128xf32>
      %c1_i32_38 = arith.constant 1 : i32
      %94 = arith.addi %89, %c1_i32_38 : i32
      %95 = arith.index_cast %94 : i32 to index
      %96 = memref.load %arg2[%95] : memref<512xi32, #tpu.memory_space<smem>>
      %97 = arith.index_cast %96 : i32 to index
      %c0_39 = arith.constant 0 : index
      %98 = vector.load %arg3[%97, %c0_39] : memref<1024x128xf32, #tpu.memory_space<vmem>>, vector<1x128xf32>
      %99 = arith.addf %93, %98 : vector<1x128xf32>
      %c2_i32_40 = arith.constant 2 : i32
      %100 = arith.addi %89, %c2_i32_40 : i32
      %101 = arith.index_cast %100 : i32 to index
      %102 = memref.load %arg2[%101] : memref<512xi32, #tpu.memory_space<smem>>
      %103 = arith.index_cast %102 : i32 to index
      %c0_41 = arith.constant 0 : index
      %104 = vector.load %arg3[%103, %c0_41] : memref<1024x128xf32, #tpu.memory_space<vmem>>, vector<1x128xf32>
      %105 = arith.addf %99, %104 : vector<1x128xf32>
      %c3_i32_42 = arith.constant 3 : i32
      %106 = arith.addi %89, %c3_i32_42 : i32
      %107 = arith.index_cast %106 : i32 to index
      %108 = memref.load %arg2[%107] : memref<512xi32, #tpu.memory_space<smem>>
      %109 = arith.index_cast %108 : i32 to index
      %c0_43 = arith.constant 0 : index
      %110 = vector.load %arg3[%109, %c0_43] : memref<1024x128xf32, #tpu.memory_space<vmem>>, vector<1x128xf32>
      %111 = arith.addf %105, %110 : vector<1x128xf32>
      %c0_i32_44 = arith.constant 0 : i32
      %112 = arith.addi %11, %c0_i32_44 : i32
      %c4_i32_45 = arith.constant 4 : i32
      %113 = arith.addi %112, %c4_i32_45 : i32
      %c4_i32_46 = arith.constant 4 : i32
      %114 = arith.muli %113, %c4_i32_46 : i32
      %115 = arith.index_cast %114 : i32 to index
      %116 = memref.load %arg2[%115] : memref<512xi32, #tpu.memory_space<smem>>
      %117 = arith.index_cast %116 : i32 to index
      %c0_47 = arith.constant 0 : index
      %118 = vector.load %arg3[%117, %c0_47] : memref<1024x128xf32, #tpu.memory_space<vmem>>, vector<1x128xf32>
      %c1_i32_48 = arith.constant 1 : i32
      %119 = arith.addi %114, %c1_i32_48 : i32
      %120 = arith.index_cast %119 : i32 to index
      %121 = memref.load %arg2[%120] : memref<512xi32, #tpu.memory_space<smem>>
      %122 = arith.index_cast %121 : i32 to index
      %c0_49 = arith.constant 0 : index
      %123 = vector.load %arg3[%122, %c0_49] : memref<1024x128xf32, #tpu.memory_space<vmem>>, vector<1x128xf32>
      %124 = arith.addf %118, %123 : vector<1x128xf32>
      %c2_i32_50 = arith.constant 2 : i32
      %125 = arith.addi %114, %c2_i32_50 : i32
      %126 = arith.index_cast %125 : i32 to index
      %127 = memref.load %arg2[%126] : memref<512xi32, #tpu.memory_space<smem>>
      %128 = arith.index_cast %127 : i32 to index
      %c0_51 = arith.constant 0 : index
      %129 = vector.load %arg3[%128, %c0_51] : memref<1024x128xf32, #tpu.memory_space<vmem>>, vector<1x128xf32>
      %130 = arith.addf %124, %129 : vector<1x128xf32>
      %c3_i32_52 = arith.constant 3 : i32
      %131 = arith.addi %114, %c3_i32_52 : i32
      %132 = arith.index_cast %131 : i32 to index
      %133 = memref.load %arg2[%132] : memref<512xi32, #tpu.memory_space<smem>>
      %134 = arith.index_cast %133 : i32 to index
      %c0_53 = arith.constant 0 : index
      %135 = vector.load %arg3[%134, %c0_53] : memref<1024x128xf32, #tpu.memory_space<vmem>>, vector<1x128xf32>
      %136 = arith.addf %130, %135 : vector<1x128xf32>
      %c0_i32_54 = arith.constant 0 : i32
      %137 = arith.addi %11, %c0_i32_54 : i32
      %c5_i32 = arith.constant 5 : i32
      %138 = arith.addi %137, %c5_i32 : i32
      %c4_i32_55 = arith.constant 4 : i32
      %139 = arith.muli %138, %c4_i32_55 : i32
      %140 = arith.index_cast %139 : i32 to index
      %141 = memref.load %arg2[%140] : memref<512xi32, #tpu.memory_space<smem>>
      %142 = arith.index_cast %141 : i32 to index
      %c0_56 = arith.constant 0 : index
      %143 = vector.load %arg3[%142, %c0_56] : memref<1024x128xf32, #tpu.memory_space<vmem>>, vector<1x128xf32>
      %c1_i32_57 = arith.constant 1 : i32
      %144 = arith.addi %139, %c1_i32_57 : i32
      %145 = arith.index_cast %144 : i32 to index
      %146 = memref.load %arg2[%145] : memref<512xi32, #tpu.memory_space<smem>>
      %147 = arith.index_cast %146 : i32 to index
      %c0_58 = arith.constant 0 : index
      %148 = vector.load %arg3[%147, %c0_58] : memref<1024x128xf32, #tpu.memory_space<vmem>>, vector<1x128xf32>
      %149 = arith.addf %143, %148 : vector<1x128xf32>
      %c2_i32_59 = arith.constant 2 : i32
      %150 = arith.addi %139, %c2_i32_59 : i32
      %151 = arith.index_cast %150 : i32 to index
      %152 = memref.load %arg2[%151] : memref<512xi32, #tpu.memory_space<smem>>
      %153 = arith.index_cast %152 : i32 to index
      %c0_60 = arith.constant 0 : index
      %154 = vector.load %arg3[%153, %c0_60] : memref<1024x128xf32, #tpu.memory_space<vmem>>, vector<1x128xf32>
      %155 = arith.addf %149, %154 : vector<1x128xf32>
      %c3_i32_61 = arith.constant 3 : i32
      %156 = arith.addi %139, %c3_i32_61 : i32
      %157 = arith.index_cast %156 : i32 to index
      %158 = memref.load %arg2[%157] : memref<512xi32, #tpu.memory_space<smem>>
      %159 = arith.index_cast %158 : i32 to index
      %c0_62 = arith.constant 0 : index
      %160 = vector.load %arg3[%159, %c0_62] : memref<1024x128xf32, #tpu.memory_space<vmem>>, vector<1x128xf32>
      %161 = arith.addf %155, %160 : vector<1x128xf32>
      %c0_i32_63 = arith.constant 0 : i32
      %162 = arith.addi %11, %c0_i32_63 : i32
      %c6_i32 = arith.constant 6 : i32
      %163 = arith.addi %162, %c6_i32 : i32
      %c4_i32_64 = arith.constant 4 : i32
      %164 = arith.muli %163, %c4_i32_64 : i32
      %165 = arith.index_cast %164 : i32 to index
      %166 = memref.load %arg2[%165] : memref<512xi32, #tpu.memory_space<smem>>
      %167 = arith.index_cast %166 : i32 to index
      %c0_65 = arith.constant 0 : index
      %168 = vector.load %arg3[%167, %c0_65] : memref<1024x128xf32, #tpu.memory_space<vmem>>, vector<1x128xf32>
      %c1_i32_66 = arith.constant 1 : i32
      %169 = arith.addi %164, %c1_i32_66 : i32
      %170 = arith.index_cast %169 : i32 to index
      %171 = memref.load %arg2[%170] : memref<512xi32, #tpu.memory_space<smem>>
      %172 = arith.index_cast %171 : i32 to index
      %c0_67 = arith.constant 0 : index
      %173 = vector.load %arg3[%172, %c0_67] : memref<1024x128xf32, #tpu.memory_space<vmem>>, vector<1x128xf32>
      %174 = arith.addf %168, %173 : vector<1x128xf32>
      %c2_i32_68 = arith.constant 2 : i32
      %175 = arith.addi %164, %c2_i32_68 : i32
      %176 = arith.index_cast %175 : i32 to index
      %177 = memref.load %arg2[%176] : memref<512xi32, #tpu.memory_space<smem>>
      %178 = arith.index_cast %177 : i32 to index
      %c0_69 = arith.constant 0 : index
      %179 = vector.load %arg3[%178, %c0_69] : memref<1024x128xf32, #tpu.memory_space<vmem>>, vector<1x128xf32>
      %180 = arith.addf %174, %179 : vector<1x128xf32>
      %c3_i32_70 = arith.constant 3 : i32
      %181 = arith.addi %164, %c3_i32_70 : i32
      %182 = arith.index_cast %181 : i32 to index
      %183 = memref.load %arg2[%182] : memref<512xi32, #tpu.memory_space<smem>>
      %184 = arith.index_cast %183 : i32 to index
      %c0_71 = arith.constant 0 : index
      %185 = vector.load %arg3[%184, %c0_71] : memref<1024x128xf32, #tpu.memory_space<vmem>>, vector<1x128xf32>
      %186 = arith.addf %180, %185 : vector<1x128xf32>
      %c0_i32_72 = arith.constant 0 : i32
      %187 = arith.addi %11, %c0_i32_72 : i32
      %c7_i32 = arith.constant 7 : i32
      %188 = arith.addi %187, %c7_i32 : i32
      %c4_i32_73 = arith.constant 4 : i32
      %189 = arith.muli %188, %c4_i32_73 : i32
      %190 = arith.index_cast %189 : i32 to index
      %191 = memref.load %arg2[%190] : memref<512xi32, #tpu.memory_space<smem>>
      %192 = arith.index_cast %191 : i32 to index
      %c0_74 = arith.constant 0 : index
      %193 = vector.load %arg3[%192, %c0_74] : memref<1024x128xf32, #tpu.memory_space<vmem>>, vector<1x128xf32>
      %c1_i32_75 = arith.constant 1 : i32
      %194 = arith.addi %189, %c1_i32_75 : i32
      %195 = arith.index_cast %194 : i32 to index
      %196 = memref.load %arg2[%195] : memref<512xi32, #tpu.memory_space<smem>>
      %197 = arith.index_cast %196 : i32 to index
      %c0_76 = arith.constant 0 : index
      %198 = vector.load %arg3[%197, %c0_76] : memref<1024x128xf32, #tpu.memory_space<vmem>>, vector<1x128xf32>
      %199 = arith.addf %193, %198 : vector<1x128xf32>
      %c2_i32_77 = arith.constant 2 : i32
      %200 = arith.addi %189, %c2_i32_77 : i32
      %201 = arith.index_cast %200 : i32 to index
      %202 = memref.load %arg2[%201] : memref<512xi32, #tpu.memory_space<smem>>
      %203 = arith.index_cast %202 : i32 to index
      %c0_78 = arith.constant 0 : index
      %204 = vector.load %arg3[%203, %c0_78] : memref<1024x128xf32, #tpu.memory_space<vmem>>, vector<1x128xf32>
      %205 = arith.addf %199, %204 : vector<1x128xf32>
      %c3_i32_79 = arith.constant 3 : i32
      %206 = arith.addi %189, %c3_i32_79 : i32
      %207 = arith.index_cast %206 : i32 to index
      %208 = memref.load %arg2[%207] : memref<512xi32, #tpu.memory_space<smem>>
      %209 = arith.index_cast %208 : i32 to index
      %c0_80 = arith.constant 0 : index
      %210 = vector.load %arg3[%209, %c0_80] : memref<1024x128xf32, #tpu.memory_space<vmem>>, vector<1x128xf32>
      %211 = arith.addf %205, %210 : vector<1x128xf32>
      %212 = tpu.concatenate %36, %61, %86, %111, %136, %161, %186, %211 in 0 : vector<1x128xf32>, vector<1x128xf32>, vector<1x128xf32>, vector<1x128xf32>, vector<1x128xf32>, vector<1x128xf32>, vector<1x128xf32>, vector<1x128xf32> -> vector<8x128xf32>
      %cst_81 = arith.constant 2.500000e-01 : f32
      %213 = vector.broadcast %cst_81 : f32 to vector<8x128xf32>
      %214 = arith.mulf %212, %213 : vector<8x128xf32>
      %c0_82 = arith.constant 0 : index
      %c0_83 = arith.constant 0 : index
      %215 = vector.load %arg9[%c0_82, %c0_83] : memref<64x128xf32, #tpu.memory_space<vmem>>, vector<8x128xf32>
      tpu.vector_store %arg9[%c0_82, %c0_83], %214 {strides = array<i32>} : memref<64x128xf32, #tpu.memory_space<vmem>>, vector<8x128xf32>,
      %c8_i32 = arith.constant 8 : i32
      %216 = arith.addi %11, %c8_i32 : i32
      %c0_i32_84 = arith.constant 0 : i32
      %217 = arith.addi %216, %c0_i32_84 : i32
      %c4_i32_85 = arith.constant 4 : i32
      %218 = arith.muli %217, %c4_i32_85 : i32
      %219 = arith.index_cast %218 : i32 to index
      %220 = memref.load %arg2[%219] : memref<512xi32, #tpu.memory_space<smem>>
      %221 = arith.index_cast %220 : i32 to index
      %c0_86 = arith.constant 0 : index
      %222 = vector.load %arg3[%221, %c0_86] : memref<1024x128xf32, #tpu.memory_space<vmem>>, vector<1x128xf32>
      %c1_i32_87 = arith.constant 1 : i32
      %223 = arith.addi %218, %c1_i32_87 : i32
      %224 = arith.index_cast %223 : i32 to index
      %225 = memref.load %arg2[%224] : memref<512xi32, #tpu.memory_space<smem>>
      %226 = arith.index_cast %225 : i32 to index
      %c0_88 = arith.constant 0 : index
      %227 = vector.load %arg3[%226, %c0_88] : memref<1024x128xf32, #tpu.memory_space<vmem>>, vector<1x128xf32>
      %228 = arith.addf %222, %227 : vector<1x128xf32>
      %c2_i32_89 = arith.constant 2 : i32
      %229 = arith.addi %218, %c2_i32_89 : i32
      %230 = arith.index_cast %229 : i32 to index
      %231 = memref.load %arg2[%230] : memref<512xi32, #tpu.memory_space<smem>>
      %232 = arith.index_cast %231 : i32 to index
      %c0_90 = arith.constant 0 : index
      %233 = vector.load %arg3[%232, %c0_90] : memref<1024x128xf32, #tpu.memory_space<vmem>>, vector<1x128xf32>
      %234 = arith.addf %228, %233 : vector<1x128xf32>
      %c3_i32_91 = arith.constant 3 : i32
      %235 = arith.addi %218, %c3_i32_91 : i32
      %236 = arith.index_cast %235 : i32 to index
      %237 = memref.load %arg2[%236] : memref<512xi32, #tpu.memory_space<smem>>
      %238 = arith.index_cast %237 : i32 to index
      %c0_92 = arith.constant 0 : index
      %239 = vector.load %arg3[%238, %c0_92] : memref<1024x128xf32, #tpu.memory_space<vmem>>, vector<1x128xf32>
      %240 = arith.addf %234, %239 : vector<1x128xf32>
      %c8_i32_93 = arith.constant 8 : i32
      %241 = arith.addi %11, %c8_i32_93 : i32
      %c1_i32_94 = arith.constant 1 : i32
      %242 = arith.addi %241, %c1_i32_94 : i32
      %c4_i32_95 = arith.constant 4 : i32
      %243 = arith.muli %242, %c4_i32_95 : i32
      %244 = arith.index_cast %243 : i32 to index
      %245 = memref.load %arg2[%244] : memref<512xi32, #tpu.memory_space<smem>>
      %246 = arith.index_cast %245 : i32 to index
      %c0_96 = arith.constant 0 : index
      %247 = vector.load %arg3[%246, %c0_96] : memref<1024x128xf32, #tpu.memory_space<vmem>>, vector<1x128xf32>
      %c1_i32_97 = arith.constant 1 : i32
      %248 = arith.addi %243, %c1_i32_97 : i32
      %249 = arith.index_cast %248 : i32 to index
      %250 = memref.load %arg2[%249] : memref<512xi32, #tpu.memory_space<smem>>
      %251 = arith.index_cast %250 : i32 to index
      %c0_98 = arith.constant 0 : index
      %252 = vector.load %arg3[%251, %c0_98] : memref<1024x128xf32, #tpu.memory_space<vmem>>, vector<1x128xf32>
      %253 = arith.addf %247, %252 : vector<1x128xf32>
      %c2_i32_99 = arith.constant 2 : i32
      %254 = arith.addi %243, %c2_i32_99 : i32
      %255 = arith.index_cast %254 : i32 to index
      %256 = memref.load %arg2[%255] : memref<512xi32, #tpu.memory_space<smem>>
      %257 = arith.index_cast %256 : i32 to index
      %c0_100 = arith.constant 0 : index
      %258 = vector.load %arg3[%257, %c0_100] : memref<1024x128xf32, #tpu.memory_space<vmem>>, vector<1x128xf32>
      %259 = arith.addf %253, %258 : vector<1x128xf32>
      %c3_i32_101 = arith.constant 3 : i32
      %260 = arith.addi %243, %c3_i32_101 : i32
      %261 = arith.index_cast %260 : i32 to index
      %262 = memref.load %arg2[%261] : memref<512xi32, #tpu.memory_space<smem>>
      %263 = arith.index_cast %262 : i32 to index
      %c0_102 = arith.constant 0 : index
      %264 = vector.load %arg3[%263, %c0_102] : memref<1024x128xf32, #tpu.memory_space<vmem>>, vector<1x128xf32>
      %265 = arith.addf %259, %264 : vector<1x128xf32>
      %c8_i32_103 = arith.constant 8 : i32
      %266 = arith.addi %11, %c8_i32_103 : i32
      %c2_i32_104 = arith.constant 2 : i32
      %267 = arith.addi %266, %c2_i32_104 : i32
      %c4_i32_105 = arith.constant 4 : i32
      %268 = arith.muli %267, %c4_i32_105 : i32
      %269 = arith.index_cast %268 : i32 to index
      %270 = memref.load %arg2[%269] : memref<512xi32, #tpu.memory_space<smem>>
      %271 = arith.index_cast %270 : i32 to index
      %c0_106 = arith.constant 0 : index
      %272 = vector.load %arg3[%271, %c0_106] : memref<1024x128xf32, #tpu.memory_space<vmem>>, vector<1x128xf32>
      %c1_i32_107 = arith.constant 1 : i32
      %273 = arith.addi %268, %c1_i32_107 : i32
      %274 = arith.index_cast %273 : i32 to index
      %275 = memref.load %arg2[%274] : memref<512xi32, #tpu.memory_space<smem>>
      %276 = arith.index_cast %275 : i32 to index
      %c0_108 = arith.constant 0 : index
      %277 = vector.load %arg3[%276, %c0_108] : memref<1024x128xf32, #tpu.memory_space<vmem>>, vector<1x128xf32>
      %278 = arith.addf %272, %277 : vector<1x128xf32>
      %c2_i32_109 = arith.constant 2 : i32
      %279 = arith.addi %268, %c2_i32_109 : i32
      %280 = arith.index_cast %279 : i32 to index
      %281 = memref.load %arg2[%280] : memref<512xi32, #tpu.memory_space<smem>>
      %282 = arith.index_cast %281 : i32 to index
      %c0_110 = arith.constant 0 : index
      %283 = vector.load %arg3[%282, %c0_110] : memref<1024x128xf32, #tpu.memory_space<vmem>>, vector<1x128xf32>
      %284 = arith.addf %278, %283 : vector<1x128xf32>
      %c3_i32_111 = arith.constant 3 : i32
      %285 = arith.addi %268, %c3_i32_111 : i32
      %286 = arith.index_cast %285 : i32 to index
      %287 = memref.load %arg2[%286] : memref<512xi32, #tpu.memory_space<smem>>
      %288 = arith.index_cast %287 : i32 to index
      %c0_112 = arith.constant 0 : index
      %289 = vector.load %arg3[%288, %c0_112] : memref<1024x128xf32, #tpu.memory_space<vmem>>, vector<1x128xf32>
      %290 = arith.addf %284, %289 : vector<1x128xf32>
      %c8_i32_113 = arith.constant 8 : i32
      %291 = arith.addi %11, %c8_i32_113 : i32
      %c3_i32_114 = arith.constant 3 : i32
      %292 = arith.addi %291, %c3_i32_114 : i32
      %c4_i32_115 = arith.constant 4 : i32
      %293 = arith.muli %292, %c4_i32_115 : i32
      %294 = arith.index_cast %293 : i32 to index
      %295 = memref.load %arg2[%294] : memref<512xi32, #tpu.memory_space<smem>>
      %296 = arith.index_cast %295 : i32 to index
      %c0_116 = arith.constant 0 : index
      %297 = vector.load %arg3[%296, %c0_116] : memref<1024x128xf32, #tpu.memory_space<vmem>>, vector<1x128xf32>
      %c1_i32_117 = arith.constant 1 : i32
      %298 = arith.addi %293, %c1_i32_117 : i32
      %299 = arith.index_cast %298 : i32 to index
      %300 = memref.load %arg2[%299] : memref<512xi32, #tpu.memory_space<smem>>
      %301 = arith.index_cast %300 : i32 to index
      %c0_118 = arith.constant 0 : index
      %302 = vector.load %arg3[%301, %c0_118] : memref<1024x128xf32, #tpu.memory_space<vmem>>, vector<1x128xf32>
      %303 = arith.addf %297, %302 : vector<1x128xf32>
      %c2_i32_119 = arith.constant 2 : i32
      %304 = arith.addi %293, %c2_i32_119 : i32
      %305 = arith.index_cast %304 : i32 to index
      %306 = memref.load %arg2[%305] : memref<512xi32, #tpu.memory_space<smem>>
      %307 = arith.index_cast %306 : i32 to index
      %c0_120 = arith.constant 0 : index
      %308 = vector.load %arg3[%307, %c0_120] : memref<1024x128xf32, #tpu.memory_space<vmem>>, vector<1x128xf32>
      %309 = arith.addf %303, %308 : vector<1x128xf32>
      %c3_i32_121 = arith.constant 3 : i32
      %310 = arith.addi %293, %c3_i32_121 : i32
      %311 = arith.index_cast %310 : i32 to index
      %312 = memref.load %arg2[%311] : memref<512xi32, #tpu.memory_space<smem>>
      %313 = arith.index_cast %312 : i32 to index
      %c0_122 = arith.constant 0 : index
      %314 = vector.load %arg3[%313, %c0_122] : memref<1024x128xf32, #tpu.memory_space<vmem>>, vector<1x128xf32>
      %315 = arith.addf %309, %314 : vector<1x128xf32>
      %c8_i32_123 = arith.constant 8 : i32
      %316 = arith.addi %11, %c8_i32_123 : i32
      %c4_i32_124 = arith.constant 4 : i32
      %317 = arith.addi %316, %c4_i32_124 : i32
      %c4_i32_125 = arith.constant 4 : i32
      %318 = arith.muli %317, %c4_i32_125 : i32
      %319 = arith.index_cast %318 : i32 to index
      %320 = memref.load %arg2[%319] : memref<512xi32, #tpu.memory_space<smem>>
      %321 = arith.index_cast %320 : i32 to index
      %c0_126 = arith.constant 0 : index
      %322 = vector.load %arg3[%321, %c0_126] : memref<1024x128xf32, #tpu.memory_space<vmem>>, vector<1x128xf32>
      %c1_i32_127 = arith.constant 1 : i32
      %323 = arith.addi %318, %c1_i32_127 : i32
      %324 = arith.index_cast %323 : i32 to index
      %325 = memref.load %arg2[%324] : memref<512xi32, #tpu.memory_space<smem>>
      %326 = arith.index_cast %325 : i32 to index
      %c0_128 = arith.constant 0 : index
      %327 = vector.load %arg3[%326, %c0_128] : memref<1024x128xf32, #tpu.memory_space<vmem>>, vector<1x128xf32>
      %328 = arith.addf %322, %327 : vector<1x128xf32>
      %c2_i32_129 = arith.constant 2 : i32
      %329 = arith.addi %318, %c2_i32_129 : i32
      %330 = arith.index_cast %329 : i32 to index
      %331 = memref.load %arg2[%330] : memref<512xi32, #tpu.memory_space<smem>>
      %332 = arith.index_cast %331 : i32 to index
      %c0_130 = arith.constant 0 : index
      %333 = vector.load %arg3[%332, %c0_130] : memref<1024x128xf32, #tpu.memory_space<vmem>>, vector<1x128xf32>
      %334 = arith.addf %328, %333 : vector<1x128xf32>
      %c3_i32_131 = arith.constant 3 : i32
      %335 = arith.addi %318, %c3_i32_131 : i32
      %336 = arith.index_cast %335 : i32 to index
      %337 = memref.load %arg2[%336] : memref<512xi32, #tpu.memory_space<smem>>
      %338 = arith.index_cast %337 : i32 to index
      %c0_132 = arith.constant 0 : index
      %339 = vector.load %arg3[%338, %c0_132] : memref<1024x128xf32, #tpu.memory_space<vmem>>, vector<1x128xf32>
      %340 = arith.addf %334, %339 : vector<1x128xf32>
      %c8_i32_133 = arith.constant 8 : i32
      %341 = arith.addi %11, %c8_i32_133 : i32
      %c5_i32_134 = arith.constant 5 : i32
      %342 = arith.addi %341, %c5_i32_134 : i32
      %c4_i32_135 = arith.constant 4 : i32
      %343 = arith.muli %342, %c4_i32_135 : i32
      %344 = arith.index_cast %343 : i32 to index
      %345 = memref.load %arg2[%344] : memref<512xi32, #tpu.memory_space<smem>>
      %346 = arith.index_cast %345 : i32 to index
      %c0_136 = arith.constant 0 : index
      %347 = vector.load %arg3[%346, %c0_136] : memref<1024x128xf32, #tpu.memory_space<vmem>>, vector<1x128xf32>
      %c1_i32_137 = arith.constant 1 : i32
      %348 = arith.addi %343, %c1_i32_137 : i32
      %349 = arith.index_cast %348 : i32 to index
      %350 = memref.load %arg2[%349] : memref<512xi32, #tpu.memory_space<smem>>
      %351 = arith.index_cast %350 : i32 to index
      %c0_138 = arith.constant 0 : index
      %352 = vector.load %arg3[%351, %c0_138] : memref<1024x128xf32, #tpu.memory_space<vmem>>, vector<1x128xf32>
      %353 = arith.addf %347, %352 : vector<1x128xf32>
      %c2_i32_139 = arith.constant 2 : i32
      %354 = arith.addi %343, %c2_i32_139 : i32
      %355 = arith.index_cast %354 : i32 to index
      %356 = memref.load %arg2[%355] : memref<512xi32, #tpu.memory_space<smem>>
      %357 = arith.index_cast %356 : i32 to index
      %c0_140 = arith.constant 0 : index
      %358 = vector.load %arg3[%357, %c0_140] : memref<1024x128xf32, #tpu.memory_space<vmem>>, vector<1x128xf32>
      %359 = arith.addf %353, %358 : vector<1x128xf32>
      %c3_i32_141 = arith.constant 3 : i32
      %360 = arith.addi %343, %c3_i32_141 : i32
      %361 = arith.index_cast %360 : i32 to index
      %362 = memref.load %arg2[%361] : memref<512xi32, #tpu.memory_space<smem>>
      %363 = arith.index_cast %362 : i32 to index
      %c0_142 = arith.constant 0 : index
      %364 = vector.load %arg3[%363, %c0_142] : memref<1024x128xf32, #tpu.memory_space<vmem>>, vector<1x128xf32>
      %365 = arith.addf %359, %364 : vector<1x128xf32>
      %c8_i32_143 = arith.constant 8 : i32
      %366 = arith.addi %11, %c8_i32_143 : i32
      %c6_i32_144 = arith.constant 6 : i32
      %367 = arith.addi %366, %c6_i32_144 : i32
      %c4_i32_145 = arith.constant 4 : i32
      %368 = arith.muli %367, %c4_i32_145 : i32
      %369 = arith.index_cast %368 : i32 to index
      %370 = memref.load %arg2[%369] : memref<512xi32, #tpu.memory_space<smem>>
      %371 = arith.index_cast %370 : i32 to index
      %c0_146 = arith.constant 0 : index
      %372 = vector.load %arg3[%371, %c0_146] : memref<1024x128xf32, #tpu.memory_space<vmem>>, vector<1x128xf32>
      %c1_i32_147 = arith.constant 1 : i32
      %373 = arith.addi %368, %c1_i32_147 : i32
      %374 = arith.index_cast %373 : i32 to index
      %375 = memref.load %arg2[%374] : memref<512xi32, #tpu.memory_space<smem>>
      %376 = arith.index_cast %375 : i32 to index
      %c0_148 = arith.constant 0 : index
      %377 = vector.load %arg3[%376, %c0_148] : memref<1024x128xf32, #tpu.memory_space<vmem>>, vector<1x128xf32>
      %378 = arith.addf %372, %377 : vector<1x128xf32>
      %c2_i32_149 = arith.constant 2 : i32
      %379 = arith.addi %368, %c2_i32_149 : i32
      %380 = arith.index_cast %379 : i32 to index
      %381 = memref.load %arg2[%380] : memref<512xi32, #tpu.memory_space<smem>>
      %382 = arith.index_cast %381 : i32 to index
      %c0_150 = arith.constant 0 : index
      %383 = vector.load %arg3[%382, %c0_150] : memref<1024x128xf32, #tpu.memory_space<vmem>>, vector<1x128xf32>
      %384 = arith.addf %378, %383 : vector<1x128xf32>
      %c3_i32_151 = arith.constant 3 : i32
      %385 = arith.addi %368, %c3_i32_151 : i32
      %386 = arith.index_cast %385 : i32 to index
      %387 = memref.load %arg2[%386] : memref<512xi32, #tpu.memory_space<smem>>
      %388 = arith.index_cast %387 : i32 to index
      %c0_152 = arith.constant 0 : index
      %389 = vector.load %arg3[%388, %c0_152] : memref<1024x128xf32, #tpu.memory_space<vmem>>, vector<1x128xf32>
      %390 = arith.addf %384, %389 : vector<1x128xf32>
      %c8_i32_153 = arith.constant 8 : i32
      %391 = arith.addi %11, %c8_i32_153 : i32
      %c7_i32_154 = arith.constant 7 : i32
      %392 = arith.addi %391, %c7_i32_154 : i32
      %c4_i32_155 = arith.constant 4 : i32
      %393 = arith.muli %392, %c4_i32_155 : i32
      %394 = arith.index_cast %393 : i32 to index
      %395 = memref.load %arg2[%394] : memref<512xi32, #tpu.memory_space<smem>>
      %396 = arith.index_cast %395 : i32 to index
      %c0_156 = arith.constant 0 : index
      %397 = vector.load %arg3[%396, %c0_156] : memref<1024x128xf32, #tpu.memory_space<vmem>>, vector<1x128xf32>
      %c1_i32_157 = arith.constant 1 : i32
      %398 = arith.addi %393, %c1_i32_157 : i32
      %399 = arith.index_cast %398 : i32 to index
      %400 = memref.load %arg2[%399] : memref<512xi32, #tpu.memory_space<smem>>
      %401 = arith.index_cast %400 : i32 to index
      %c0_158 = arith.constant 0 : index
      %402 = vector.load %arg3[%401, %c0_158] : memref<1024x128xf32, #tpu.memory_space<vmem>>, vector<1x128xf32>
      %403 = arith.addf %397, %402 : vector<1x128xf32>
      %c2_i32_159 = arith.constant 2 : i32
      %404 = arith.addi %393, %c2_i32_159 : i32
      %405 = arith.index_cast %404 : i32 to index
      %406 = memref.load %arg2[%405] : memref<512xi32, #tpu.memory_space<smem>>
      %407 = arith.index_cast %406 : i32 to index
      %c0_160 = arith.constant 0 : index
      %408 = vector.load %arg3[%407, %c0_160] : memref<1024x128xf32, #tpu.memory_space<vmem>>, vector<1x128xf32>
      %409 = arith.addf %403, %408 : vector<1x128xf32>
      %c3_i32_161 = arith.constant 3 : i32
      %410 = arith.addi %393, %c3_i32_161 : i32
      %411 = arith.index_cast %410 : i32 to index
      %412 = memref.load %arg2[%411] : memref<512xi32, #tpu.memory_space<smem>>
      %413 = arith.index_cast %412 : i32 to index
      %c0_162 = arith.constant 0 : index
      %414 = vector.load %arg3[%413, %c0_162] : memref<1024x128xf32, #tpu.memory_space<vmem>>, vector<1x128xf32>
      %415 = arith.addf %409, %414 : vector<1x128xf32>
      %416 = tpu.concatenate %240, %265, %290, %315, %340, %365, %390, %415 in 0 : vector<1x128xf32>, vector<1x128xf32>, vector<1x128xf32>, vector<1x128xf32>, vector<1x128xf32>, vector<1x128xf32>, vector<1x128xf32>, vector<1x128xf32> -> vector<8x128xf32>
      %cst_163 = arith.constant 2.500000e-01 : f32
      %417 = vector.broadcast %cst_163 : f32 to vector<8x128xf32>
      %418 = arith.mulf %416, %417 : vector<8x128xf32>
      %c8 = arith.constant 8 : index
      %c0_164 = arith.constant 0 : index
      %419 = vector.load %arg9[%c8, %c0_164] : memref<64x128xf32, #tpu.memory_space<vmem>>, vector<8x128xf32>
      tpu.vector_store %arg9[%c8, %c0_164], %418 {strides = array<i32>} : memref<64x128xf32, #tpu.memory_space<vmem>>, vector<8x128xf32>,
      %c16_i32 = arith.constant 16 : i32
      %420 = arith.addi %11, %c16_i32 : i32
      %c0_i32_165 = arith.constant 0 : i32
      %421 = arith.addi %420, %c0_i32_165 : i32
      %c4_i32_166 = arith.constant 4 : i32
      %422 = arith.muli %421, %c4_i32_166 : i32
      %423 = arith.index_cast %422 : i32 to index
      %424 = memref.load %arg2[%423] : memref<512xi32, #tpu.memory_space<smem>>
      %425 = arith.index_cast %424 : i32 to index
      %c0_167 = arith.constant 0 : index
      %426 = vector.load %arg3[%425, %c0_167] : memref<1024x128xf32, #tpu.memory_space<vmem>>, vector<1x128xf32>
      %c1_i32_168 = arith.constant 1 : i32
      %427 = arith.addi %422, %c1_i32_168 : i32
      %428 = arith.index_cast %427 : i32 to index
      %429 = memref.load %arg2[%428] : memref<512xi32, #tpu.memory_space<smem>>
      %430 = arith.index_cast %429 : i32 to index
      %c0_169 = arith.constant 0 : index
      %431 = vector.load %arg3[%430, %c0_169] : memref<1024x128xf32, #tpu.memory_space<vmem>>, vector<1x128xf32>
      %432 = arith.addf %426, %431 : vector<1x128xf32>
      %c2_i32_170 = arith.constant 2 : i32
      %433 = arith.addi %422, %c2_i32_170 : i32
      %434 = arith.index_cast %433 : i32 to index
      %435 = memref.load %arg2[%434] : memref<512xi32, #tpu.memory_space<smem>>
      %436 = arith.index_cast %435 : i32 to index
      %c0_171 = arith.constant 0 : index
      %437 = vector.load %arg3[%436, %c0_171] : memref<1024x128xf32, #tpu.memory_space<vmem>>, vector<1x128xf32>
      %438 = arith.addf %432, %437 : vector<1x128xf32>
      %c3_i32_172 = arith.constant 3 : i32
      %439 = arith.addi %422, %c3_i32_172 : i32
      %440 = arith.index_cast %439 : i32 to index
      %441 = memref.load %arg2[%440] : memref<512xi32, #tpu.memory_space<smem>>
      %442 = arith.index_cast %441 : i32 to index
      %c0_173 = arith.constant 0 : index
      %443 = vector.load %arg3[%442, %c0_173] : memref<1024x128xf32, #tpu.memory_space<vmem>>, vector<1x128xf32>
      %444 = arith.addf %438, %443 : vector<1x128xf32>
      %c16_i32_174 = arith.constant 16 : i32
      %445 = arith.addi %11, %c16_i32_174 : i32
      %c1_i32_175 = arith.constant 1 : i32
      %446 = arith.addi %445, %c1_i32_175 : i32
      %c4_i32_176 = arith.constant 4 : i32
      %447 = arith.muli %446, %c4_i32_176 : i32
      %448 = arith.index_cast %447 : i32 to index
      %449 = memref.load %arg2[%448] : memref<512xi32, #tpu.memory_space<smem>>
      %450 = arith.index_cast %449 : i32 to index
      %c0_177 = arith.constant 0 : index
      %451 = vector.load %arg3[%450, %c0_177] : memref<1024x128xf32, #tpu.memory_space<vmem>>, vector<1x128xf32>
      %c1_i32_178 = arith.constant 1 : i32
      %452 = arith.addi %447, %c1_i32_178 : i32
      %453 = arith.index_cast %452 : i32 to index
      %454 = memref.load %arg2[%453] : memref<512xi32, #tpu.memory_space<smem>>
      %455 = arith.index_cast %454 : i32 to index
      %c0_179 = arith.constant 0 : index
      %456 = vector.load %arg3[%455, %c0_179] : memref<1024x128xf32, #tpu.memory_space<vmem>>, vector<1x128xf32>
      %457 = arith.addf %451, %456 : vector<1x128xf32>
      %c2_i32_180 = arith.constant 2 : i32
      %458 = arith.addi %447, %c2_i32_180 : i32
      %459 = arith.index_cast %458 : i32 to index
      %460 = memref.load %arg2[%459] : memref<512xi32, #tpu.memory_space<smem>>
      %461 = arith.index_cast %460 : i32 to index
      %c0_181 = arith.constant 0 : index
      %462 = vector.load %arg3[%461, %c0_181] : memref<1024x128xf32, #tpu.memory_space<vmem>>, vector<1x128xf32>
      %463 = arith.addf %457, %462 : vector<1x128xf32>
      %c3_i32_182 = arith.constant 3 : i32
      %464 = arith.addi %447, %c3_i32_182 : i32
      %465 = arith.index_cast %464 : i32 to index
      %466 = memref.load %arg2[%465] : memref<512xi32, #tpu.memory_space<smem>>
      %467 = arith.index_cast %466 : i32 to index
      %c0_183 = arith.constant 0 : index
      %468 = vector.load %arg3[%467, %c0_183] : memref<1024x128xf32, #tpu.memory_space<vmem>>, vector<1x128xf32>
      %469 = arith.addf %463, %468 : vector<1x128xf32>
      %c16_i32_184 = arith.constant 16 : i32
      %470 = arith.addi %11, %c16_i32_184 : i32
      %c2_i32_185 = arith.constant 2 : i32
      %471 = arith.addi %470, %c2_i32_185 : i32
      %c4_i32_186 = arith.constant 4 : i32
      %472 = arith.muli %471, %c4_i32_186 : i32
      %473 = arith.index_cast %472 : i32 to index
      %474 = memref.load %arg2[%473] : memref<512xi32, #tpu.memory_space<smem>>
      %475 = arith.index_cast %474 : i32 to index
      %c0_187 = arith.constant 0 : index
      %476 = vector.load %arg3[%475, %c0_187] : memref<1024x128xf32, #tpu.memory_space<vmem>>, vector<1x128xf32>
      %c1_i32_188 = arith.constant 1 : i32
      %477 = arith.addi %472, %c1_i32_188 : i32
      %478 = arith.index_cast %477 : i32 to index
      %479 = memref.load %arg2[%478] : memref<512xi32, #tpu.memory_space<smem>>
      %480 = arith.index_cast %479 : i32 to index
      %c0_189 = arith.constant 0 : index
      %481 = vector.load %arg3[%480, %c0_189] : memref<1024x128xf32, #tpu.memory_space<vmem>>, vector<1x128xf32>
      %482 = arith.addf %476, %481 : vector<1x128xf32>
      %c2_i32_190 = arith.constant 2 : i32
      %483 = arith.addi %472, %c2_i32_190 : i32
      %484 = arith.index_cast %483 : i32 to index
      %485 = memref.load %arg2[%484] : memref<512xi32, #tpu.memory_space<smem>>
      %486 = arith.index_cast %485 : i32 to index
      %c0_191 = arith.constant 0 : index
      %487 = vector.load %arg3[%486, %c0_191] : memref<1024x128xf32, #tpu.memory_space<vmem>>, vector<1x128xf32>
      %488 = arith.addf %482, %487 : vector<1x128xf32>
      %c3_i32_192 = arith.constant 3 : i32
      %489 = arith.addi %472, %c3_i32_192 : i32
      %490 = arith.index_cast %489 : i32 to index
      %491 = memref.load %arg2[%490] : memref<512xi32, #tpu.memory_space<smem>>
      %492 = arith.index_cast %491 : i32 to index
      %c0_193 = arith.constant 0 : index
      %493 = vector.load %arg3[%492, %c0_193] : memref<1024x128xf32, #tpu.memory_space<vmem>>, vector<1x128xf32>
      %494 = arith.addf %488, %493 : vector<1x128xf32>
      %c16_i32_194 = arith.constant 16 : i32
      %495 = arith.addi %11, %c16_i32_194 : i32
      %c3_i32_195 = arith.constant 3 : i32
      %496 = arith.addi %495, %c3_i32_195 : i32
      %c4_i32_196 = arith.constant 4 : i32
      %497 = arith.muli %496, %c4_i32_196 : i32
      %498 = arith.index_cast %497 : i32 to index
      %499 = memref.load %arg2[%498] : memref<512xi32, #tpu.memory_space<smem>>
      %500 = arith.index_cast %499 : i32 to index
      %c0_197 = arith.constant 0 : index
      %501 = vector.load %arg3[%500, %c0_197] : memref<1024x128xf32, #tpu.memory_space<vmem>>, vector<1x128xf32>
      %c1_i32_198 = arith.constant 1 : i32
      %502 = arith.addi %497, %c1_i32_198 : i32
      %503 = arith.index_cast %502 : i32 to index
      %504 = memref.load %arg2[%503] : memref<512xi32, #tpu.memory_space<smem>>
      %505 = arith.index_cast %504 : i32 to index
      %c0_199 = arith.constant 0 : index
      %506 = vector.load %arg3[%505, %c0_199] : memref<1024x128xf32, #tpu.memory_space<vmem>>, vector<1x128xf32>
      %507 = arith.addf %501, %506 : vector<1x128xf32>
      %c2_i32_200 = arith.constant 2 : i32
      %508 = arith.addi %497, %c2_i32_200 : i32
      %509 = arith.index_cast %508 : i32 to index
      %510 = memref.load %arg2[%509] : memref<512xi32, #tpu.memory_space<smem>>
      %511 = arith.index_cast %510 : i32 to index
      %c0_201 = arith.constant 0 : index
      %512 = vector.load %arg3[%511, %c0_201] : memref<1024x128xf32, #tpu.memory_space<vmem>>, vector<1x128xf32>
      %513 = arith.addf %507, %512 : vector<1x128xf32>
      %c3_i32_202 = arith.constant 3 : i32
      %514 = arith.addi %497, %c3_i32_202 : i32
      %515 = arith.index_cast %514 : i32 to index
      %516 = memref.load %arg2[%515] : memref<512xi32, #tpu.memory_space<smem>>
      %517 = arith.index_cast %516 : i32 to index
      %c0_203 = arith.constant 0 : index
      %518 = vector.load %arg3[%517, %c0_203] : memref<1024x128xf32, #tpu.memory_space<vmem>>, vector<1x128xf32>
      %519 = arith.addf %513, %518 : vector<1x128xf32>
      %c16_i32_204 = arith.constant 16 : i32
      %520 = arith.addi %11, %c16_i32_204 : i32
      %c4_i32_205 = arith.constant 4 : i32
      %521 = arith.addi %520, %c4_i32_205 : i32
      %c4_i32_206 = arith.constant 4 : i32
      %522 = arith.muli %521, %c4_i32_206 : i32
      %523 = arith.index_cast %522 : i32 to index
      %524 = memref.load %arg2[%523] : memref<512xi32, #tpu.memory_space<smem>>
      %525 = arith.index_cast %524 : i32 to index
      %c0_207 = arith.constant 0 : index
      %526 = vector.load %arg3[%525, %c0_207] : memref<1024x128xf32, #tpu.memory_space<vmem>>, vector<1x128xf32>
      %c1_i32_208 = arith.constant 1 : i32
      %527 = arith.addi %522, %c1_i32_208 : i32
      %528 = arith.index_cast %527 : i32 to index
      %529 = memref.load %arg2[%528] : memref<512xi32, #tpu.memory_space<smem>>
      %530 = arith.index_cast %529 : i32 to index
      %c0_209 = arith.constant 0 : index
      %531 = vector.load %arg3[%530, %c0_209] : memref<1024x128xf32, #tpu.memory_space<vmem>>, vector<1x128xf32>
      %532 = arith.addf %526, %531 : vector<1x128xf32>
      %c2_i32_210 = arith.constant 2 : i32
      %533 = arith.addi %522, %c2_i32_210 : i32
      %534 = arith.index_cast %533 : i32 to index
      %535 = memref.load %arg2[%534] : memref<512xi32, #tpu.memory_space<smem>>
      %536 = arith.index_cast %535 : i32 to index
      %c0_211 = arith.constant 0 : index
      %537 = vector.load %arg3[%536, %c0_211] : memref<1024x128xf32, #tpu.memory_space<vmem>>, vector<1x128xf32>
      %538 = arith.addf %532, %537 : vector<1x128xf32>
      %c3_i32_212 = arith.constant 3 : i32
      %539 = arith.addi %522, %c3_i32_212 : i32
      %540 = arith.index_cast %539 : i32 to index
      %541 = memref.load %arg2[%540] : memref<512xi32, #tpu.memory_space<smem>>
      %542 = arith.index_cast %541 : i32 to index
      %c0_213 = arith.constant 0 : index
      %543 = vector.load %arg3[%542, %c0_213] : memref<1024x128xf32, #tpu.memory_space<vmem>>, vector<1x128xf32>
      %544 = arith.addf %538, %543 : vector<1x128xf32>
      %c16_i32_214 = arith.constant 16 : i32
      %545 = arith.addi %11, %c16_i32_214 : i32
      %c5_i32_215 = arith.constant 5 : i32
      %546 = arith.addi %545, %c5_i32_215 : i32
      %c4_i32_216 = arith.constant 4 : i32
      %547 = arith.muli %546, %c4_i32_216 : i32
      %548 = arith.index_cast %547 : i32 to index
      %549 = memref.load %arg2[%548] : memref<512xi32, #tpu.memory_space<smem>>
      %550 = arith.index_cast %549 : i32 to index
      %c0_217 = arith.constant 0 : index
      %551 = vector.load %arg3[%550, %c0_217] : memref<1024x128xf32, #tpu.memory_space<vmem>>, vector<1x128xf32>
      %c1_i32_218 = arith.constant 1 : i32
      %552 = arith.addi %547, %c1_i32_218 : i32
      %553 = arith.index_cast %552 : i32 to index
      %554 = memref.load %arg2[%553] : memref<512xi32, #tpu.memory_space<smem>>
      %555 = arith.index_cast %554 : i32 to index
      %c0_219 = arith.constant 0 : index
      %556 = vector.load %arg3[%555, %c0_219] : memref<1024x128xf32, #tpu.memory_space<vmem>>, vector<1x128xf32>
      %557 = arith.addf %551, %556 : vector<1x128xf32>
      %c2_i32_220 = arith.constant 2 : i32
      %558 = arith.addi %547, %c2_i32_220 : i32
      %559 = arith.index_cast %558 : i32 to index
      %560 = memref.load %arg2[%559] : memref<512xi32, #tpu.memory_space<smem>>
      %561 = arith.index_cast %560 : i32 to index
      %c0_221 = arith.constant 0 : index
      %562 = vector.load %arg3[%561, %c0_221] : memref<1024x128xf32, #tpu.memory_space<vmem>>, vector<1x128xf32>
      %563 = arith.addf %557, %562 : vector<1x128xf32>
      %c3_i32_222 = arith.constant 3 : i32
      %564 = arith.addi %547, %c3_i32_222 : i32
      %565 = arith.index_cast %564 : i32 to index
      %566 = memref.load %arg2[%565] : memref<512xi32, #tpu.memory_space<smem>>
      %567 = arith.index_cast %566 : i32 to index
      %c0_223 = arith.constant 0 : index
      %568 = vector.load %arg3[%567, %c0_223] : memref<1024x128xf32, #tpu.memory_space<vmem>>, vector<1x128xf32>
      %569 = arith.addf %563, %568 : vector<1x128xf32>
      %c16_i32_224 = arith.constant 16 : i32
      %570 = arith.addi %11, %c16_i32_224 : i32
      %c6_i32_225 = arith.constant 6 : i32
      %571 = arith.addi %570, %c6_i32_225 : i32
      %c4_i32_226 = arith.constant 4 : i32
      %572 = arith.muli %571, %c4_i32_226 : i32
      %573 = arith.index_cast %572 : i32 to index
      %574 = memref.load %arg2[%573] : memref<512xi32, #tpu.memory_space<smem>>
      %575 = arith.index_cast %574 : i32 to index
      %c0_227 = arith.constant 0 : index
      %576 = vector.load %arg3[%575, %c0_227] : memref<1024x128xf32, #tpu.memory_space<vmem>>, vector<1x128xf32>
      %c1_i32_228 = arith.constant 1 : i32
      %577 = arith.addi %572, %c1_i32_228 : i32
      %578 = arith.index_cast %577 : i32 to index
      %579 = memref.load %arg2[%578] : memref<512xi32, #tpu.memory_space<smem>>
      %580 = arith.index_cast %579 : i32 to index
      %c0_229 = arith.constant 0 : index
      %581 = vector.load %arg3[%580, %c0_229] : memref<1024x128xf32, #tpu.memory_space<vmem>>, vector<1x128xf32>
      %582 = arith.addf %576, %581 : vector<1x128xf32>
      %c2_i32_230 = arith.constant 2 : i32
      %583 = arith.addi %572, %c2_i32_230 : i32
      %584 = arith.index_cast %583 : i32 to index
      %585 = memref.load %arg2[%584] : memref<512xi32, #tpu.memory_space<smem>>
      %586 = arith.index_cast %585 : i32 to index
      %c0_231 = arith.constant 0 : index
      %587 = vector.load %arg3[%586, %c0_231] : memref<1024x128xf32, #tpu.memory_space<vmem>>, vector<1x128xf32>
      %588 = arith.addf %582, %587 : vector<1x128xf32>
      %c3_i32_232 = arith.constant 3 : i32
      %589 = arith.addi %572, %c3_i32_232 : i32
      %590 = arith.index_cast %589 : i32 to index
      %591 = memref.load %arg2[%590] : memref<512xi32, #tpu.memory_space<smem>>
      %592 = arith.index_cast %591 : i32 to index
      %c0_233 = arith.constant 0 : index
      %593 = vector.load %arg3[%592, %c0_233] : memref<1024x128xf32, #tpu.memory_space<vmem>>, vector<1x128xf32>
      %594 = arith.addf %588, %593 : vector<1x128xf32>
      %c16_i32_234 = arith.constant 16 : i32
      %595 = arith.addi %11, %c16_i32_234 : i32
      %c7_i32_235 = arith.constant 7 : i32
      %596 = arith.addi %595, %c7_i32_235 : i32
      %c4_i32_236 = arith.constant 4 : i32
      %597 = arith.muli %596, %c4_i32_236 : i32
      %598 = arith.index_cast %597 : i32 to index
      %599 = memref.load %arg2[%598] : memref<512xi32, #tpu.memory_space<smem>>
      %600 = arith.index_cast %599 : i32 to index
      %c0_237 = arith.constant 0 : index
      %601 = vector.load %arg3[%600, %c0_237] : memref<1024x128xf32, #tpu.memory_space<vmem>>, vector<1x128xf32>
      %c1_i32_238 = arith.constant 1 : i32
      %602 = arith.addi %597, %c1_i32_238 : i32
      %603 = arith.index_cast %602 : i32 to index
      %604 = memref.load %arg2[%603] : memref<512xi32, #tpu.memory_space<smem>>
      %605 = arith.index_cast %604 : i32 to index
      %c0_239 = arith.constant 0 : index
      %606 = vector.load %arg3[%605, %c0_239] : memref<1024x128xf32, #tpu.memory_space<vmem>>, vector<1x128xf32>
      %607 = arith.addf %601, %606 : vector<1x128xf32>
      %c2_i32_240 = arith.constant 2 : i32
      %608 = arith.addi %597, %c2_i32_240 : i32
      %609 = arith.index_cast %608 : i32 to index
      %610 = memref.load %arg2[%609] : memref<512xi32, #tpu.memory_space<smem>>
      %611 = arith.index_cast %610 : i32 to index
      %c0_241 = arith.constant 0 : index
      %612 = vector.load %arg3[%611, %c0_241] : memref<1024x128xf32, #tpu.memory_space<vmem>>, vector<1x128xf32>
      %613 = arith.addf %607, %612 : vector<1x128xf32>
      %c3_i32_242 = arith.constant 3 : i32
      %614 = arith.addi %597, %c3_i32_242 : i32
      %615 = arith.index_cast %614 : i32 to index
      %616 = memref.load %arg2[%615] : memref<512xi32, #tpu.memory_space<smem>>
      %617 = arith.index_cast %616 : i32 to index
      %c0_243 = arith.constant 0 : index
      %618 = vector.load %arg3[%617, %c0_243] : memref<1024x128xf32, #tpu.memory_space<vmem>>, vector<1x128xf32>
      %619 = arith.addf %613, %618 : vector<1x128xf32>
      %620 = tpu.concatenate %444, %469, %494, %519, %544, %569, %594, %619 in 0 : vector<1x128xf32>, vector<1x128xf32>, vector<1x128xf32>, vector<1x128xf32>, vector<1x128xf32>, vector<1x128xf32>, vector<1x128xf32>, vector<1x128xf32> -> vector<8x128xf32>
      %cst_244 = arith.constant 2.500000e-01 : f32
      %621 = vector.broadcast %cst_244 : f32 to vector<8x128xf32>
      %622 = arith.mulf %620, %621 : vector<8x128xf32>
      %c16 = arith.constant 16 : index
      %c0_245 = arith.constant 0 : index
      %623 = vector.load %arg9[%c16, %c0_245] : memref<64x128xf32, #tpu.memory_space<vmem>>, vector<8x128xf32>
      tpu.vector_store %arg9[%c16, %c0_245], %622 {strides = array<i32>} : memref<64x128xf32, #tpu.memory_space<vmem>>, vector<8x128xf32>,
      %c24_i32 = arith.constant 24 : i32
      %624 = arith.addi %11, %c24_i32 : i32
      %c0_i32_246 = arith.constant 0 : i32
      %625 = arith.addi %624, %c0_i32_246 : i32
      %c4_i32_247 = arith.constant 4 : i32
      %626 = arith.muli %625, %c4_i32_247 : i32
      %627 = arith.index_cast %626 : i32 to index
      %628 = memref.load %arg2[%627] : memref<512xi32, #tpu.memory_space<smem>>
      %629 = arith.index_cast %628 : i32 to index
      %c0_248 = arith.constant 0 : index
      %630 = vector.load %arg3[%629, %c0_248] : memref<1024x128xf32, #tpu.memory_space<vmem>>, vector<1x128xf32>
      %c1_i32_249 = arith.constant 1 : i32
      %631 = arith.addi %626, %c1_i32_249 : i32
      %632 = arith.index_cast %631 : i32 to index
      %633 = memref.load %arg2[%632] : memref<512xi32, #tpu.memory_space<smem>>
      %634 = arith.index_cast %633 : i32 to index
      %c0_250 = arith.constant 0 : index
      %635 = vector.load %arg3[%634, %c0_250] : memref<1024x128xf32, #tpu.memory_space<vmem>>, vector<1x128xf32>
      %636 = arith.addf %630, %635 : vector<1x128xf32>
      %c2_i32_251 = arith.constant 2 : i32
      %637 = arith.addi %626, %c2_i32_251 : i32
      %638 = arith.index_cast %637 : i32 to index
      %639 = memref.load %arg2[%638] : memref<512xi32, #tpu.memory_space<smem>>
      %640 = arith.index_cast %639 : i32 to index
      %c0_252 = arith.constant 0 : index
      %641 = vector.load %arg3[%640, %c0_252] : memref<1024x128xf32, #tpu.memory_space<vmem>>, vector<1x128xf32>
      %642 = arith.addf %636, %641 : vector<1x128xf32>
      %c3_i32_253 = arith.constant 3 : i32
      %643 = arith.addi %626, %c3_i32_253 : i32
      %644 = arith.index_cast %643 : i32 to index
      %645 = memref.load %arg2[%644] : memref<512xi32, #tpu.memory_space<smem>>
      %646 = arith.index_cast %645 : i32 to index
      %c0_254 = arith.constant 0 : index
      %647 = vector.load %arg3[%646, %c0_254] : memref<1024x128xf32, #tpu.memory_space<vmem>>, vector<1x128xf32>
      %648 = arith.addf %642, %647 : vector<1x128xf32>
      %c24_i32_255 = arith.constant 24 : i32
      %649 = arith.addi %11, %c24_i32_255 : i32
      %c1_i32_256 = arith.constant 1 : i32
      %650 = arith.addi %649, %c1_i32_256 : i32
      %c4_i32_257 = arith.constant 4 : i32
      %651 = arith.muli %650, %c4_i32_257 : i32
      %652 = arith.index_cast %651 : i32 to index
      %653 = memref.load %arg2[%652] : memref<512xi32, #tpu.memory_space<smem>>
      %654 = arith.index_cast %653 : i32 to index
      %c0_258 = arith.constant 0 : index
      %655 = vector.load %arg3[%654, %c0_258] : memref<1024x128xf32, #tpu.memory_space<vmem>>, vector<1x128xf32>
      %c1_i32_259 = arith.constant 1 : i32
      %656 = arith.addi %651, %c1_i32_259 : i32
      %657 = arith.index_cast %656 : i32 to index
      %658 = memref.load %arg2[%657] : memref<512xi32, #tpu.memory_space<smem>>
      %659 = arith.index_cast %658 : i32 to index
      %c0_260 = arith.constant 0 : index
      %660 = vector.load %arg3[%659, %c0_260] : memref<1024x128xf32, #tpu.memory_space<vmem>>, vector<1x128xf32>
      %661 = arith.addf %655, %660 : vector<1x128xf32>
      %c2_i32_261 = arith.constant 2 : i32
      %662 = arith.addi %651, %c2_i32_261 : i32
      %663 = arith.index_cast %662 : i32 to index
      %664 = memref.load %arg2[%663] : memref<512xi32, #tpu.memory_space<smem>>
      %665 = arith.index_cast %664 : i32 to index
      %c0_262 = arith.constant 0 : index
      %666 = vector.load %arg3[%665, %c0_262] : memref<1024x128xf32, #tpu.memory_space<vmem>>, vector<1x128xf32>
      %667 = arith.addf %661, %666 : vector<1x128xf32>
      %c3_i32_263 = arith.constant 3 : i32
      %668 = arith.addi %651, %c3_i32_263 : i32
      %669 = arith.index_cast %668 : i32 to index
      %670 = memref.load %arg2[%669] : memref<512xi32, #tpu.memory_space<smem>>
      %671 = arith.index_cast %670 : i32 to index
      %c0_264 = arith.constant 0 : index
      %672 = vector.load %arg3[%671, %c0_264] : memref<1024x128xf32, #tpu.memory_space<vmem>>, vector<1x128xf32>
      %673 = arith.addf %667, %672 : vector<1x128xf32>
      %c24_i32_265 = arith.constant 24 : i32
      %674 = arith.addi %11, %c24_i32_265 : i32
      %c2_i32_266 = arith.constant 2 : i32
      %675 = arith.addi %674, %c2_i32_266 : i32
      %c4_i32_267 = arith.constant 4 : i32
      %676 = arith.muli %675, %c4_i32_267 : i32
      %677 = arith.index_cast %676 : i32 to index
      %678 = memref.load %arg2[%677] : memref<512xi32, #tpu.memory_space<smem>>
      %679 = arith.index_cast %678 : i32 to index
      %c0_268 = arith.constant 0 : index
      %680 = vector.load %arg3[%679, %c0_268] : memref<1024x128xf32, #tpu.memory_space<vmem>>, vector<1x128xf32>
      %c1_i32_269 = arith.constant 1 : i32
      %681 = arith.addi %676, %c1_i32_269 : i32
      %682 = arith.index_cast %681 : i32 to index
      %683 = memref.load %arg2[%682] : memref<512xi32, #tpu.memory_space<smem>>
      %684 = arith.index_cast %683 : i32 to index
      %c0_270 = arith.constant 0 : index
      %685 = vector.load %arg3[%684, %c0_270] : memref<1024x128xf32, #tpu.memory_space<vmem>>, vector<1x128xf32>
      %686 = arith.addf %680, %685 : vector<1x128xf32>
      %c2_i32_271 = arith.constant 2 : i32
      %687 = arith.addi %676, %c2_i32_271 : i32
      %688 = arith.index_cast %687 : i32 to index
      %689 = memref.load %arg2[%688] : memref<512xi32, #tpu.memory_space<smem>>
      %690 = arith.index_cast %689 : i32 to index
      %c0_272 = arith.constant 0 : index
      %691 = vector.load %arg3[%690, %c0_272] : memref<1024x128xf32, #tpu.memory_space<vmem>>, vector<1x128xf32>
      %692 = arith.addf %686, %691 : vector<1x128xf32>
      %c3_i32_273 = arith.constant 3 : i32
      %693 = arith.addi %676, %c3_i32_273 : i32
      %694 = arith.index_cast %693 : i32 to index
      %695 = memref.load %arg2[%694] : memref<512xi32, #tpu.memory_space<smem>>
      %696 = arith.index_cast %695 : i32 to index
      %c0_274 = arith.constant 0 : index
      %697 = vector.load %arg3[%696, %c0_274] : memref<1024x128xf32, #tpu.memory_space<vmem>>, vector<1x128xf32>
      %698 = arith.addf %692, %697 : vector<1x128xf32>
      %c24_i32_275 = arith.constant 24 : i32
      %699 = arith.addi %11, %c24_i32_275 : i32
      %c3_i32_276 = arith.constant 3 : i32
      %700 = arith.addi %699, %c3_i32_276 : i32
      %c4_i32_277 = arith.constant 4 : i32
      %701 = arith.muli %700, %c4_i32_277 : i32
      %702 = arith.index_cast %701 : i32 to index
      %703 = memref.load %arg2[%702] : memref<512xi32, #tpu.memory_space<smem>>
      %704 = arith.index_cast %703 : i32 to index
      %c0_278 = arith.constant 0 : index
      %705 = vector.load %arg3[%704, %c0_278] : memref<1024x128xf32, #tpu.memory_space<vmem>>, vector<1x128xf32>
      %c1_i32_279 = arith.constant 1 : i32
      %706 = arith.addi %701, %c1_i32_279 : i32
      %707 = arith.index_cast %706 : i32 to index
      %708 = memref.load %arg2[%707] : memref<512xi32, #tpu.memory_space<smem>>
      %709 = arith.index_cast %708 : i32 to index
      %c0_280 = arith.constant 0 : index
      %710 = vector.load %arg3[%709, %c0_280] : memref<1024x128xf32, #tpu.memory_space<vmem>>, vector<1x128xf32>
      %711 = arith.addf %705, %710 : vector<1x128xf32>
      %c2_i32_281 = arith.constant 2 : i32
      %712 = arith.addi %701, %c2_i32_281 : i32
      %713 = arith.index_cast %712 : i32 to index
      %714 = memref.load %arg2[%713] : memref<512xi32, #tpu.memory_space<smem>>
      %715 = arith.index_cast %714 : i32 to index
      %c0_282 = arith.constant 0 : index
      %716 = vector.load %arg3[%715, %c0_282] : memref<1024x128xf32, #tpu.memory_space<vmem>>, vector<1x128xf32>
      %717 = arith.addf %711, %716 : vector<1x128xf32>
      %c3_i32_283 = arith.constant 3 : i32
      %718 = arith.addi %701, %c3_i32_283 : i32
      %719 = arith.index_cast %718 : i32 to index
      %720 = memref.load %arg2[%719] : memref<512xi32, #tpu.memory_space<smem>>
      %721 = arith.index_cast %720 : i32 to index
      %c0_284 = arith.constant 0 : index
      %722 = vector.load %arg3[%721, %c0_284] : memref<1024x128xf32, #tpu.memory_space<vmem>>, vector<1x128xf32>
      %723 = arith.addf %717, %722 : vector<1x128xf32>
      %c24_i32_285 = arith.constant 24 : i32
      %724 = arith.addi %11, %c24_i32_285 : i32
      %c4_i32_286 = arith.constant 4 : i32
      %725 = arith.addi %724, %c4_i32_286 : i32
      %c4_i32_287 = arith.constant 4 : i32
      %726 = arith.muli %725, %c4_i32_287 : i32
      %727 = arith.index_cast %726 : i32 to index
      %728 = memref.load %arg2[%727] : memref<512xi32, #tpu.memory_space<smem>>
      %729 = arith.index_cast %728 : i32 to index
      %c0_288 = arith.constant 0 : index
      %730 = vector.load %arg3[%729, %c0_288] : memref<1024x128xf32, #tpu.memory_space<vmem>>, vector<1x128xf32>
      %c1_i32_289 = arith.constant 1 : i32
      %731 = arith.addi %726, %c1_i32_289 : i32
      %732 = arith.index_cast %731 : i32 to index
      %733 = memref.load %arg2[%732] : memref<512xi32, #tpu.memory_space<smem>>
      %734 = arith.index_cast %733 : i32 to index
      %c0_290 = arith.constant 0 : index
      %735 = vector.load %arg3[%734, %c0_290] : memref<1024x128xf32, #tpu.memory_space<vmem>>, vector<1x128xf32>
      %736 = arith.addf %730, %735 : vector<1x128xf32>
      %c2_i32_291 = arith.constant 2 : i32
      %737 = arith.addi %726, %c2_i32_291 : i32
      %738 = arith.index_cast %737 : i32 to index
      %739 = memref.load %arg2[%738] : memref<512xi32, #tpu.memory_space<smem>>
      %740 = arith.index_cast %739 : i32 to index
      %c0_292 = arith.constant 0 : index
      %741 = vector.load %arg3[%740, %c0_292] : memref<1024x128xf32, #tpu.memory_space<vmem>>, vector<1x128xf32>
      %742 = arith.addf %736, %741 : vector<1x128xf32>
      %c3_i32_293 = arith.constant 3 : i32
      %743 = arith.addi %726, %c3_i32_293 : i32
      %744 = arith.index_cast %743 : i32 to index
      %745 = memref.load %arg2[%744] : memref<512xi32, #tpu.memory_space<smem>>
      %746 = arith.index_cast %745 : i32 to index
      %c0_294 = arith.constant 0 : index
      %747 = vector.load %arg3[%746, %c0_294] : memref<1024x128xf32, #tpu.memory_space<vmem>>, vector<1x128xf32>
      %748 = arith.addf %742, %747 : vector<1x128xf32>
      %c24_i32_295 = arith.constant 24 : i32
      %749 = arith.addi %11, %c24_i32_295 : i32
      %c5_i32_296 = arith.constant 5 : i32
      %750 = arith.addi %749, %c5_i32_296 : i32
      %c4_i32_297 = arith.constant 4 : i32
      %751 = arith.muli %750, %c4_i32_297 : i32
      %752 = arith.index_cast %751 : i32 to index
      %753 = memref.load %arg2[%752] : memref<512xi32, #tpu.memory_space<smem>>
      %754 = arith.index_cast %753 : i32 to index
      %c0_298 = arith.constant 0 : index
      %755 = vector.load %arg3[%754, %c0_298] : memref<1024x128xf32, #tpu.memory_space<vmem>>, vector<1x128xf32>
      %c1_i32_299 = arith.constant 1 : i32
      %756 = arith.addi %751, %c1_i32_299 : i32
      %757 = arith.index_cast %756 : i32 to index
      %758 = memref.load %arg2[%757] : memref<512xi32, #tpu.memory_space<smem>>
      %759 = arith.index_cast %758 : i32 to index
      %c0_300 = arith.constant 0 : index
      %760 = vector.load %arg3[%759, %c0_300] : memref<1024x128xf32, #tpu.memory_space<vmem>>, vector<1x128xf32>
      %761 = arith.addf %755, %760 : vector<1x128xf32>
      %c2_i32_301 = arith.constant 2 : i32
      %762 = arith.addi %751, %c2_i32_301 : i32
      %763 = arith.index_cast %762 : i32 to index
      %764 = memref.load %arg2[%763] : memref<512xi32, #tpu.memory_space<smem>>
      %765 = arith.index_cast %764 : i32 to index
      %c0_302 = arith.constant 0 : index
      %766 = vector.load %arg3[%765, %c0_302] : memref<1024x128xf32, #tpu.memory_space<vmem>>, vector<1x128xf32>
      %767 = arith.addf %761, %766 : vector<1x128xf32>
      %c3_i32_303 = arith.constant 3 : i32
      %768 = arith.addi %751, %c3_i32_303 : i32
      %769 = arith.index_cast %768 : i32 to index
      %770 = memref.load %arg2[%769] : memref<512xi32, #tpu.memory_space<smem>>
      %771 = arith.index_cast %770 : i32 to index
      %c0_304 = arith.constant 0 : index
      %772 = vector.load %arg3[%771, %c0_304] : memref<1024x128xf32, #tpu.memory_space<vmem>>, vector<1x128xf32>
      %773 = arith.addf %767, %772 : vector<1x128xf32>
      %c24_i32_305 = arith.constant 24 : i32
      %774 = arith.addi %11, %c24_i32_305 : i32
      %c6_i32_306 = arith.constant 6 : i32
      %775 = arith.addi %774, %c6_i32_306 : i32
      %c4_i32_307 = arith.constant 4 : i32
      %776 = arith.muli %775, %c4_i32_307 : i32
      %777 = arith.index_cast %776 : i32 to index
      %778 = memref.load %arg2[%777] : memref<512xi32, #tpu.memory_space<smem>>
      %779 = arith.index_cast %778 : i32 to index
      %c0_308 = arith.constant 0 : index
      %780 = vector.load %arg3[%779, %c0_308] : memref<1024x128xf32, #tpu.memory_space<vmem>>, vector<1x128xf32>
      %c1_i32_309 = arith.constant 1 : i32
      %781 = arith.addi %776, %c1_i32_309 : i32
      %782 = arith.index_cast %781 : i32 to index
      %783 = memref.load %arg2[%782] : memref<512xi32, #tpu.memory_space<smem>>
      %784 = arith.index_cast %783 : i32 to index
      %c0_310 = arith.constant 0 : index
      %785 = vector.load %arg3[%784, %c0_310] : memref<1024x128xf32, #tpu.memory_space<vmem>>, vector<1x128xf32>
      %786 = arith.addf %780, %785 : vector<1x128xf32>
      %c2_i32_311 = arith.constant 2 : i32
      %787 = arith.addi %776, %c2_i32_311 : i32
      %788 = arith.index_cast %787 : i32 to index
      %789 = memref.load %arg2[%788] : memref<512xi32, #tpu.memory_space<smem>>
      %790 = arith.index_cast %789 : i32 to index
      %c0_312 = arith.constant 0 : index
      %791 = vector.load %arg3[%790, %c0_312] : memref<1024x128xf32, #tpu.memory_space<vmem>>, vector<1x128xf32>
      %792 = arith.addf %786, %791 : vector<1x128xf32>
      %c3_i32_313 = arith.constant 3 : i32
      %793 = arith.addi %776, %c3_i32_313 : i32
      %794 = arith.index_cast %793 : i32 to index
      %795 = memref.load %arg2[%794] : memref<512xi32, #tpu.memory_space<smem>>
      %796 = arith.index_cast %795 : i32 to index
      %c0_314 = arith.constant 0 : index
      %797 = vector.load %arg3[%796, %c0_314] : memref<1024x128xf32, #tpu.memory_space<vmem>>, vector<1x128xf32>
      %798 = arith.addf %792, %797 : vector<1x128xf32>
      %c24_i32_315 = arith.constant 24 : i32
      %799 = arith.addi %11, %c24_i32_315 : i32
      %c7_i32_316 = arith.constant 7 : i32
      %800 = arith.addi %799, %c7_i32_316 : i32
      %c4_i32_317 = arith.constant 4 : i32
      %801 = arith.muli %800, %c4_i32_317 : i32
      %802 = arith.index_cast %801 : i32 to index
      %803 = memref.load %arg2[%802] : memref<512xi32, #tpu.memory_space<smem>>
      %804 = arith.index_cast %803 : i32 to index
      %c0_318 = arith.constant 0 : index
      %805 = vector.load %arg3[%804, %c0_318] : memref<1024x128xf32, #tpu.memory_space<vmem>>, vector<1x128xf32>
      %c1_i32_319 = arith.constant 1 : i32
      %806 = arith.addi %801, %c1_i32_319 : i32
      %807 = arith.index_cast %806 : i32 to index
      %808 = memref.load %arg2[%807] : memref<512xi32, #tpu.memory_space<smem>>
      %809 = arith.index_cast %808 : i32 to index
      %c0_320 = arith.constant 0 : index
      %810 = vector.load %arg3[%809, %c0_320] : memref<1024x128xf32, #tpu.memory_space<vmem>>, vector<1x128xf32>
      %811 = arith.addf %805, %810 : vector<1x128xf32>
      %c2_i32_321 = arith.constant 2 : i32
      %812 = arith.addi %801, %c2_i32_321 : i32
      %813 = arith.index_cast %812 : i32 to index
      %814 = memref.load %arg2[%813] : memref<512xi32, #tpu.memory_space<smem>>
      %815 = arith.index_cast %814 : i32 to index
      %c0_322 = arith.constant 0 : index
      %816 = vector.load %arg3[%815, %c0_322] : memref<1024x128xf32, #tpu.memory_space<vmem>>, vector<1x128xf32>
      %817 = arith.addf %811, %816 : vector<1x128xf32>
      %c3_i32_323 = arith.constant 3 : i32
      %818 = arith.addi %801, %c3_i32_323 : i32
      %819 = arith.index_cast %818 : i32 to index
      %820 = memref.load %arg2[%819] : memref<512xi32, #tpu.memory_space<smem>>
      %821 = arith.index_cast %820 : i32 to index
      %c0_324 = arith.constant 0 : index
      %822 = vector.load %arg3[%821, %c0_324] : memref<1024x128xf32, #tpu.memory_space<vmem>>, vector<1x128xf32>
      %823 = arith.addf %817, %822 : vector<1x128xf32>
      %824 = tpu.concatenate %648, %673, %698, %723, %748, %773, %798, %823 in 0 : vector<1x128xf32>, vector<1x128xf32>, vector<1x128xf32>, vector<1x128xf32>, vector<1x128xf32>, vector<1x128xf32>, vector<1x128xf32>, vector<1x128xf32> -> vector<8x128xf32>
      %cst_325 = arith.constant 2.500000e-01 : f32
      %825 = vector.broadcast %cst_325 : f32 to vector<8x128xf32>
      %826 = arith.mulf %824, %825 : vector<8x128xf32>
      %c24 = arith.constant 24 : index
      %c0_326 = arith.constant 0 : index
      %827 = vector.load %arg9[%c24, %c0_326] : memref<64x128xf32, #tpu.memory_space<vmem>>, vector<8x128xf32>
      tpu.vector_store %arg9[%c24, %c0_326], %826 {strides = array<i32>} : memref<64x128xf32, #tpu.memory_space<vmem>>, vector<8x128xf32>,
      %c32_i32 = arith.constant 32 : i32
      %828 = arith.addi %11, %c32_i32 : i32
      %c0_i32_327 = arith.constant 0 : i32
      %829 = arith.addi %828, %c0_i32_327 : i32
      %c4_i32_328 = arith.constant 4 : i32
      %830 = arith.muli %829, %c4_i32_328 : i32
      %831 = arith.index_cast %830 : i32 to index
      %832 = memref.load %arg2[%831] : memref<512xi32, #tpu.memory_space<smem>>
      %833 = arith.index_cast %832 : i32 to index
      %c0_329 = arith.constant 0 : index
      %834 = vector.load %arg3[%833, %c0_329] : memref<1024x128xf32, #tpu.memory_space<vmem>>, vector<1x128xf32>
      %c1_i32_330 = arith.constant 1 : i32
      %835 = arith.addi %830, %c1_i32_330 : i32
      %836 = arith.index_cast %835 : i32 to index
      %837 = memref.load %arg2[%836] : memref<512xi32, #tpu.memory_space<smem>>
      %838 = arith.index_cast %837 : i32 to index
      %c0_331 = arith.constant 0 : index
      %839 = vector.load %arg3[%838, %c0_331] : memref<1024x128xf32, #tpu.memory_space<vmem>>, vector<1x128xf32>
      %840 = arith.addf %834, %839 : vector<1x128xf32>
      %c2_i32_332 = arith.constant 2 : i32
      %841 = arith.addi %830, %c2_i32_332 : i32
      %842 = arith.index_cast %841 : i32 to index
      %843 = memref.load %arg2[%842] : memref<512xi32, #tpu.memory_space<smem>>
      %844 = arith.index_cast %843 : i32 to index
      %c0_333 = arith.constant 0 : index
      %845 = vector.load %arg3[%844, %c0_333] : memref<1024x128xf32, #tpu.memory_space<vmem>>, vector<1x128xf32>
      %846 = arith.addf %840, %845 : vector<1x128xf32>
      %c3_i32_334 = arith.constant 3 : i32
      %847 = arith.addi %830, %c3_i32_334 : i32
      %848 = arith.index_cast %847 : i32 to index
      %849 = memref.load %arg2[%848] : memref<512xi32, #tpu.memory_space<smem>>
      %850 = arith.index_cast %849 : i32 to index
      %c0_335 = arith.constant 0 : index
      %851 = vector.load %arg3[%850, %c0_335] : memref<1024x128xf32, #tpu.memory_space<vmem>>, vector<1x128xf32>
      %852 = arith.addf %846, %851 : vector<1x128xf32>
      %c32_i32_336 = arith.constant 32 : i32
      %853 = arith.addi %11, %c32_i32_336 : i32
      %c1_i32_337 = arith.constant 1 : i32
      %854 = arith.addi %853, %c1_i32_337 : i32
      %c4_i32_338 = arith.constant 4 : i32
      %855 = arith.muli %854, %c4_i32_338 : i32
      %856 = arith.index_cast %855 : i32 to index
      %857 = memref.load %arg2[%856] : memref<512xi32, #tpu.memory_space<smem>>
      %858 = arith.index_cast %857 : i32 to index
      %c0_339 = arith.constant 0 : index
      %859 = vector.load %arg3[%858, %c0_339] : memref<1024x128xf32, #tpu.memory_space<vmem>>, vector<1x128xf32>
      %c1_i32_340 = arith.constant 1 : i32
      %860 = arith.addi %855, %c1_i32_340 : i32
      %861 = arith.index_cast %860 : i32 to index
      %862 = memref.load %arg2[%861] : memref<512xi32, #tpu.memory_space<smem>>
      %863 = arith.index_cast %862 : i32 to index
      %c0_341 = arith.constant 0 : index
      %864 = vector.load %arg3[%863, %c0_341] : memref<1024x128xf32, #tpu.memory_space<vmem>>, vector<1x128xf32>
      %865 = arith.addf %859, %864 : vector<1x128xf32>
      %c2_i32_342 = arith.constant 2 : i32
      %866 = arith.addi %855, %c2_i32_342 : i32
      %867 = arith.index_cast %866 : i32 to index
      %868 = memref.load %arg2[%867] : memref<512xi32, #tpu.memory_space<smem>>
      %869 = arith.index_cast %868 : i32 to index
      %c0_343 = arith.constant 0 : index
      %870 = vector.load %arg3[%869, %c0_343] : memref<1024x128xf32, #tpu.memory_space<vmem>>, vector<1x128xf32>
      %871 = arith.addf %865, %870 : vector<1x128xf32>
      %c3_i32_344 = arith.constant 3 : i32
      %872 = arith.addi %855, %c3_i32_344 : i32
      %873 = arith.index_cast %872 : i32 to index
      %874 = memref.load %arg2[%873] : memref<512xi32, #tpu.memory_space<smem>>
      %875 = arith.index_cast %874 : i32 to index
      %c0_345 = arith.constant 0 : index
      %876 = vector.load %arg3[%875, %c0_345] : memref<1024x128xf32, #tpu.memory_space<vmem>>, vector<1x128xf32>
      %877 = arith.addf %871, %876 : vector<1x128xf32>
      %c32_i32_346 = arith.constant 32 : i32
      %878 = arith.addi %11, %c32_i32_346 : i32
      %c2_i32_347 = arith.constant 2 : i32
      %879 = arith.addi %878, %c2_i32_347 : i32
      %c4_i32_348 = arith.constant 4 : i32
      %880 = arith.muli %879, %c4_i32_348 : i32
      %881 = arith.index_cast %880 : i32 to index
      %882 = memref.load %arg2[%881] : memref<512xi32, #tpu.memory_space<smem>>
      %883 = arith.index_cast %882 : i32 to index
      %c0_349 = arith.constant 0 : index
      %884 = vector.load %arg3[%883, %c0_349] : memref<1024x128xf32, #tpu.memory_space<vmem>>, vector<1x128xf32>
      %c1_i32_350 = arith.constant 1 : i32
      %885 = arith.addi %880, %c1_i32_350 : i32
      %886 = arith.index_cast %885 : i32 to index
      %887 = memref.load %arg2[%886] : memref<512xi32, #tpu.memory_space<smem>>
      %888 = arith.index_cast %887 : i32 to index
      %c0_351 = arith.constant 0 : index
      %889 = vector.load %arg3[%888, %c0_351] : memref<1024x128xf32, #tpu.memory_space<vmem>>, vector<1x128xf32>
      %890 = arith.addf %884, %889 : vector<1x128xf32>
      %c2_i32_352 = arith.constant 2 : i32
      %891 = arith.addi %880, %c2_i32_352 : i32
      %892 = arith.index_cast %891 : i32 to index
      %893 = memref.load %arg2[%892] : memref<512xi32, #tpu.memory_space<smem>>
      %894 = arith.index_cast %893 : i32 to index
      %c0_353 = arith.constant 0 : index
      %895 = vector.load %arg3[%894, %c0_353] : memref<1024x128xf32, #tpu.memory_space<vmem>>, vector<1x128xf32>
      %896 = arith.addf %890, %895 : vector<1x128xf32>
      %c3_i32_354 = arith.constant 3 : i32
      %897 = arith.addi %880, %c3_i32_354 : i32
      %898 = arith.index_cast %897 : i32 to index
      %899 = memref.load %arg2[%898] : memref<512xi32, #tpu.memory_space<smem>>
      %900 = arith.index_cast %899 : i32 to index
      %c0_355 = arith.constant 0 : index
      %901 = vector.load %arg3[%900, %c0_355] : memref<1024x128xf32, #tpu.memory_space<vmem>>, vector<1x128xf32>
      %902 = arith.addf %896, %901 : vector<1x128xf32>
      %c32_i32_356 = arith.constant 32 : i32
      %903 = arith.addi %11, %c32_i32_356 : i32
      %c3_i32_357 = arith.constant 3 : i32
      %904 = arith.addi %903, %c3_i32_357 : i32
      %c4_i32_358 = arith.constant 4 : i32
      %905 = arith.muli %904, %c4_i32_358 : i32
      %906 = arith.index_cast %905 : i32 to index
      %907 = memref.load %arg2[%906] : memref<512xi32, #tpu.memory_space<smem>>
      %908 = arith.index_cast %907 : i32 to index
      %c0_359 = arith.constant 0 : index
      %909 = vector.load %arg3[%908, %c0_359] : memref<1024x128xf32, #tpu.memory_space<vmem>>, vector<1x128xf32>
      %c1_i32_360 = arith.constant 1 : i32
      %910 = arith.addi %905, %c1_i32_360 : i32
      %911 = arith.index_cast %910 : i32 to index
      %912 = memref.load %arg2[%911] : memref<512xi32, #tpu.memory_space<smem>>
      %913 = arith.index_cast %912 : i32 to index
      %c0_361 = arith.constant 0 : index
      %914 = vector.load %arg3[%913, %c0_361] : memref<1024x128xf32, #tpu.memory_space<vmem>>, vector<1x128xf32>
      %915 = arith.addf %909, %914 : vector<1x128xf32>
      %c2_i32_362 = arith.constant 2 : i32
      %916 = arith.addi %905, %c2_i32_362 : i32
      %917 = arith.index_cast %916 : i32 to index
      %918 = memref.load %arg2[%917] : memref<512xi32, #tpu.memory_space<smem>>
      %919 = arith.index_cast %918 : i32 to index
      %c0_363 = arith.constant 0 : index
      %920 = vector.load %arg3[%919, %c0_363] : memref<1024x128xf32, #tpu.memory_space<vmem>>, vector<1x128xf32>
      %921 = arith.addf %915, %920 : vector<1x128xf32>
      %c3_i32_364 = arith.constant 3 : i32
      %922 = arith.addi %905, %c3_i32_364 : i32
      %923 = arith.index_cast %922 : i32 to index
      %924 = memref.load %arg2[%923] : memref<512xi32, #tpu.memory_space<smem>>
      %925 = arith.index_cast %924 : i32 to index
      %c0_365 = arith.constant 0 : index
      %926 = vector.load %arg3[%925, %c0_365] : memref<1024x128xf32, #tpu.memory_space<vmem>>, vector<1x128xf32>
      %927 = arith.addf %921, %926 : vector<1x128xf32>
      %c32_i32_366 = arith.constant 32 : i32
      %928 = arith.addi %11, %c32_i32_366 : i32
      %c4_i32_367 = arith.constant 4 : i32
      %929 = arith.addi %928, %c4_i32_367 : i32
      %c4_i32_368 = arith.constant 4 : i32
      %930 = arith.muli %929, %c4_i32_368 : i32
      %931 = arith.index_cast %930 : i32 to index
      %932 = memref.load %arg2[%931] : memref<512xi32, #tpu.memory_space<smem>>
      %933 = arith.index_cast %932 : i32 to index
      %c0_369 = arith.constant 0 : index
      %934 = vector.load %arg3[%933, %c0_369] : memref<1024x128xf32, #tpu.memory_space<vmem>>, vector<1x128xf32>
      %c1_i32_370 = arith.constant 1 : i32
      %935 = arith.addi %930, %c1_i32_370 : i32
      %936 = arith.index_cast %935 : i32 to index
      %937 = memref.load %arg2[%936] : memref<512xi32, #tpu.memory_space<smem>>
      %938 = arith.index_cast %937 : i32 to index
      %c0_371 = arith.constant 0 : index
      %939 = vector.load %arg3[%938, %c0_371] : memref<1024x128xf32, #tpu.memory_space<vmem>>, vector<1x128xf32>
      %940 = arith.addf %934, %939 : vector<1x128xf32>
      %c2_i32_372 = arith.constant 2 : i32
      %941 = arith.addi %930, %c2_i32_372 : i32
      %942 = arith.index_cast %941 : i32 to index
      %943 = memref.load %arg2[%942] : memref<512xi32, #tpu.memory_space<smem>>
      %944 = arith.index_cast %943 : i32 to index
      %c0_373 = arith.constant 0 : index
      %945 = vector.load %arg3[%944, %c0_373] : memref<1024x128xf32, #tpu.memory_space<vmem>>, vector<1x128xf32>
      %946 = arith.addf %940, %945 : vector<1x128xf32>
      %c3_i32_374 = arith.constant 3 : i32
      %947 = arith.addi %930, %c3_i32_374 : i32
      %948 = arith.index_cast %947 : i32 to index
      %949 = memref.load %arg2[%948] : memref<512xi32, #tpu.memory_space<smem>>
      %950 = arith.index_cast %949 : i32 to index
      %c0_375 = arith.constant 0 : index
      %951 = vector.load %arg3[%950, %c0_375] : memref<1024x128xf32, #tpu.memory_space<vmem>>, vector<1x128xf32>
      %952 = arith.addf %946, %951 : vector<1x128xf32>
      %c32_i32_376 = arith.constant 32 : i32
      %953 = arith.addi %11, %c32_i32_376 : i32
      %c5_i32_377 = arith.constant 5 : i32
      %954 = arith.addi %953, %c5_i32_377 : i32
      %c4_i32_378 = arith.constant 4 : i32
      %955 = arith.muli %954, %c4_i32_378 : i32
      %956 = arith.index_cast %955 : i32 to index
      %957 = memref.load %arg2[%956] : memref<512xi32, #tpu.memory_space<smem>>
      %958 = arith.index_cast %957 : i32 to index
      %c0_379 = arith.constant 0 : index
      %959 = vector.load %arg3[%958, %c0_379] : memref<1024x128xf32, #tpu.memory_space<vmem>>, vector<1x128xf32>
      %c1_i32_380 = arith.constant 1 : i32
      %960 = arith.addi %955, %c1_i32_380 : i32
      %961 = arith.index_cast %960 : i32 to index
      %962 = memref.load %arg2[%961] : memref<512xi32, #tpu.memory_space<smem>>
      %963 = arith.index_cast %962 : i32 to index
      %c0_381 = arith.constant 0 : index
      %964 = vector.load %arg3[%963, %c0_381] : memref<1024x128xf32, #tpu.memory_space<vmem>>, vector<1x128xf32>
      %965 = arith.addf %959, %964 : vector<1x128xf32>
      %c2_i32_382 = arith.constant 2 : i32
      %966 = arith.addi %955, %c2_i32_382 : i32
      %967 = arith.index_cast %966 : i32 to index
      %968 = memref.load %arg2[%967] : memref<512xi32, #tpu.memory_space<smem>>
      %969 = arith.index_cast %968 : i32 to index
      %c0_383 = arith.constant 0 : index
      %970 = vector.load %arg3[%969, %c0_383] : memref<1024x128xf32, #tpu.memory_space<vmem>>, vector<1x128xf32>
      %971 = arith.addf %965, %970 : vector<1x128xf32>
      %c3_i32_384 = arith.constant 3 : i32
      %972 = arith.addi %955, %c3_i32_384 : i32
      %973 = arith.index_cast %972 : i32 to index
      %974 = memref.load %arg2[%973] : memref<512xi32, #tpu.memory_space<smem>>
      %975 = arith.index_cast %974 : i32 to index
      %c0_385 = arith.constant 0 : index
      %976 = vector.load %arg3[%975, %c0_385] : memref<1024x128xf32, #tpu.memory_space<vmem>>, vector<1x128xf32>
      %977 = arith.addf %971, %976 : vector<1x128xf32>
      %c32_i32_386 = arith.constant 32 : i32
      %978 = arith.addi %11, %c32_i32_386 : i32
      %c6_i32_387 = arith.constant 6 : i32
      %979 = arith.addi %978, %c6_i32_387 : i32
      %c4_i32_388 = arith.constant 4 : i32
      %980 = arith.muli %979, %c4_i32_388 : i32
      %981 = arith.index_cast %980 : i32 to index
      %982 = memref.load %arg2[%981] : memref<512xi32, #tpu.memory_space<smem>>
      %983 = arith.index_cast %982 : i32 to index
      %c0_389 = arith.constant 0 : index
      %984 = vector.load %arg3[%983, %c0_389] : memref<1024x128xf32, #tpu.memory_space<vmem>>, vector<1x128xf32>
      %c1_i32_390 = arith.constant 1 : i32
      %985 = arith.addi %980, %c1_i32_390 : i32
      %986 = arith.index_cast %985 : i32 to index
      %987 = memref.load %arg2[%986] : memref<512xi32, #tpu.memory_space<smem>>
      %988 = arith.index_cast %987 : i32 to index
      %c0_391 = arith.constant 0 : index
      %989 = vector.load %arg3[%988, %c0_391] : memref<1024x128xf32, #tpu.memory_space<vmem>>, vector<1x128xf32>
      %990 = arith.addf %984, %989 : vector<1x128xf32>
      %c2_i32_392 = arith.constant 2 : i32
      %991 = arith.addi %980, %c2_i32_392 : i32
      %992 = arith.index_cast %991 : i32 to index
      %993 = memref.load %arg2[%992] : memref<512xi32, #tpu.memory_space<smem>>
      %994 = arith.index_cast %993 : i32 to index
      %c0_393 = arith.constant 0 : index
      %995 = vector.load %arg3[%994, %c0_393] : memref<1024x128xf32, #tpu.memory_space<vmem>>, vector<1x128xf32>
      %996 = arith.addf %990, %995 : vector<1x128xf32>
      %c3_i32_394 = arith.constant 3 : i32
      %997 = arith.addi %980, %c3_i32_394 : i32
      %998 = arith.index_cast %997 : i32 to index
      %999 = memref.load %arg2[%998] : memref<512xi32, #tpu.memory_space<smem>>
      %1000 = arith.index_cast %999 : i32 to index
      %c0_395 = arith.constant 0 : index
      %1001 = vector.load %arg3[%1000, %c0_395] : memref<1024x128xf32, #tpu.memory_space<vmem>>, vector<1x128xf32>
      %1002 = arith.addf %996, %1001 : vector<1x128xf32>
      %c32_i32_396 = arith.constant 32 : i32
      %1003 = arith.addi %11, %c32_i32_396 : i32
      %c7_i32_397 = arith.constant 7 : i32
      %1004 = arith.addi %1003, %c7_i32_397 : i32
      %c4_i32_398 = arith.constant 4 : i32
      %1005 = arith.muli %1004, %c4_i32_398 : i32
      %1006 = arith.index_cast %1005 : i32 to index
      %1007 = memref.load %arg2[%1006] : memref<512xi32, #tpu.memory_space<smem>>
      %1008 = arith.index_cast %1007 : i32 to index
      %c0_399 = arith.constant 0 : index
      %1009 = vector.load %arg3[%1008, %c0_399] : memref<1024x128xf32, #tpu.memory_space<vmem>>, vector<1x128xf32>
      %c1_i32_400 = arith.constant 1 : i32
      %1010 = arith.addi %1005, %c1_i32_400 : i32
      %1011 = arith.index_cast %1010 : i32 to index
      %1012 = memref.load %arg2[%1011] : memref<512xi32, #tpu.memory_space<smem>>
      %1013 = arith.index_cast %1012 : i32 to index
      %c0_401 = arith.constant 0 : index
      %1014 = vector.load %arg3[%1013, %c0_401] : memref<1024x128xf32, #tpu.memory_space<vmem>>, vector<1x128xf32>
      %1015 = arith.addf %1009, %1014 : vector<1x128xf32>
      %c2_i32_402 = arith.constant 2 : i32
      %1016 = arith.addi %1005, %c2_i32_402 : i32
      %1017 = arith.index_cast %1016 : i32 to index
      %1018 = memref.load %arg2[%1017] : memref<512xi32, #tpu.memory_space<smem>>
      %1019 = arith.index_cast %1018 : i32 to index
      %c0_403 = arith.constant 0 : index
      %1020 = vector.load %arg3[%1019, %c0_403] : memref<1024x128xf32, #tpu.memory_space<vmem>>, vector<1x128xf32>
      %1021 = arith.addf %1015, %1020 : vector<1x128xf32>
      %c3_i32_404 = arith.constant 3 : i32
      %1022 = arith.addi %1005, %c3_i32_404 : i32
      %1023 = arith.index_cast %1022 : i32 to index
      %1024 = memref.load %arg2[%1023] : memref<512xi32, #tpu.memory_space<smem>>
      %1025 = arith.index_cast %1024 : i32 to index
      %c0_405 = arith.constant 0 : index
      %1026 = vector.load %arg3[%1025, %c0_405] : memref<1024x128xf32, #tpu.memory_space<vmem>>, vector<1x128xf32>
      %1027 = arith.addf %1021, %1026 : vector<1x128xf32>
      %1028 = tpu.concatenate %852, %877, %902, %927, %952, %977, %1002, %1027 in 0 : vector<1x128xf32>, vector<1x128xf32>, vector<1x128xf32>, vector<1x128xf32>, vector<1x128xf32>, vector<1x128xf32>, vector<1x128xf32>, vector<1x128xf32> -> vector<8x128xf32>
      %cst_406 = arith.constant 2.500000e-01 : f32
      %1029 = vector.broadcast %cst_406 : f32 to vector<8x128xf32>
      %1030 = arith.mulf %1028, %1029 : vector<8x128xf32>
      %c32 = arith.constant 32 : index
      %c0_407 = arith.constant 0 : index
      %1031 = vector.load %arg9[%c32, %c0_407] : memref<64x128xf32, #tpu.memory_space<vmem>>, vector<8x128xf32>
      tpu.vector_store %arg9[%c32, %c0_407], %1030 {strides = array<i32>} : memref<64x128xf32, #tpu.memory_space<vmem>>, vector<8x128xf32>,
      %c40_i32 = arith.constant 40 : i32
      %1032 = arith.addi %11, %c40_i32 : i32
      %c0_i32_408 = arith.constant 0 : i32
      %1033 = arith.addi %1032, %c0_i32_408 : i32
      %c4_i32_409 = arith.constant 4 : i32
      %1034 = arith.muli %1033, %c4_i32_409 : i32
      %1035 = arith.index_cast %1034 : i32 to index
      %1036 = memref.load %arg2[%1035] : memref<512xi32, #tpu.memory_space<smem>>
      %1037 = arith.index_cast %1036 : i32 to index
      %c0_410 = arith.constant 0 : index
      %1038 = vector.load %arg3[%1037, %c0_410] : memref<1024x128xf32, #tpu.memory_space<vmem>>, vector<1x128xf32>
      %c1_i32_411 = arith.constant 1 : i32
      %1039 = arith.addi %1034, %c1_i32_411 : i32
      %1040 = arith.index_cast %1039 : i32 to index
      %1041 = memref.load %arg2[%1040] : memref<512xi32, #tpu.memory_space<smem>>
      %1042 = arith.index_cast %1041 : i32 to index
      %c0_412 = arith.constant 0 : index
      %1043 = vector.load %arg3[%1042, %c0_412] : memref<1024x128xf32, #tpu.memory_space<vmem>>, vector<1x128xf32>
      %1044 = arith.addf %1038, %1043 : vector<1x128xf32>
      %c2_i32_413 = arith.constant 2 : i32
      %1045 = arith.addi %1034, %c2_i32_413 : i32
      %1046 = arith.index_cast %1045 : i32 to index
      %1047 = memref.load %arg2[%1046] : memref<512xi32, #tpu.memory_space<smem>>
      %1048 = arith.index_cast %1047 : i32 to index
      %c0_414 = arith.constant 0 : index
      %1049 = vector.load %arg3[%1048, %c0_414] : memref<1024x128xf32, #tpu.memory_space<vmem>>, vector<1x128xf32>
      %1050 = arith.addf %1044, %1049 : vector<1x128xf32>
      %c3_i32_415 = arith.constant 3 : i32
      %1051 = arith.addi %1034, %c3_i32_415 : i32
      %1052 = arith.index_cast %1051 : i32 to index
      %1053 = memref.load %arg2[%1052] : memref<512xi32, #tpu.memory_space<smem>>
      %1054 = arith.index_cast %1053 : i32 to index
      %c0_416 = arith.constant 0 : index
      %1055 = vector.load %arg3[%1054, %c0_416] : memref<1024x128xf32, #tpu.memory_space<vmem>>, vector<1x128xf32>
      %1056 = arith.addf %1050, %1055 : vector<1x128xf32>
      %c40_i32_417 = arith.constant 40 : i32
      %1057 = arith.addi %11, %c40_i32_417 : i32
      %c1_i32_418 = arith.constant 1 : i32
      %1058 = arith.addi %1057, %c1_i32_418 : i32
      %c4_i32_419 = arith.constant 4 : i32
      %1059 = arith.muli %1058, %c4_i32_419 : i32
      %1060 = arith.index_cast %1059 : i32 to index
      %1061 = memref.load %arg2[%1060] : memref<512xi32, #tpu.memory_space<smem>>
      %1062 = arith.index_cast %1061 : i32 to index
      %c0_420 = arith.constant 0 : index
      %1063 = vector.load %arg3[%1062, %c0_420] : memref<1024x128xf32, #tpu.memory_space<vmem>>, vector<1x128xf32>
      %c1_i32_421 = arith.constant 1 : i32
      %1064 = arith.addi %1059, %c1_i32_421 : i32
      %1065 = arith.index_cast %1064 : i32 to index
      %1066 = memref.load %arg2[%1065] : memref<512xi32, #tpu.memory_space<smem>>
      %1067 = arith.index_cast %1066 : i32 to index
      %c0_422 = arith.constant 0 : index
      %1068 = vector.load %arg3[%1067, %c0_422] : memref<1024x128xf32, #tpu.memory_space<vmem>>, vector<1x128xf32>
      %1069 = arith.addf %1063, %1068 : vector<1x128xf32>
      %c2_i32_423 = arith.constant 2 : i32
      %1070 = arith.addi %1059, %c2_i32_423 : i32
      %1071 = arith.index_cast %1070 : i32 to index
      %1072 = memref.load %arg2[%1071] : memref<512xi32, #tpu.memory_space<smem>>
      %1073 = arith.index_cast %1072 : i32 to index
      %c0_424 = arith.constant 0 : index
      %1074 = vector.load %arg3[%1073, %c0_424] : memref<1024x128xf32, #tpu.memory_space<vmem>>, vector<1x128xf32>
      %1075 = arith.addf %1069, %1074 : vector<1x128xf32>
      %c3_i32_425 = arith.constant 3 : i32
      %1076 = arith.addi %1059, %c3_i32_425 : i32
      %1077 = arith.index_cast %1076 : i32 to index
      %1078 = memref.load %arg2[%1077] : memref<512xi32, #tpu.memory_space<smem>>
      %1079 = arith.index_cast %1078 : i32 to index
      %c0_426 = arith.constant 0 : index
      %1080 = vector.load %arg3[%1079, %c0_426] : memref<1024x128xf32, #tpu.memory_space<vmem>>, vector<1x128xf32>
      %1081 = arith.addf %1075, %1080 : vector<1x128xf32>
      %c40_i32_427 = arith.constant 40 : i32
      %1082 = arith.addi %11, %c40_i32_427 : i32
      %c2_i32_428 = arith.constant 2 : i32
      %1083 = arith.addi %1082, %c2_i32_428 : i32
      %c4_i32_429 = arith.constant 4 : i32
      %1084 = arith.muli %1083, %c4_i32_429 : i32
      %1085 = arith.index_cast %1084 : i32 to index
      %1086 = memref.load %arg2[%1085] : memref<512xi32, #tpu.memory_space<smem>>
      %1087 = arith.index_cast %1086 : i32 to index
      %c0_430 = arith.constant 0 : index
      %1088 = vector.load %arg3[%1087, %c0_430] : memref<1024x128xf32, #tpu.memory_space<vmem>>, vector<1x128xf32>
      %c1_i32_431 = arith.constant 1 : i32
      %1089 = arith.addi %1084, %c1_i32_431 : i32
      %1090 = arith.index_cast %1089 : i32 to index
      %1091 = memref.load %arg2[%1090] : memref<512xi32, #tpu.memory_space<smem>>
      %1092 = arith.index_cast %1091 : i32 to index
      %c0_432 = arith.constant 0 : index
      %1093 = vector.load %arg3[%1092, %c0_432] : memref<1024x128xf32, #tpu.memory_space<vmem>>, vector<1x128xf32>
      %1094 = arith.addf %1088, %1093 : vector<1x128xf32>
      %c2_i32_433 = arith.constant 2 : i32
      %1095 = arith.addi %1084, %c2_i32_433 : i32
      %1096 = arith.index_cast %1095 : i32 to index
      %1097 = memref.load %arg2[%1096] : memref<512xi32, #tpu.memory_space<smem>>
      %1098 = arith.index_cast %1097 : i32 to index
      %c0_434 = arith.constant 0 : index
      %1099 = vector.load %arg3[%1098, %c0_434] : memref<1024x128xf32, #tpu.memory_space<vmem>>, vector<1x128xf32>
      %1100 = arith.addf %1094, %1099 : vector<1x128xf32>
      %c3_i32_435 = arith.constant 3 : i32
      %1101 = arith.addi %1084, %c3_i32_435 : i32
      %1102 = arith.index_cast %1101 : i32 to index
      %1103 = memref.load %arg2[%1102] : memref<512xi32, #tpu.memory_space<smem>>
      %1104 = arith.index_cast %1103 : i32 to index
      %c0_436 = arith.constant 0 : index
      %1105 = vector.load %arg3[%1104, %c0_436] : memref<1024x128xf32, #tpu.memory_space<vmem>>, vector<1x128xf32>
      %1106 = arith.addf %1100, %1105 : vector<1x128xf32>
      %c40_i32_437 = arith.constant 40 : i32
      %1107 = arith.addi %11, %c40_i32_437 : i32
      %c3_i32_438 = arith.constant 3 : i32
      %1108 = arith.addi %1107, %c3_i32_438 : i32
      %c4_i32_439 = arith.constant 4 : i32
      %1109 = arith.muli %1108, %c4_i32_439 : i32
      %1110 = arith.index_cast %1109 : i32 to index
      %1111 = memref.load %arg2[%1110] : memref<512xi32, #tpu.memory_space<smem>>
      %1112 = arith.index_cast %1111 : i32 to index
      %c0_440 = arith.constant 0 : index
      %1113 = vector.load %arg3[%1112, %c0_440] : memref<1024x128xf32, #tpu.memory_space<vmem>>, vector<1x128xf32>
      %c1_i32_441 = arith.constant 1 : i32
      %1114 = arith.addi %1109, %c1_i32_441 : i32
      %1115 = arith.index_cast %1114 : i32 to index
      %1116 = memref.load %arg2[%1115] : memref<512xi32, #tpu.memory_space<smem>>
      %1117 = arith.index_cast %1116 : i32 to index
      %c0_442 = arith.constant 0 : index
      %1118 = vector.load %arg3[%1117, %c0_442] : memref<1024x128xf32, #tpu.memory_space<vmem>>, vector<1x128xf32>
      %1119 = arith.addf %1113, %1118 : vector<1x128xf32>
      %c2_i32_443 = arith.constant 2 : i32
      %1120 = arith.addi %1109, %c2_i32_443 : i32
      %1121 = arith.index_cast %1120 : i32 to index
      %1122 = memref.load %arg2[%1121] : memref<512xi32, #tpu.memory_space<smem>>
      %1123 = arith.index_cast %1122 : i32 to index
      %c0_444 = arith.constant 0 : index
      %1124 = vector.load %arg3[%1123, %c0_444] : memref<1024x128xf32, #tpu.memory_space<vmem>>, vector<1x128xf32>
      %1125 = arith.addf %1119, %1124 : vector<1x128xf32>
      %c3_i32_445 = arith.constant 3 : i32
      %1126 = arith.addi %1109, %c3_i32_445 : i32
      %1127 = arith.index_cast %1126 : i32 to index
      %1128 = memref.load %arg2[%1127] : memref<512xi32, #tpu.memory_space<smem>>
      %1129 = arith.index_cast %1128 : i32 to index
      %c0_446 = arith.constant 0 : index
      %1130 = vector.load %arg3[%1129, %c0_446] : memref<1024x128xf32, #tpu.memory_space<vmem>>, vector<1x128xf32>
      %1131 = arith.addf %1125, %1130 : vector<1x128xf32>
      %c40_i32_447 = arith.constant 40 : i32
      %1132 = arith.addi %11, %c40_i32_447 : i32
      %c4_i32_448 = arith.constant 4 : i32
      %1133 = arith.addi %1132, %c4_i32_448 : i32
      %c4_i32_449 = arith.constant 4 : i32
      %1134 = arith.muli %1133, %c4_i32_449 : i32
      %1135 = arith.index_cast %1134 : i32 to index
      %1136 = memref.load %arg2[%1135] : memref<512xi32, #tpu.memory_space<smem>>
      %1137 = arith.index_cast %1136 : i32 to index
      %c0_450 = arith.constant 0 : index
      %1138 = vector.load %arg3[%1137, %c0_450] : memref<1024x128xf32, #tpu.memory_space<vmem>>, vector<1x128xf32>
      %c1_i32_451 = arith.constant 1 : i32
      %1139 = arith.addi %1134, %c1_i32_451 : i32
      %1140 = arith.index_cast %1139 : i32 to index
      %1141 = memref.load %arg2[%1140] : memref<512xi32, #tpu.memory_space<smem>>
      %1142 = arith.index_cast %1141 : i32 to index
      %c0_452 = arith.constant 0 : index
      %1143 = vector.load %arg3[%1142, %c0_452] : memref<1024x128xf32, #tpu.memory_space<vmem>>, vector<1x128xf32>
      %1144 = arith.addf %1138, %1143 : vector<1x128xf32>
      %c2_i32_453 = arith.constant 2 : i32
      %1145 = arith.addi %1134, %c2_i32_453 : i32
      %1146 = arith.index_cast %1145 : i32 to index
      %1147 = memref.load %arg2[%1146] : memref<512xi32, #tpu.memory_space<smem>>
      %1148 = arith.index_cast %1147 : i32 to index
      %c0_454 = arith.constant 0 : index
      %1149 = vector.load %arg3[%1148, %c0_454] : memref<1024x128xf32, #tpu.memory_space<vmem>>, vector<1x128xf32>
      %1150 = arith.addf %1144, %1149 : vector<1x128xf32>
      %c3_i32_455 = arith.constant 3 : i32
      %1151 = arith.addi %1134, %c3_i32_455 : i32
      %1152 = arith.index_cast %1151 : i32 to index
      %1153 = memref.load %arg2[%1152] : memref<512xi32, #tpu.memory_space<smem>>
      %1154 = arith.index_cast %1153 : i32 to index
      %c0_456 = arith.constant 0 : index
      %1155 = vector.load %arg3[%1154, %c0_456] : memref<1024x128xf32, #tpu.memory_space<vmem>>, vector<1x128xf32>
      %1156 = arith.addf %1150, %1155 : vector<1x128xf32>
      %c40_i32_457 = arith.constant 40 : i32
      %1157 = arith.addi %11, %c40_i32_457 : i32
      %c5_i32_458 = arith.constant 5 : i32
      %1158 = arith.addi %1157, %c5_i32_458 : i32
      %c4_i32_459 = arith.constant 4 : i32
      %1159 = arith.muli %1158, %c4_i32_459 : i32
      %1160 = arith.index_cast %1159 : i32 to index
      %1161 = memref.load %arg2[%1160] : memref<512xi32, #tpu.memory_space<smem>>
      %1162 = arith.index_cast %1161 : i32 to index
      %c0_460 = arith.constant 0 : index
      %1163 = vector.load %arg3[%1162, %c0_460] : memref<1024x128xf32, #tpu.memory_space<vmem>>, vector<1x128xf32>
      %c1_i32_461 = arith.constant 1 : i32
      %1164 = arith.addi %1159, %c1_i32_461 : i32
      %1165 = arith.index_cast %1164 : i32 to index
      %1166 = memref.load %arg2[%1165] : memref<512xi32, #tpu.memory_space<smem>>
      %1167 = arith.index_cast %1166 : i32 to index
      %c0_462 = arith.constant 0 : index
      %1168 = vector.load %arg3[%1167, %c0_462] : memref<1024x128xf32, #tpu.memory_space<vmem>>, vector<1x128xf32>
      %1169 = arith.addf %1163, %1168 : vector<1x128xf32>
      %c2_i32_463 = arith.constant 2 : i32
      %1170 = arith.addi %1159, %c2_i32_463 : i32
      %1171 = arith.index_cast %1170 : i32 to index
      %1172 = memref.load %arg2[%1171] : memref<512xi32, #tpu.memory_space<smem>>
      %1173 = arith.index_cast %1172 : i32 to index
      %c0_464 = arith.constant 0 : index
      %1174 = vector.load %arg3[%1173, %c0_464] : memref<1024x128xf32, #tpu.memory_space<vmem>>, vector<1x128xf32>
      %1175 = arith.addf %1169, %1174 : vector<1x128xf32>
      %c3_i32_465 = arith.constant 3 : i32
      %1176 = arith.addi %1159, %c3_i32_465 : i32
      %1177 = arith.index_cast %1176 : i32 to index
      %1178 = memref.load %arg2[%1177] : memref<512xi32, #tpu.memory_space<smem>>
      %1179 = arith.index_cast %1178 : i32 to index
      %c0_466 = arith.constant 0 : index
      %1180 = vector.load %arg3[%1179, %c0_466] : memref<1024x128xf32, #tpu.memory_space<vmem>>, vector<1x128xf32>
      %1181 = arith.addf %1175, %1180 : vector<1x128xf32>
      %c40_i32_467 = arith.constant 40 : i32
      %1182 = arith.addi %11, %c40_i32_467 : i32
      %c6_i32_468 = arith.constant 6 : i32
      %1183 = arith.addi %1182, %c6_i32_468 : i32
      %c4_i32_469 = arith.constant 4 : i32
      %1184 = arith.muli %1183, %c4_i32_469 : i32
      %1185 = arith.index_cast %1184 : i32 to index
      %1186 = memref.load %arg2[%1185] : memref<512xi32, #tpu.memory_space<smem>>
      %1187 = arith.index_cast %1186 : i32 to index
      %c0_470 = arith.constant 0 : index
      %1188 = vector.load %arg3[%1187, %c0_470] : memref<1024x128xf32, #tpu.memory_space<vmem>>, vector<1x128xf32>
      %c1_i32_471 = arith.constant 1 : i32
      %1189 = arith.addi %1184, %c1_i32_471 : i32
      %1190 = arith.index_cast %1189 : i32 to index
      %1191 = memref.load %arg2[%1190] : memref<512xi32, #tpu.memory_space<smem>>
      %1192 = arith.index_cast %1191 : i32 to index
      %c0_472 = arith.constant 0 : index
      %1193 = vector.load %arg3[%1192, %c0_472] : memref<1024x128xf32, #tpu.memory_space<vmem>>, vector<1x128xf32>
      %1194 = arith.addf %1188, %1193 : vector<1x128xf32>
      %c2_i32_473 = arith.constant 2 : i32
      %1195 = arith.addi %1184, %c2_i32_473 : i32
      %1196 = arith.index_cast %1195 : i32 to index
      %1197 = memref.load %arg2[%1196] : memref<512xi32, #tpu.memory_space<smem>>
      %1198 = arith.index_cast %1197 : i32 to index
      %c0_474 = arith.constant 0 : index
      %1199 = vector.load %arg3[%1198, %c0_474] : memref<1024x128xf32, #tpu.memory_space<vmem>>, vector<1x128xf32>
      %1200 = arith.addf %1194, %1199 : vector<1x128xf32>
      %c3_i32_475 = arith.constant 3 : i32
      %1201 = arith.addi %1184, %c3_i32_475 : i32
      %1202 = arith.index_cast %1201 : i32 to index
      %1203 = memref.load %arg2[%1202] : memref<512xi32, #tpu.memory_space<smem>>
      %1204 = arith.index_cast %1203 : i32 to index
      %c0_476 = arith.constant 0 : index
      %1205 = vector.load %arg3[%1204, %c0_476] : memref<1024x128xf32, #tpu.memory_space<vmem>>, vector<1x128xf32>
      %1206 = arith.addf %1200, %1205 : vector<1x128xf32>
      %c40_i32_477 = arith.constant 40 : i32
      %1207 = arith.addi %11, %c40_i32_477 : i32
      %c7_i32_478 = arith.constant 7 : i32
      %1208 = arith.addi %1207, %c7_i32_478 : i32
      %c4_i32_479 = arith.constant 4 : i32
      %1209 = arith.muli %1208, %c4_i32_479 : i32
      %1210 = arith.index_cast %1209 : i32 to index
      %1211 = memref.load %arg2[%1210] : memref<512xi32, #tpu.memory_space<smem>>
      %1212 = arith.index_cast %1211 : i32 to index
      %c0_480 = arith.constant 0 : index
      %1213 = vector.load %arg3[%1212, %c0_480] : memref<1024x128xf32, #tpu.memory_space<vmem>>, vector<1x128xf32>
      %c1_i32_481 = arith.constant 1 : i32
      %1214 = arith.addi %1209, %c1_i32_481 : i32
      %1215 = arith.index_cast %1214 : i32 to index
      %1216 = memref.load %arg2[%1215] : memref<512xi32, #tpu.memory_space<smem>>
      %1217 = arith.index_cast %1216 : i32 to index
      %c0_482 = arith.constant 0 : index
      %1218 = vector.load %arg3[%1217, %c0_482] : memref<1024x128xf32, #tpu.memory_space<vmem>>, vector<1x128xf32>
      %1219 = arith.addf %1213, %1218 : vector<1x128xf32>
      %c2_i32_483 = arith.constant 2 : i32
      %1220 = arith.addi %1209, %c2_i32_483 : i32
      %1221 = arith.index_cast %1220 : i32 to index
      %1222 = memref.load %arg2[%1221] : memref<512xi32, #tpu.memory_space<smem>>
      %1223 = arith.index_cast %1222 : i32 to index
      %c0_484 = arith.constant 0 : index
      %1224 = vector.load %arg3[%1223, %c0_484] : memref<1024x128xf32, #tpu.memory_space<vmem>>, vector<1x128xf32>
      %1225 = arith.addf %1219, %1224 : vector<1x128xf32>
      %c3_i32_485 = arith.constant 3 : i32
      %1226 = arith.addi %1209, %c3_i32_485 : i32
      %1227 = arith.index_cast %1226 : i32 to index
      %1228 = memref.load %arg2[%1227] : memref<512xi32, #tpu.memory_space<smem>>
      %1229 = arith.index_cast %1228 : i32 to index
      %c0_486 = arith.constant 0 : index
      %1230 = vector.load %arg3[%1229, %c0_486] : memref<1024x128xf32, #tpu.memory_space<vmem>>, vector<1x128xf32>
      %1231 = arith.addf %1225, %1230 : vector<1x128xf32>
      %1232 = tpu.concatenate %1056, %1081, %1106, %1131, %1156, %1181, %1206, %1231 in 0 : vector<1x128xf32>, vector<1x128xf32>, vector<1x128xf32>, vector<1x128xf32>, vector<1x128xf32>, vector<1x128xf32>, vector<1x128xf32>, vector<1x128xf32> -> vector<8x128xf32>
      %cst_487 = arith.constant 2.500000e-01 : f32
      %1233 = vector.broadcast %cst_487 : f32 to vector<8x128xf32>
      %1234 = arith.mulf %1232, %1233 : vector<8x128xf32>
      %c40 = arith.constant 40 : index
      %c0_488 = arith.constant 0 : index
      %1235 = vector.load %arg9[%c40, %c0_488] : memref<64x128xf32, #tpu.memory_space<vmem>>, vector<8x128xf32>
      tpu.vector_store %arg9[%c40, %c0_488], %1234 {strides = array<i32>} : memref<64x128xf32, #tpu.memory_space<vmem>>, vector<8x128xf32>,
      %c48_i32 = arith.constant 48 : i32
      %1236 = arith.addi %11, %c48_i32 : i32
      %c0_i32_489 = arith.constant 0 : i32
      %1237 = arith.addi %1236, %c0_i32_489 : i32
      %c4_i32_490 = arith.constant 4 : i32
      %1238 = arith.muli %1237, %c4_i32_490 : i32
      %1239 = arith.index_cast %1238 : i32 to index
      %1240 = memref.load %arg2[%1239] : memref<512xi32, #tpu.memory_space<smem>>
      %1241 = arith.index_cast %1240 : i32 to index
      %c0_491 = arith.constant 0 : index
      %1242 = vector.load %arg3[%1241, %c0_491] : memref<1024x128xf32, #tpu.memory_space<vmem>>, vector<1x128xf32>
      %c1_i32_492 = arith.constant 1 : i32
      %1243 = arith.addi %1238, %c1_i32_492 : i32
      %1244 = arith.index_cast %1243 : i32 to index
      %1245 = memref.load %arg2[%1244] : memref<512xi32, #tpu.memory_space<smem>>
      %1246 = arith.index_cast %1245 : i32 to index
      %c0_493 = arith.constant 0 : index
      %1247 = vector.load %arg3[%1246, %c0_493] : memref<1024x128xf32, #tpu.memory_space<vmem>>, vector<1x128xf32>
      %1248 = arith.addf %1242, %1247 : vector<1x128xf32>
      %c2_i32_494 = arith.constant 2 : i32
      %1249 = arith.addi %1238, %c2_i32_494 : i32
      %1250 = arith.index_cast %1249 : i32 to index
      %1251 = memref.load %arg2[%1250] : memref<512xi32, #tpu.memory_space<smem>>
      %1252 = arith.index_cast %1251 : i32 to index
      %c0_495 = arith.constant 0 : index
      %1253 = vector.load %arg3[%1252, %c0_495] : memref<1024x128xf32, #tpu.memory_space<vmem>>, vector<1x128xf32>
      %1254 = arith.addf %1248, %1253 : vector<1x128xf32>
      %c3_i32_496 = arith.constant 3 : i32
      %1255 = arith.addi %1238, %c3_i32_496 : i32
      %1256 = arith.index_cast %1255 : i32 to index
      %1257 = memref.load %arg2[%1256] : memref<512xi32, #tpu.memory_space<smem>>
      %1258 = arith.index_cast %1257 : i32 to index
      %c0_497 = arith.constant 0 : index
      %1259 = vector.load %arg3[%1258, %c0_497] : memref<1024x128xf32, #tpu.memory_space<vmem>>, vector<1x128xf32>
      %1260 = arith.addf %1254, %1259 : vector<1x128xf32>
      %c48_i32_498 = arith.constant 48 : i32
      %1261 = arith.addi %11, %c48_i32_498 : i32
      %c1_i32_499 = arith.constant 1 : i32
      %1262 = arith.addi %1261, %c1_i32_499 : i32
      %c4_i32_500 = arith.constant 4 : i32
      %1263 = arith.muli %1262, %c4_i32_500 : i32
      %1264 = arith.index_cast %1263 : i32 to index
      %1265 = memref.load %arg2[%1264] : memref<512xi32, #tpu.memory_space<smem>>
      %1266 = arith.index_cast %1265 : i32 to index
      %c0_501 = arith.constant 0 : index
      %1267 = vector.load %arg3[%1266, %c0_501] : memref<1024x128xf32, #tpu.memory_space<vmem>>, vector<1x128xf32>
      %c1_i32_502 = arith.constant 1 : i32
      %1268 = arith.addi %1263, %c1_i32_502 : i32
      %1269 = arith.index_cast %1268 : i32 to index
      %1270 = memref.load %arg2[%1269] : memref<512xi32, #tpu.memory_space<smem>>
      %1271 = arith.index_cast %1270 : i32 to index
      %c0_503 = arith.constant 0 : index
      %1272 = vector.load %arg3[%1271, %c0_503] : memref<1024x128xf32, #tpu.memory_space<vmem>>, vector<1x128xf32>
      %1273 = arith.addf %1267, %1272 : vector<1x128xf32>
      %c2_i32_504 = arith.constant 2 : i32
      %1274 = arith.addi %1263, %c2_i32_504 : i32
      %1275 = arith.index_cast %1274 : i32 to index
      %1276 = memref.load %arg2[%1275] : memref<512xi32, #tpu.memory_space<smem>>
      %1277 = arith.index_cast %1276 : i32 to index
      %c0_505 = arith.constant 0 : index
      %1278 = vector.load %arg3[%1277, %c0_505] : memref<1024x128xf32, #tpu.memory_space<vmem>>, vector<1x128xf32>
      %1279 = arith.addf %1273, %1278 : vector<1x128xf32>
      %c3_i32_506 = arith.constant 3 : i32
      %1280 = arith.addi %1263, %c3_i32_506 : i32
      %1281 = arith.index_cast %1280 : i32 to index
      %1282 = memref.load %arg2[%1281] : memref<512xi32, #tpu.memory_space<smem>>
      %1283 = arith.index_cast %1282 : i32 to index
      %c0_507 = arith.constant 0 : index
      %1284 = vector.load %arg3[%1283, %c0_507] : memref<1024x128xf32, #tpu.memory_space<vmem>>, vector<1x128xf32>
      %1285 = arith.addf %1279, %1284 : vector<1x128xf32>
      %c48_i32_508 = arith.constant 48 : i32
      %1286 = arith.addi %11, %c48_i32_508 : i32
      %c2_i32_509 = arith.constant 2 : i32
      %1287 = arith.addi %1286, %c2_i32_509 : i32
      %c4_i32_510 = arith.constant 4 : i32
      %1288 = arith.muli %1287, %c4_i32_510 : i32
      %1289 = arith.index_cast %1288 : i32 to index
      %1290 = memref.load %arg2[%1289] : memref<512xi32, #tpu.memory_space<smem>>
      %1291 = arith.index_cast %1290 : i32 to index
      %c0_511 = arith.constant 0 : index
      %1292 = vector.load %arg3[%1291, %c0_511] : memref<1024x128xf32, #tpu.memory_space<vmem>>, vector<1x128xf32>
      %c1_i32_512 = arith.constant 1 : i32
      %1293 = arith.addi %1288, %c1_i32_512 : i32
      %1294 = arith.index_cast %1293 : i32 to index
      %1295 = memref.load %arg2[%1294] : memref<512xi32, #tpu.memory_space<smem>>
      %1296 = arith.index_cast %1295 : i32 to index
      %c0_513 = arith.constant 0 : index
      %1297 = vector.load %arg3[%1296, %c0_513] : memref<1024x128xf32, #tpu.memory_space<vmem>>, vector<1x128xf32>
      %1298 = arith.addf %1292, %1297 : vector<1x128xf32>
      %c2_i32_514 = arith.constant 2 : i32
      %1299 = arith.addi %1288, %c2_i32_514 : i32
      %1300 = arith.index_cast %1299 : i32 to index
      %1301 = memref.load %arg2[%1300] : memref<512xi32, #tpu.memory_space<smem>>
      %1302 = arith.index_cast %1301 : i32 to index
      %c0_515 = arith.constant 0 : index
      %1303 = vector.load %arg3[%1302, %c0_515] : memref<1024x128xf32, #tpu.memory_space<vmem>>, vector<1x128xf32>
      %1304 = arith.addf %1298, %1303 : vector<1x128xf32>
      %c3_i32_516 = arith.constant 3 : i32
      %1305 = arith.addi %1288, %c3_i32_516 : i32
      %1306 = arith.index_cast %1305 : i32 to index
      %1307 = memref.load %arg2[%1306] : memref<512xi32, #tpu.memory_space<smem>>
      %1308 = arith.index_cast %1307 : i32 to index
      %c0_517 = arith.constant 0 : index
      %1309 = vector.load %arg3[%1308, %c0_517] : memref<1024x128xf32, #tpu.memory_space<vmem>>, vector<1x128xf32>
      %1310 = arith.addf %1304, %1309 : vector<1x128xf32>
      %c48_i32_518 = arith.constant 48 : i32
      %1311 = arith.addi %11, %c48_i32_518 : i32
      %c3_i32_519 = arith.constant 3 : i32
      %1312 = arith.addi %1311, %c3_i32_519 : i32
      %c4_i32_520 = arith.constant 4 : i32
      %1313 = arith.muli %1312, %c4_i32_520 : i32
      %1314 = arith.index_cast %1313 : i32 to index
      %1315 = memref.load %arg2[%1314] : memref<512xi32, #tpu.memory_space<smem>>
      %1316 = arith.index_cast %1315 : i32 to index
      %c0_521 = arith.constant 0 : index
      %1317 = vector.load %arg3[%1316, %c0_521] : memref<1024x128xf32, #tpu.memory_space<vmem>>, vector<1x128xf32>
      %c1_i32_522 = arith.constant 1 : i32
      %1318 = arith.addi %1313, %c1_i32_522 : i32
      %1319 = arith.index_cast %1318 : i32 to index
      %1320 = memref.load %arg2[%1319] : memref<512xi32, #tpu.memory_space<smem>>
      %1321 = arith.index_cast %1320 : i32 to index
      %c0_523 = arith.constant 0 : index
      %1322 = vector.load %arg3[%1321, %c0_523] : memref<1024x128xf32, #tpu.memory_space<vmem>>, vector<1x128xf32>
      %1323 = arith.addf %1317, %1322 : vector<1x128xf32>
      %c2_i32_524 = arith.constant 2 : i32
      %1324 = arith.addi %1313, %c2_i32_524 : i32
      %1325 = arith.index_cast %1324 : i32 to index
      %1326 = memref.load %arg2[%1325] : memref<512xi32, #tpu.memory_space<smem>>
      %1327 = arith.index_cast %1326 : i32 to index
      %c0_525 = arith.constant 0 : index
      %1328 = vector.load %arg3[%1327, %c0_525] : memref<1024x128xf32, #tpu.memory_space<vmem>>, vector<1x128xf32>
      %1329 = arith.addf %1323, %1328 : vector<1x128xf32>
      %c3_i32_526 = arith.constant 3 : i32
      %1330 = arith.addi %1313, %c3_i32_526 : i32
      %1331 = arith.index_cast %1330 : i32 to index
      %1332 = memref.load %arg2[%1331] : memref<512xi32, #tpu.memory_space<smem>>
      %1333 = arith.index_cast %1332 : i32 to index
      %c0_527 = arith.constant 0 : index
      %1334 = vector.load %arg3[%1333, %c0_527] : memref<1024x128xf32, #tpu.memory_space<vmem>>, vector<1x128xf32>
      %1335 = arith.addf %1329, %1334 : vector<1x128xf32>
      %c48_i32_528 = arith.constant 48 : i32
      %1336 = arith.addi %11, %c48_i32_528 : i32
      %c4_i32_529 = arith.constant 4 : i32
      %1337 = arith.addi %1336, %c4_i32_529 : i32
      %c4_i32_530 = arith.constant 4 : i32
      %1338 = arith.muli %1337, %c4_i32_530 : i32
      %1339 = arith.index_cast %1338 : i32 to index
      %1340 = memref.load %arg2[%1339] : memref<512xi32, #tpu.memory_space<smem>>
      %1341 = arith.index_cast %1340 : i32 to index
      %c0_531 = arith.constant 0 : index
      %1342 = vector.load %arg3[%1341, %c0_531] : memref<1024x128xf32, #tpu.memory_space<vmem>>, vector<1x128xf32>
      %c1_i32_532 = arith.constant 1 : i32
      %1343 = arith.addi %1338, %c1_i32_532 : i32
      %1344 = arith.index_cast %1343 : i32 to index
      %1345 = memref.load %arg2[%1344] : memref<512xi32, #tpu.memory_space<smem>>
      %1346 = arith.index_cast %1345 : i32 to index
      %c0_533 = arith.constant 0 : index
      %1347 = vector.load %arg3[%1346, %c0_533] : memref<1024x128xf32, #tpu.memory_space<vmem>>, vector<1x128xf32>
      %1348 = arith.addf %1342, %1347 : vector<1x128xf32>
      %c2_i32_534 = arith.constant 2 : i32
      %1349 = arith.addi %1338, %c2_i32_534 : i32
      %1350 = arith.index_cast %1349 : i32 to index
      %1351 = memref.load %arg2[%1350] : memref<512xi32, #tpu.memory_space<smem>>
      %1352 = arith.index_cast %1351 : i32 to index
      %c0_535 = arith.constant 0 : index
      %1353 = vector.load %arg3[%1352, %c0_535] : memref<1024x128xf32, #tpu.memory_space<vmem>>, vector<1x128xf32>
      %1354 = arith.addf %1348, %1353 : vector<1x128xf32>
      %c3_i32_536 = arith.constant 3 : i32
      %1355 = arith.addi %1338, %c3_i32_536 : i32
      %1356 = arith.index_cast %1355 : i32 to index
      %1357 = memref.load %arg2[%1356] : memref<512xi32, #tpu.memory_space<smem>>
      %1358 = arith.index_cast %1357 : i32 to index
      %c0_537 = arith.constant 0 : index
      %1359 = vector.load %arg3[%1358, %c0_537] : memref<1024x128xf32, #tpu.memory_space<vmem>>, vector<1x128xf32>
      %1360 = arith.addf %1354, %1359 : vector<1x128xf32>
      %c48_i32_538 = arith.constant 48 : i32
      %1361 = arith.addi %11, %c48_i32_538 : i32
      %c5_i32_539 = arith.constant 5 : i32
      %1362 = arith.addi %1361, %c5_i32_539 : i32
      %c4_i32_540 = arith.constant 4 : i32
      %1363 = arith.muli %1362, %c4_i32_540 : i32
      %1364 = arith.index_cast %1363 : i32 to index
      %1365 = memref.load %arg2[%1364] : memref<512xi32, #tpu.memory_space<smem>>
      %1366 = arith.index_cast %1365 : i32 to index
      %c0_541 = arith.constant 0 : index
      %1367 = vector.load %arg3[%1366, %c0_541] : memref<1024x128xf32, #tpu.memory_space<vmem>>, vector<1x128xf32>
      %c1_i32_542 = arith.constant 1 : i32
      %1368 = arith.addi %1363, %c1_i32_542 : i32
      %1369 = arith.index_cast %1368 : i32 to index
      %1370 = memref.load %arg2[%1369] : memref<512xi32, #tpu.memory_space<smem>>
      %1371 = arith.index_cast %1370 : i32 to index
      %c0_543 = arith.constant 0 : index
      %1372 = vector.load %arg3[%1371, %c0_543] : memref<1024x128xf32, #tpu.memory_space<vmem>>, vector<1x128xf32>
      %1373 = arith.addf %1367, %1372 : vector<1x128xf32>
      %c2_i32_544 = arith.constant 2 : i32
      %1374 = arith.addi %1363, %c2_i32_544 : i32
      %1375 = arith.index_cast %1374 : i32 to index
      %1376 = memref.load %arg2[%1375] : memref<512xi32, #tpu.memory_space<smem>>
      %1377 = arith.index_cast %1376 : i32 to index
      %c0_545 = arith.constant 0 : index
      %1378 = vector.load %arg3[%1377, %c0_545] : memref<1024x128xf32, #tpu.memory_space<vmem>>, vector<1x128xf32>
      %1379 = arith.addf %1373, %1378 : vector<1x128xf32>
      %c3_i32_546 = arith.constant 3 : i32
      %1380 = arith.addi %1363, %c3_i32_546 : i32
      %1381 = arith.index_cast %1380 : i32 to index
      %1382 = memref.load %arg2[%1381] : memref<512xi32, #tpu.memory_space<smem>>
      %1383 = arith.index_cast %1382 : i32 to index
      %c0_547 = arith.constant 0 : index
      %1384 = vector.load %arg3[%1383, %c0_547] : memref<1024x128xf32, #tpu.memory_space<vmem>>, vector<1x128xf32>
      %1385 = arith.addf %1379, %1384 : vector<1x128xf32>
      %c48_i32_548 = arith.constant 48 : i32
      %1386 = arith.addi %11, %c48_i32_548 : i32
      %c6_i32_549 = arith.constant 6 : i32
      %1387 = arith.addi %1386, %c6_i32_549 : i32
      %c4_i32_550 = arith.constant 4 : i32
      %1388 = arith.muli %1387, %c4_i32_550 : i32
      %1389 = arith.index_cast %1388 : i32 to index
      %1390 = memref.load %arg2[%1389] : memref<512xi32, #tpu.memory_space<smem>>
      %1391 = arith.index_cast %1390 : i32 to index
      %c0_551 = arith.constant 0 : index
      %1392 = vector.load %arg3[%1391, %c0_551] : memref<1024x128xf32, #tpu.memory_space<vmem>>, vector<1x128xf32>
      %c1_i32_552 = arith.constant 1 : i32
      %1393 = arith.addi %1388, %c1_i32_552 : i32
      %1394 = arith.index_cast %1393 : i32 to index
      %1395 = memref.load %arg2[%1394] : memref<512xi32, #tpu.memory_space<smem>>
      %1396 = arith.index_cast %1395 : i32 to index
      %c0_553 = arith.constant 0 : index
      %1397 = vector.load %arg3[%1396, %c0_553] : memref<1024x128xf32, #tpu.memory_space<vmem>>, vector<1x128xf32>
      %1398 = arith.addf %1392, %1397 : vector<1x128xf32>
      %c2_i32_554 = arith.constant 2 : i32
      %1399 = arith.addi %1388, %c2_i32_554 : i32
      %1400 = arith.index_cast %1399 : i32 to index
      %1401 = memref.load %arg2[%1400] : memref<512xi32, #tpu.memory_space<smem>>
      %1402 = arith.index_cast %1401 : i32 to index
      %c0_555 = arith.constant 0 : index
      %1403 = vector.load %arg3[%1402, %c0_555] : memref<1024x128xf32, #tpu.memory_space<vmem>>, vector<1x128xf32>
      %1404 = arith.addf %1398, %1403 : vector<1x128xf32>
      %c3_i32_556 = arith.constant 3 : i32
      %1405 = arith.addi %1388, %c3_i32_556 : i32
      %1406 = arith.index_cast %1405 : i32 to index
      %1407 = memref.load %arg2[%1406] : memref<512xi32, #tpu.memory_space<smem>>
      %1408 = arith.index_cast %1407 : i32 to index
      %c0_557 = arith.constant 0 : index
      %1409 = vector.load %arg3[%1408, %c0_557] : memref<1024x128xf32, #tpu.memory_space<vmem>>, vector<1x128xf32>
      %1410 = arith.addf %1404, %1409 : vector<1x128xf32>
      %c48_i32_558 = arith.constant 48 : i32
      %1411 = arith.addi %11, %c48_i32_558 : i32
      %c7_i32_559 = arith.constant 7 : i32
      %1412 = arith.addi %1411, %c7_i32_559 : i32
      %c4_i32_560 = arith.constant 4 : i32
      %1413 = arith.muli %1412, %c4_i32_560 : i32
      %1414 = arith.index_cast %1413 : i32 to index
      %1415 = memref.load %arg2[%1414] : memref<512xi32, #tpu.memory_space<smem>>
      %1416 = arith.index_cast %1415 : i32 to index
      %c0_561 = arith.constant 0 : index
      %1417 = vector.load %arg3[%1416, %c0_561] : memref<1024x128xf32, #tpu.memory_space<vmem>>, vector<1x128xf32>
      %c1_i32_562 = arith.constant 1 : i32
      %1418 = arith.addi %1413, %c1_i32_562 : i32
      %1419 = arith.index_cast %1418 : i32 to index
      %1420 = memref.load %arg2[%1419] : memref<512xi32, #tpu.memory_space<smem>>
      %1421 = arith.index_cast %1420 : i32 to index
      %c0_563 = arith.constant 0 : index
      %1422 = vector.load %arg3[%1421, %c0_563] : memref<1024x128xf32, #tpu.memory_space<vmem>>, vector<1x128xf32>
      %1423 = arith.addf %1417, %1422 : vector<1x128xf32>
      %c2_i32_564 = arith.constant 2 : i32
      %1424 = arith.addi %1413, %c2_i32_564 : i32
      %1425 = arith.index_cast %1424 : i32 to index
      %1426 = memref.load %arg2[%1425] : memref<512xi32, #tpu.memory_space<smem>>
      %1427 = arith.index_cast %1426 : i32 to index
      %c0_565 = arith.constant 0 : index
      %1428 = vector.load %arg3[%1427, %c0_565] : memref<1024x128xf32, #tpu.memory_space<vmem>>, vector<1x128xf32>
      %1429 = arith.addf %1423, %1428 : vector<1x128xf32>
      %c3_i32_566 = arith.constant 3 : i32
      %1430 = arith.addi %1413, %c3_i32_566 : i32
      %1431 = arith.index_cast %1430 : i32 to index
      %1432 = memref.load %arg2[%1431] : memref<512xi32, #tpu.memory_space<smem>>
      %1433 = arith.index_cast %1432 : i32 to index
      %c0_567 = arith.constant 0 : index
      %1434 = vector.load %arg3[%1433, %c0_567] : memref<1024x128xf32, #tpu.memory_space<vmem>>, vector<1x128xf32>
      %1435 = arith.addf %1429, %1434 : vector<1x128xf32>
      %1436 = tpu.concatenate %1260, %1285, %1310, %1335, %1360, %1385, %1410, %1435 in 0 : vector<1x128xf32>, vector<1x128xf32>, vector<1x128xf32>, vector<1x128xf32>, vector<1x128xf32>, vector<1x128xf32>, vector<1x128xf32>, vector<1x128xf32> -> vector<8x128xf32>
      %cst_568 = arith.constant 2.500000e-01 : f32
      %1437 = vector.broadcast %cst_568 : f32 to vector<8x128xf32>
      %1438 = arith.mulf %1436, %1437 : vector<8x128xf32>
      %c48 = arith.constant 48 : index
      %c0_569 = arith.constant 0 : index
      %1439 = vector.load %arg9[%c48, %c0_569] : memref<64x128xf32, #tpu.memory_space<vmem>>, vector<8x128xf32>
      tpu.vector_store %arg9[%c48, %c0_569], %1438 {strides = array<i32>} : memref<64x128xf32, #tpu.memory_space<vmem>>, vector<8x128xf32>,
      %c56_i32 = arith.constant 56 : i32
      %1440 = arith.addi %11, %c56_i32 : i32
      %c0_i32_570 = arith.constant 0 : i32
      %1441 = arith.addi %1440, %c0_i32_570 : i32
      %c4_i32_571 = arith.constant 4 : i32
      %1442 = arith.muli %1441, %c4_i32_571 : i32
      %1443 = arith.index_cast %1442 : i32 to index
      %1444 = memref.load %arg2[%1443] : memref<512xi32, #tpu.memory_space<smem>>
      %1445 = arith.index_cast %1444 : i32 to index
      %c0_572 = arith.constant 0 : index
      %1446 = vector.load %arg3[%1445, %c0_572] : memref<1024x128xf32, #tpu.memory_space<vmem>>, vector<1x128xf32>
      %c1_i32_573 = arith.constant 1 : i32
      %1447 = arith.addi %1442, %c1_i32_573 : i32
      %1448 = arith.index_cast %1447 : i32 to index
      %1449 = memref.load %arg2[%1448] : memref<512xi32, #tpu.memory_space<smem>>
      %1450 = arith.index_cast %1449 : i32 to index
      %c0_574 = arith.constant 0 : index
      %1451 = vector.load %arg3[%1450, %c0_574] : memref<1024x128xf32, #tpu.memory_space<vmem>>, vector<1x128xf32>
      %1452 = arith.addf %1446, %1451 : vector<1x128xf32>
      %c2_i32_575 = arith.constant 2 : i32
      %1453 = arith.addi %1442, %c2_i32_575 : i32
      %1454 = arith.index_cast %1453 : i32 to index
      %1455 = memref.load %arg2[%1454] : memref<512xi32, #tpu.memory_space<smem>>
      %1456 = arith.index_cast %1455 : i32 to index
      %c0_576 = arith.constant 0 : index
      %1457 = vector.load %arg3[%1456, %c0_576] : memref<1024x128xf32, #tpu.memory_space<vmem>>, vector<1x128xf32>
      %1458 = arith.addf %1452, %1457 : vector<1x128xf32>
      %c3_i32_577 = arith.constant 3 : i32
      %1459 = arith.addi %1442, %c3_i32_577 : i32
      %1460 = arith.index_cast %1459 : i32 to index
      %1461 = memref.load %arg2[%1460] : memref<512xi32, #tpu.memory_space<smem>>
      %1462 = arith.index_cast %1461 : i32 to index
      %c0_578 = arith.constant 0 : index
      %1463 = vector.load %arg3[%1462, %c0_578] : memref<1024x128xf32, #tpu.memory_space<vmem>>, vector<1x128xf32>
      %1464 = arith.addf %1458, %1463 : vector<1x128xf32>
      %c56_i32_579 = arith.constant 56 : i32
      %1465 = arith.addi %11, %c56_i32_579 : i32
      %c1_i32_580 = arith.constant 1 : i32
      %1466 = arith.addi %1465, %c1_i32_580 : i32
      %c4_i32_581 = arith.constant 4 : i32
      %1467 = arith.muli %1466, %c4_i32_581 : i32
      %1468 = arith.index_cast %1467 : i32 to index
      %1469 = memref.load %arg2[%1468] : memref<512xi32, #tpu.memory_space<smem>>
      %1470 = arith.index_cast %1469 : i32 to index
      %c0_582 = arith.constant 0 : index
      %1471 = vector.load %arg3[%1470, %c0_582] : memref<1024x128xf32, #tpu.memory_space<vmem>>, vector<1x128xf32>
      %c1_i32_583 = arith.constant 1 : i32
      %1472 = arith.addi %1467, %c1_i32_583 : i32
      %1473 = arith.index_cast %1472 : i32 to index
      %1474 = memref.load %arg2[%1473] : memref<512xi32, #tpu.memory_space<smem>>
      %1475 = arith.index_cast %1474 : i32 to index
      %c0_584 = arith.constant 0 : index
      %1476 = vector.load %arg3[%1475, %c0_584] : memref<1024x128xf32, #tpu.memory_space<vmem>>, vector<1x128xf32>
      %1477 = arith.addf %1471, %1476 : vector<1x128xf32>
      %c2_i32_585 = arith.constant 2 : i32
      %1478 = arith.addi %1467, %c2_i32_585 : i32
      %1479 = arith.index_cast %1478 : i32 to index
      %1480 = memref.load %arg2[%1479] : memref<512xi32, #tpu.memory_space<smem>>
      %1481 = arith.index_cast %1480 : i32 to index
      %c0_586 = arith.constant 0 : index
      %1482 = vector.load %arg3[%1481, %c0_586] : memref<1024x128xf32, #tpu.memory_space<vmem>>, vector<1x128xf32>
      %1483 = arith.addf %1477, %1482 : vector<1x128xf32>
      %c3_i32_587 = arith.constant 3 : i32
      %1484 = arith.addi %1467, %c3_i32_587 : i32
      %1485 = arith.index_cast %1484 : i32 to index
      %1486 = memref.load %arg2[%1485] : memref<512xi32, #tpu.memory_space<smem>>
      %1487 = arith.index_cast %1486 : i32 to index
      %c0_588 = arith.constant 0 : index
      %1488 = vector.load %arg3[%1487, %c0_588] : memref<1024x128xf32, #tpu.memory_space<vmem>>, vector<1x128xf32>
      %1489 = arith.addf %1483, %1488 : vector<1x128xf32>
      %c56_i32_589 = arith.constant 56 : i32
      %1490 = arith.addi %11, %c56_i32_589 : i32
      %c2_i32_590 = arith.constant 2 : i32
      %1491 = arith.addi %1490, %c2_i32_590 : i32
      %c4_i32_591 = arith.constant 4 : i32
      %1492 = arith.muli %1491, %c4_i32_591 : i32
      %1493 = arith.index_cast %1492 : i32 to index
      %1494 = memref.load %arg2[%1493] : memref<512xi32, #tpu.memory_space<smem>>
      %1495 = arith.index_cast %1494 : i32 to index
      %c0_592 = arith.constant 0 : index
      %1496 = vector.load %arg3[%1495, %c0_592] : memref<1024x128xf32, #tpu.memory_space<vmem>>, vector<1x128xf32>
      %c1_i32_593 = arith.constant 1 : i32
      %1497 = arith.addi %1492, %c1_i32_593 : i32
      %1498 = arith.index_cast %1497 : i32 to index
      %1499 = memref.load %arg2[%1498] : memref<512xi32, #tpu.memory_space<smem>>
      %1500 = arith.index_cast %1499 : i32 to index
      %c0_594 = arith.constant 0 : index
      %1501 = vector.load %arg3[%1500, %c0_594] : memref<1024x128xf32, #tpu.memory_space<vmem>>, vector<1x128xf32>
      %1502 = arith.addf %1496, %1501 : vector<1x128xf32>
      %c2_i32_595 = arith.constant 2 : i32
      %1503 = arith.addi %1492, %c2_i32_595 : i32
      %1504 = arith.index_cast %1503 : i32 to index
      %1505 = memref.load %arg2[%1504] : memref<512xi32, #tpu.memory_space<smem>>
      %1506 = arith.index_cast %1505 : i32 to index
      %c0_596 = arith.constant 0 : index
      %1507 = vector.load %arg3[%1506, %c0_596] : memref<1024x128xf32, #tpu.memory_space<vmem>>, vector<1x128xf32>
      %1508 = arith.addf %1502, %1507 : vector<1x128xf32>
      %c3_i32_597 = arith.constant 3 : i32
      %1509 = arith.addi %1492, %c3_i32_597 : i32
      %1510 = arith.index_cast %1509 : i32 to index
      %1511 = memref.load %arg2[%1510] : memref<512xi32, #tpu.memory_space<smem>>
      %1512 = arith.index_cast %1511 : i32 to index
      %c0_598 = arith.constant 0 : index
      %1513 = vector.load %arg3[%1512, %c0_598] : memref<1024x128xf32, #tpu.memory_space<vmem>>, vector<1x128xf32>
      %1514 = arith.addf %1508, %1513 : vector<1x128xf32>
      %c56_i32_599 = arith.constant 56 : i32
      %1515 = arith.addi %11, %c56_i32_599 : i32
      %c3_i32_600 = arith.constant 3 : i32
      %1516 = arith.addi %1515, %c3_i32_600 : i32
      %c4_i32_601 = arith.constant 4 : i32
      %1517 = arith.muli %1516, %c4_i32_601 : i32
      %1518 = arith.index_cast %1517 : i32 to index
      %1519 = memref.load %arg2[%1518] : memref<512xi32, #tpu.memory_space<smem>>
      %1520 = arith.index_cast %1519 : i32 to index
      %c0_602 = arith.constant 0 : index
      %1521 = vector.load %arg3[%1520, %c0_602] : memref<1024x128xf32, #tpu.memory_space<vmem>>, vector<1x128xf32>
      %c1_i32_603 = arith.constant 1 : i32
      %1522 = arith.addi %1517, %c1_i32_603 : i32
      %1523 = arith.index_cast %1522 : i32 to index
      %1524 = memref.load %arg2[%1523] : memref<512xi32, #tpu.memory_space<smem>>
      %1525 = arith.index_cast %1524 : i32 to index
      %c0_604 = arith.constant 0 : index
      %1526 = vector.load %arg3[%1525, %c0_604] : memref<1024x128xf32, #tpu.memory_space<vmem>>, vector<1x128xf32>
      %1527 = arith.addf %1521, %1526 : vector<1x128xf32>
      %c2_i32_605 = arith.constant 2 : i32
      %1528 = arith.addi %1517, %c2_i32_605 : i32
      %1529 = arith.index_cast %1528 : i32 to index
      %1530 = memref.load %arg2[%1529] : memref<512xi32, #tpu.memory_space<smem>>
      %1531 = arith.index_cast %1530 : i32 to index
      %c0_606 = arith.constant 0 : index
      %1532 = vector.load %arg3[%1531, %c0_606] : memref<1024x128xf32, #tpu.memory_space<vmem>>, vector<1x128xf32>
      %1533 = arith.addf %1527, %1532 : vector<1x128xf32>
      %c3_i32_607 = arith.constant 3 : i32
      %1534 = arith.addi %1517, %c3_i32_607 : i32
      %1535 = arith.index_cast %1534 : i32 to index
      %1536 = memref.load %arg2[%1535] : memref<512xi32, #tpu.memory_space<smem>>
      %1537 = arith.index_cast %1536 : i32 to index
      %c0_608 = arith.constant 0 : index
      %1538 = vector.load %arg3[%1537, %c0_608] : memref<1024x128xf32, #tpu.memory_space<vmem>>, vector<1x128xf32>
      %1539 = arith.addf %1533, %1538 : vector<1x128xf32>
      %c56_i32_609 = arith.constant 56 : i32
      %1540 = arith.addi %11, %c56_i32_609 : i32
      %c4_i32_610 = arith.constant 4 : i32
      %1541 = arith.addi %1540, %c4_i32_610 : i32
      %c4_i32_611 = arith.constant 4 : i32
      %1542 = arith.muli %1541, %c4_i32_611 : i32
      %1543 = arith.index_cast %1542 : i32 to index
      %1544 = memref.load %arg2[%1543] : memref<512xi32, #tpu.memory_space<smem>>
      %1545 = arith.index_cast %1544 : i32 to index
      %c0_612 = arith.constant 0 : index
      %1546 = vector.load %arg3[%1545, %c0_612] : memref<1024x128xf32, #tpu.memory_space<vmem>>, vector<1x128xf32>
      %c1_i32_613 = arith.constant 1 : i32
      %1547 = arith.addi %1542, %c1_i32_613 : i32
      %1548 = arith.index_cast %1547 : i32 to index
      %1549 = memref.load %arg2[%1548] : memref<512xi32, #tpu.memory_space<smem>>
      %1550 = arith.index_cast %1549 : i32 to index
      %c0_614 = arith.constant 0 : index
      %1551 = vector.load %arg3[%1550, %c0_614] : memref<1024x128xf32, #tpu.memory_space<vmem>>, vector<1x128xf32>
      %1552 = arith.addf %1546, %1551 : vector<1x128xf32>
      %c2_i32_615 = arith.constant 2 : i32
      %1553 = arith.addi %1542, %c2_i32_615 : i32
      %1554 = arith.index_cast %1553 : i32 to index
      %1555 = memref.load %arg2[%1554] : memref<512xi32, #tpu.memory_space<smem>>
      %1556 = arith.index_cast %1555 : i32 to index
      %c0_616 = arith.constant 0 : index
      %1557 = vector.load %arg3[%1556, %c0_616] : memref<1024x128xf32, #tpu.memory_space<vmem>>, vector<1x128xf32>
      %1558 = arith.addf %1552, %1557 : vector<1x128xf32>
      %c3_i32_617 = arith.constant 3 : i32
      %1559 = arith.addi %1542, %c3_i32_617 : i32
      %1560 = arith.index_cast %1559 : i32 to index
      %1561 = memref.load %arg2[%1560] : memref<512xi32, #tpu.memory_space<smem>>
      %1562 = arith.index_cast %1561 : i32 to index
      %c0_618 = arith.constant 0 : index
      %1563 = vector.load %arg3[%1562, %c0_618] : memref<1024x128xf32, #tpu.memory_space<vmem>>, vector<1x128xf32>
      %1564 = arith.addf %1558, %1563 : vector<1x128xf32>
      %c56_i32_619 = arith.constant 56 : i32
      %1565 = arith.addi %11, %c56_i32_619 : i32
      %c5_i32_620 = arith.constant 5 : i32
      %1566 = arith.addi %1565, %c5_i32_620 : i32
      %c4_i32_621 = arith.constant 4 : i32
      %1567 = arith.muli %1566, %c4_i32_621 : i32
      %1568 = arith.index_cast %1567 : i32 to index
      %1569 = memref.load %arg2[%1568] : memref<512xi32, #tpu.memory_space<smem>>
      %1570 = arith.index_cast %1569 : i32 to index
      %c0_622 = arith.constant 0 : index
      %1571 = vector.load %arg3[%1570, %c0_622] : memref<1024x128xf32, #tpu.memory_space<vmem>>, vector<1x128xf32>
      %c1_i32_623 = arith.constant 1 : i32
      %1572 = arith.addi %1567, %c1_i32_623 : i32
      %1573 = arith.index_cast %1572 : i32 to index
      %1574 = memref.load %arg2[%1573] : memref<512xi32, #tpu.memory_space<smem>>
      %1575 = arith.index_cast %1574 : i32 to index
      %c0_624 = arith.constant 0 : index
      %1576 = vector.load %arg3[%1575, %c0_624] : memref<1024x128xf32, #tpu.memory_space<vmem>>, vector<1x128xf32>
      %1577 = arith.addf %1571, %1576 : vector<1x128xf32>
      %c2_i32_625 = arith.constant 2 : i32
      %1578 = arith.addi %1567, %c2_i32_625 : i32
      %1579 = arith.index_cast %1578 : i32 to index
      %1580 = memref.load %arg2[%1579] : memref<512xi32, #tpu.memory_space<smem>>
      %1581 = arith.index_cast %1580 : i32 to index
      %c0_626 = arith.constant 0 : index
      %1582 = vector.load %arg3[%1581, %c0_626] : memref<1024x128xf32, #tpu.memory_space<vmem>>, vector<1x128xf32>
      %1583 = arith.addf %1577, %1582 : vector<1x128xf32>
      %c3_i32_627 = arith.constant 3 : i32
      %1584 = arith.addi %1567, %c3_i32_627 : i32
      %1585 = arith.index_cast %1584 : i32 to index
      %1586 = memref.load %arg2[%1585] : memref<512xi32, #tpu.memory_space<smem>>
      %1587 = arith.index_cast %1586 : i32 to index
      %c0_628 = arith.constant 0 : index
      %1588 = vector.load %arg3[%1587, %c0_628] : memref<1024x128xf32, #tpu.memory_space<vmem>>, vector<1x128xf32>
      %1589 = arith.addf %1583, %1588 : vector<1x128xf32>
      %c56_i32_629 = arith.constant 56 : i32
      %1590 = arith.addi %11, %c56_i32_629 : i32
      %c6_i32_630 = arith.constant 6 : i32
      %1591 = arith.addi %1590, %c6_i32_630 : i32
      %c4_i32_631 = arith.constant 4 : i32
      %1592 = arith.muli %1591, %c4_i32_631 : i32
      %1593 = arith.index_cast %1592 : i32 to index
      %1594 = memref.load %arg2[%1593] : memref<512xi32, #tpu.memory_space<smem>>
      %1595 = arith.index_cast %1594 : i32 to index
      %c0_632 = arith.constant 0 : index
      %1596 = vector.load %arg3[%1595, %c0_632] : memref<1024x128xf32, #tpu.memory_space<vmem>>, vector<1x128xf32>
      %c1_i32_633 = arith.constant 1 : i32
      %1597 = arith.addi %1592, %c1_i32_633 : i32
      %1598 = arith.index_cast %1597 : i32 to index
      %1599 = memref.load %arg2[%1598] : memref<512xi32, #tpu.memory_space<smem>>
      %1600 = arith.index_cast %1599 : i32 to index
      %c0_634 = arith.constant 0 : index
      %1601 = vector.load %arg3[%1600, %c0_634] : memref<1024x128xf32, #tpu.memory_space<vmem>>, vector<1x128xf32>
      %1602 = arith.addf %1596, %1601 : vector<1x128xf32>
      %c2_i32_635 = arith.constant 2 : i32
      %1603 = arith.addi %1592, %c2_i32_635 : i32
      %1604 = arith.index_cast %1603 : i32 to index
      %1605 = memref.load %arg2[%1604] : memref<512xi32, #tpu.memory_space<smem>>
      %1606 = arith.index_cast %1605 : i32 to index
      %c0_636 = arith.constant 0 : index
      %1607 = vector.load %arg3[%1606, %c0_636] : memref<1024x128xf32, #tpu.memory_space<vmem>>, vector<1x128xf32>
      %1608 = arith.addf %1602, %1607 : vector<1x128xf32>
      %c3_i32_637 = arith.constant 3 : i32
      %1609 = arith.addi %1592, %c3_i32_637 : i32
      %1610 = arith.index_cast %1609 : i32 to index
      %1611 = memref.load %arg2[%1610] : memref<512xi32, #tpu.memory_space<smem>>
      %1612 = arith.index_cast %1611 : i32 to index
      %c0_638 = arith.constant 0 : index
      %1613 = vector.load %arg3[%1612, %c0_638] : memref<1024x128xf32, #tpu.memory_space<vmem>>, vector<1x128xf32>
      %1614 = arith.addf %1608, %1613 : vector<1x128xf32>
      %c56_i32_639 = arith.constant 56 : i32
      %1615 = arith.addi %11, %c56_i32_639 : i32
      %c7_i32_640 = arith.constant 7 : i32
      %1616 = arith.addi %1615, %c7_i32_640 : i32
      %c4_i32_641 = arith.constant 4 : i32
      %1617 = arith.muli %1616, %c4_i32_641 : i32
      %1618 = arith.index_cast %1617 : i32 to index
      %1619 = memref.load %arg2[%1618] : memref<512xi32, #tpu.memory_space<smem>>
      %1620 = arith.index_cast %1619 : i32 to index
      %c0_642 = arith.constant 0 : index
      %1621 = vector.load %arg3[%1620, %c0_642] : memref<1024x128xf32, #tpu.memory_space<vmem>>, vector<1x128xf32>
      %c1_i32_643 = arith.constant 1 : i32
      %1622 = arith.addi %1617, %c1_i32_643 : i32
      %1623 = arith.index_cast %1622 : i32 to index
      %1624 = memref.load %arg2[%1623] : memref<512xi32, #tpu.memory_space<smem>>
      %1625 = arith.index_cast %1624 : i32 to index
      %c0_644 = arith.constant 0 : index
      %1626 = vector.load %arg3[%1625, %c0_644] : memref<1024x128xf32, #tpu.memory_space<vmem>>, vector<1x128xf32>
      %1627 = arith.addf %1621, %1626 : vector<1x128xf32>
      %c2_i32_645 = arith.constant 2 : i32
      %1628 = arith.addi %1617, %c2_i32_645 : i32
      %1629 = arith.index_cast %1628 : i32 to index
      %1630 = memref.load %arg2[%1629] : memref<512xi32, #tpu.memory_space<smem>>
      %1631 = arith.index_cast %1630 : i32 to index
      %c0_646 = arith.constant 0 : index
      %1632 = vector.load %arg3[%1631, %c0_646] : memref<1024x128xf32, #tpu.memory_space<vmem>>, vector<1x128xf32>
      %1633 = arith.addf %1627, %1632 : vector<1x128xf32>
      %c3_i32_647 = arith.constant 3 : i32
      %1634 = arith.addi %1617, %c3_i32_647 : i32
      %1635 = arith.index_cast %1634 : i32 to index
      %1636 = memref.load %arg2[%1635] : memref<512xi32, #tpu.memory_space<smem>>
      %1637 = arith.index_cast %1636 : i32 to index
      %c0_648 = arith.constant 0 : index
      %1638 = vector.load %arg3[%1637, %c0_648] : memref<1024x128xf32, #tpu.memory_space<vmem>>, vector<1x128xf32>
      %1639 = arith.addf %1633, %1638 : vector<1x128xf32>
      %1640 = tpu.concatenate %1464, %1489, %1514, %1539, %1564, %1589, %1614, %1639 in 0 : vector<1x128xf32>, vector<1x128xf32>, vector<1x128xf32>, vector<1x128xf32>, vector<1x128xf32>, vector<1x128xf32>, vector<1x128xf32>, vector<1x128xf32> -> vector<8x128xf32>
      %cst_649 = arith.constant 2.500000e-01 : f32
      %1641 = vector.broadcast %cst_649 : f32 to vector<8x128xf32>
      %1642 = arith.mulf %1640, %1641 : vector<8x128xf32>
      %c56 = arith.constant 56 : index
      %c0_650 = arith.constant 0 : index
      %1643 = vector.load %arg9[%c56, %c0_650] : memref<64x128xf32, #tpu.memory_space<vmem>>, vector<8x128xf32>
      tpu.vector_store %arg9[%c56, %c0_650], %1642 {strides = array<i32>} : memref<64x128xf32, #tpu.memory_space<vmem>>, vector<8x128xf32>,
      %c0_651 = arith.constant 0 : index
      %c0_652 = arith.constant 0 : index
      %1644 = vector.load %arg9[%c0_651, %c0_652] : memref<64x128xf32, #tpu.memory_space<vmem>>, vector<64x128xf32>
      %1645 = arith.truncf %1644 : vector<64x128xf32> to vector<64x128xbf16>
      %c0_653 = arith.constant 0 : index
      %c0_654 = arith.constant 0 : index
      %1646 = vector.load %arg4[%c0_653, %c0_654] : memref<128x128xbf16, #tpu.memory_space<vmem>>, vector<128x128xbf16>
      %cst_655 = arith.constant dense<0.000000e+00> : vector<64x128xf32>
      %1647 = tpu.matmul %1645, %1646, %cst_655 {dimension_numbers = #tpu.dot_dimension_numbers<[1], [0], [0], [1], [0, 0, 1, 1], [], []>} : vector<64x128xbf16>, vector<128x128xbf16>, vector<64x128xf32> -> vector<64x128xf32>
      %c0_656 = arith.constant 0 : index
      %c0_657 = arith.constant 0 : index
      %1648 = vector.load %arg5[%c0_656, %c0_657] : memref<1x128xf32, #tpu.memory_space<vmem>>, vector<1x128xf32>
      %1649 = vector.broadcast %1648 : vector<1x128xf32> to vector<64x128xf32>
      %1650 = arith.addf %1647, %1649 : vector<64x128xf32>
      %cst_658 = arith.constant 0.000000e+00 : f32
      %1651 = vector.broadcast %cst_658 : f32 to vector<64x128xf32>
      %1652 = arith.maximumf %1650, %1651 : vector<64x128xf32>
      %c0_659 = arith.constant 0 : index
      %c0_660 = arith.constant 0 : index
      %1653 = vector.load %arg10[%c0_659, %c0_660] : memref<64x128xf32, #tpu.memory_space<vmem>>, vector<64x128xf32>
      tpu.vector_store %arg10[%c0_659, %c0_660], %1652 {strides = array<i32>} : memref<64x128xf32, #tpu.memory_space<vmem>>, vector<64x128xf32>,
    } else {
    }
    %c0 = arith.constant 0 : index
    %c0_1 = arith.constant 0 : index
    %3 = vector.load %arg10[%c0, %c0_1] : memref<64x128xf32, #tpu.memory_space<vmem>>, vector<64x128xf32>
    %4 = arith.truncf %3 : vector<64x128xf32> to vector<64x128xbf16>
    %c0_2 = arith.constant 0 : index
    %c0_3 = arith.constant 0 : index
    %5 = vector.load %arg6[%c0_2, %c0_3] : memref<128x512xbf16, #tpu.memory_space<vmem>>, vector<128x512xbf16>
    %cst = arith.constant dense<0.000000e+00> : vector<64x512xf32>
    %6 = tpu.matmul %4, %5, %cst {dimension_numbers = #tpu.dot_dimension_numbers<[1], [0], [0], [1], [0, 0, 1, 1], [], []>} : vector<64x128xbf16>, vector<128x512xbf16>, vector<64x512xf32> -> vector<64x512xf32>
    %c0_4 = arith.constant 0 : index
    %c0_5 = arith.constant 0 : index
    %7 = vector.load %arg7[%c0_4, %c0_5] : memref<1x512xf32, #tpu.memory_space<vmem>>, vector<1x512xf32>
    %8 = vector.broadcast %7 : vector<1x512xf32> to vector<64x512xf32>
    %9 = arith.addf %6, %8 : vector<64x512xf32>
    %c0_6 = arith.constant 0 : index
    %c0_7 = arith.constant 0 : index
    %10 = vector.load %arg8[%c0_6, %c0_7] : memref<64x512xf32, #tpu.memory_space<vmem>>, vector<64x512xf32>
    tpu.vector_store %arg8[%c0_6, %c0_7], %9 {strides = array<i32>} : memref<64x512xf32, #tpu.memory_space<vmem>>, vector<64x512xf32>,
    return
  }
  func.func @transform_0(%arg0: i32, %arg1: i32, %arg2: memref<512xi32, #tpu.memory_space<smem>>) -> (i32, i32) {
    %c0_i32 = arith.constant 0 : i32
    %c0_i32_0 = arith.constant 0 : i32
    %c0_i32_1 = arith.constant 0 : i32
    return %c0_i32, %c0_i32_0 : i32, i32
  }
  func.func @transform_1(%arg0: i32, %arg1: i32, %arg2: memref<512xi32, #tpu.memory_space<smem>>) -> (i32, i32) {
    %c0_i32 = arith.constant 0 : i32
    %c0_i32_0 = arith.constant 0 : i32
    %c0_i32_1 = arith.constant 0 : i32
    return %c0_i32, %c0_i32_0 : i32, i32
  }
  func.func @transform_2(%arg0: i32, %arg1: i32, %arg2: memref<512xi32, #tpu.memory_space<smem>>) -> (i32, i32) {
    %c0_i32 = arith.constant 0 : i32
    %c0_i32_0 = arith.constant 0 : i32
    %c0_i32_1 = arith.constant 0 : i32
    return %c0_i32, %c0_i32_0 : i32, i32
  }
  func.func @transform_3(%arg0: i32, %arg1: i32, %arg2: memref<512xi32, #tpu.memory_space<smem>>) -> (i32, i32) {
    %c0_i32 = arith.constant 0 : i32
    %c0_i32_0 = arith.constant 0 : i32
    return %c0_i32, %arg1 : i32, i32
  }
  func.func @transform_4(%arg0: i32, %arg1: i32, %arg2: memref<512xi32, #tpu.memory_space<smem>>) -> (i32, i32) {
    %c0_i32 = arith.constant 0 : i32
    %c0_i32_0 = arith.constant 0 : i32
    return %c0_i32, %arg1 : i32, i32
  }
  func.func @transform_5(%arg0: i32, %arg1: i32, %arg2: memref<512xi32, #tpu.memory_space<smem>>) -> (i32, i32) {
    %c0_i32 = arith.constant 0 : i32
    return %arg0, %arg1 : i32, i32
  }
}

</mosaic_0001>

<llo_original>
// kernel: tpu_custom_call.1
$region0: #{tpu_custom_call.1}
  #allocation0 [shape = 'u32[]', space=smem, size = 0x4, offset = 0x4, fixed_abs, tag = 'smem constant byte address 0x4 - core index']
  #allocation1 [shape = 'u32[144,128]{1,0:T(1,128)}', space=vmem, size = 0x12000, scoped, tag = 'internal scratch']
  #allocation2 [shape = 'f32[64,128]{1,0:T(8,128)}', space=vmem, size = 0x8000, scoped, tag = 'scratch operand']
  #allocation3 [shape = 'f32[64,128]{1,0:T(8,128)}', space=vmem, size = 0x8000, scoped, tag = 'scratch operand']
  #allocation4 [shape = 's32[1]{0}', space=sflag, size = 0x4, scoped, tag = 'scoped memory for tpu_custom_call.1']
  #allocation5 [shape = 'u8[2048]{0}', space=smem, size = 0x800, scoped, tag = 'prefetched SMEM operand 0']
  %s0 = inlined_call_operand.hbm [shape: s32[512], index: 0, kind: input, shape index: {}]
  %s1 = inlined_call_operand.hbm [shape: f32[1024,128], index: 1, kind: input, shape index: {}]
  %s2 = inlined_call_operand.hbm [shape: bf16[128,128], index: 2, kind: input, shape index: {}]
  %s3 = inlined_call_operand.vmem [shape: f32[1,128], index: 3, kind: input, shape index: {}]
  %s4 = inlined_call_operand.hbm [shape: bf16[128,1024], index: 4, kind: input, shape index: {}]
  %s5 = inlined_call_operand.vmem [shape: f32[1,1024], index: 5, kind: input, shape index: {}]
  %s6 = inlined_call_operand.hbm [shape: f32[128,1024], index: 6, kind: output, shape index: {}]
  %s7 = sld [smem:[#allocation0]]
  $region69: #{tpu_custom_call.1} parent=0
    _
  %s9 = ssub.s32 1, %s7
  %s10 = scalar_select 0, %s9, %s7
  %12 = dma.hbm_to_smem %s0, 64, [#allocation5], [#allocation4]
  %13 = dma.done [#allocation4], 64
  %14 = sfence
  $region1: #{tpu_custom_call.1} parent=0
    #allocation6 [shape = 'u8[524288]{0}', space=vmem, size = 0x80000, scoped, tag = 'input window, operand 1, single buffered']
    #allocation7 [shape = 's32[2]{0}', space=sflag, size = 0x8, scoped, tag = 'scoped memory for tpu_custom_call.1']
    #allocation8 [shape = 's32[2]{0}', space=sflag, size = 0x8, scoped, tag = 'scoped memory for tpu_custom_call.1']
    #allocation9 [shape = 'u8[32768]{0}', space=vmem, size = 0x8000, scoped, tag = 'input window, operand 2, single buffered']
    #allocation10 [shape = 's32[1]{0}', space=sflag, size = 0x4, scoped, tag = 'scoped memory for tpu_custom_call.1']
    #allocation11 [shape = 'u8[262144]{0}', space=vmem, size = 0x40000, scoped, tag = 'input window, operand 4']
    #allocation12 [shape = 'u8[262144]{0}', space=vmem, size = 0x40000, scoped, tag = 'output window, operand 0']
    %15 = vsyncpa [#allocation7], 0
    %16 = vsyncpa [#allocation10], 0
    %17 = vsyncpa [#allocation8], 0
    %s18 = scalar_lea.sflag [#allocation8], 1
    %19 = vsyncpa %s18, 0
    loop: start=0, step=1, limit=6
    $region2: #{tpu_custom_call.1} parent=1 // loop_pre_header
      _
    $region3: #{tpu_custom_call.1} parent=1 // loop_header
      %s21 = sphi 0, %s25
      %p22 = scmp.ge.s32.totalorder %s21, 6
      %s28 = sphi 0, %s40
      %s29 = sphi 0, %s36
      %s30 = sphi 0, %s28
      %s31 = sphi 0, %s29
      %s32 = sphi 0, %s30
      %s33 = sphi 0, %s31
      %s41 = sphi 0, %s41
      %s43 = sphi 0, %s41
      %s44 = sphi 0, %s43
      %s58 = sphi 0, %s44
      %s62 = sphi 0, %s62
      %s64 = sphi 0, %s62
      %s65 = sphi 0, %s64
      %s79 = sphi 0, %s65
      %s83 = sphi 0, %s83
      %s85 = sphi 0, %s83
      %s86 = sphi 0, %s85
      %s100 = sphi 0, %s86
      %s106 = sphi 0, %s108
      %s109 = sphi 0, %s106
      %s110 = sphi 0, %s109
      %s126 = sphi 0, %s110
      %s132 = sphi 0, %s134
      %s135 = sphi 0, %s132
      %s136 = sphi 0, %s135
      %s152 = sphi 0, %s136
      %s160 = sphi 0, %s162
      %s163 = sphi 0, %s160
      %s164 = sphi 0, %s163
      %s180 = sphi 0, %s164
    $region4: #{tpu_custom_call.1} parent=1 // loop_header_branch
      %24 = sbr.rel (%p22) target = $region8
    $region5: #{tpu_custom_call.1} parent=1 // loop_body
      %s26 = ssub.s32 %s21, 1
      %s27 = ssub.s32 %s21, 2
      %s34 = sadd.s32 1, %s29
      %p35 = scmp.ge.s32.totalorder %s34, 2
      %s36 = scalar_select %p35, 0, %s34
      %s37 = sadd.s32 1, %s28
      %s38 = scalar_select %p35, %s37, %s28
      %p39 = scmp.ge.s32.totalorder %s38, 2
      %s40 = scalar_select %p39, 0, %s38
      %s42 = sadd.s32 %s41, 1
      %p45 = scmp.eq.s32.totalorder %s21, 3
      %p46 = scmp.ne.s32.totalorder %s41, %s43
      %p47 = scmp.eq.s32.totalorder %s21, 0
      %p48 = por %p46, %p47
      %p49 = scmp.ne.s32.totalorder %s41, %s43
      %p50 = scmp.eq.s32.totalorder %s26, 3
      %p51 = por %p49, %p50
      %p52 = scmp.ne.s32.totalorder %s43, %s44
      %p53 = scmp.eq.s32.totalorder %s26, 0
      %p54 = por %p52, %p53
      %p55 = scmp.ne.s32.totalorder %s43, %s44
      %p56 = scmp.eq.s32.totalorder %s27, 3
      %p57 = por %p55, %p56
      %p59 = scmp.ne.s32.totalorder %s44, %s58
      %p60 = scmp.eq.s32.totalorder %s27, 0
      %p61 = por %p59, %p60
      %s63 = sadd.s32 %s62, 1
      %p66 = scmp.eq.s32.totalorder %s21, 3
      %p67 = scmp.ne.s32.totalorder %s62, %s64
      %p68 = scmp.eq.s32.totalorder %s21, 0
      %p69 = por %p67, %p68
      %p70 = scmp.ne.s32.totalorder %s62, %s64
      %p71 = scmp.eq.s32.totalorder %s26, 3
      %p72 = por %p70, %p71
      %p73 = scmp.ne.s32.totalorder %s64, %s65
      %p74 = scmp.eq.s32.totalorder %s26, 0
      %p75 = por %p73, %p74
      %p76 = scmp.ne.s32.totalorder %s64, %s65
      %p77 = scmp.eq.s32.totalorder %s27, 3
      %p78 = por %p76, %p77
      %p80 = scmp.ne.s32.totalorder %s65, %s79
      %p81 = scmp.eq.s32.totalorder %s27, 0
      %p82 = por %p80, %p81
      %s84 = sadd.s32 %s83, 1
      %p87 = scmp.eq.s32.totalorder %s21, 3
      %p88 = scmp.ne.s32.totalorder %s83, %s85
      %p89 = scmp.eq.s32.totalorder %s21, 0
      %p90 = por %p88, %p89
      %p91 = scmp.ne.s32.totalorder %s83, %s85
      %p92 = scmp.eq.s32.totalorder %s26, 3
      %p93 = por %p91, %p92
      %p94 = scmp.ne.s32.totalorder %s85, %s86
      %p95 = scmp.eq.s32.totalorder %s26, 0
      %p96 = por %p94, %p95
      %p97 = scmp.ne.s32.totalorder %s85, %s86
      %p98 = scmp.eq.s32.totalorder %s27, 3
      %p99 = por %p97, %p98
      %p101 = scmp.ne.s32.totalorder %s86, %s100
      %p102 = scmp.eq.s32.totalorder %s27, 0
      %p103 = por %p101, %p102
      %s104 = ssub.s32 %s29, %s36
      %p105 = scmp.eq.s32.totalorder %s104, 0
      %s107 = sadd.s32 %s106, 1
      %s108 = scalar_select %p105, %s106, %s107
      %p111 = pneg %p105
      %p112 = scmp.eq.s32.totalorder %s21, 3
      %p113 = por %p111, %p112
      %p114 = scmp.ne.s32.totalorder %s106, %s109
      %p115 = scmp.eq.s32.totalorder %s21, 0
      %p116 = por %p114, %p115
      %p117 = scmp.ne.s32.totalorder %s106, %s109
      %p118 = scmp.eq.s32.totalorder %s26, 3
      %p119 = por %p117, %p118
      %p120 = scmp.ne.s32.totalorder %s109, %s110
      %p121 = scmp.eq.s32.totalorder %s26, 0
      %p122 = por %p120, %p121
      %p123 = scmp.ne.s32.totalorder %s109, %s110
      %p124 = scmp.eq.s32.totalorder %s27, 3
      %p125 = por %p123, %p124
      %p127 = scmp.ne.s32.totalorder %s110, %s126
      %p128 = scmp.eq.s32.totalorder %s27, 0
      %p129 = por %p127, %p128
      %s130 = ssub.s32 %s29, %s36
      %p131 = scmp.eq.s32.totalorder %s130, 0
      %s133 = sadd.s32 %s132, 1
      %s134 = scalar_select %p131, %s132, %s133
      %p137 = pneg %p131
      %p138 = scmp.eq.s32.totalorder %s21, 3
      %p139 = por %p137, %p138
      %p140 = scmp.ne.s32.totalorder %s132, %s135
      %p141 = scmp.eq.s32.totalorder %s21, 0
      %p142 = por %p140, %p141
      %p143 = scmp.ne.s32.totalorder %s132, %s135
      %p144 = scmp.eq.s32.totalorder %s26, 3
      %p145 = por %p143, %p144
      %p146 = scmp.ne.s32.totalorder %s135, %s136
      %p147 = scmp.eq.s32.totalorder %s26, 0
      %p148 = por %p146, %p147
      %p149 = scmp.ne.s32.totalorder %s135, %s136
      %p150 = scmp.eq.s32.totalorder %s27, 3
      %p151 = por %p149, %p150
      %p153 = scmp.ne.s32.totalorder %s136, %s152
      %p154 = scmp.eq.s32.totalorder %s27, 0
      %p155 = por %p153, %p154
      %s156 = ssub.s32 %s28, %s40
      %s157 = ssub.s32 %s29, %s36
      %s158 = sor.u32 %s156, %s157
      %p159 = scmp.eq.s32.totalorder %s158, 0
      %s161 = sadd.s32 %s160, 1
      %s162 = scalar_select %p159, %s160, %s161
      %p165 = pneg %p159
      %p166 = scmp.eq.s32.totalorder %s21, 3
      %p167 = por %p165, %p166
      %p168 = scmp.ne.s32.totalorder %s160, %s163
      %p169 = scmp.eq.s32.totalorder %s21, 0
      %p170 = por %p168, %p169
      %p171 = scmp.ne.s32.totalorder %s160, %s163
      %p172 = scmp.eq.s32.totalorder %s26, 3
      %p173 = por %p171, %p172
      %p174 = scmp.ne.s32.totalorder %s163, %s164
      %p175 = scmp.eq.s32.totalorder %s26, 0
      %p176 = por %p174, %p175
      %p177 = scmp.ne.s32.totalorder %s163, %s164
      %p178 = scmp.eq.s32.totalorder %s27, 3
      %p179 = por %p177, %p178
      %p181 = scmp.ne.s32.totalorder %s164, %s180
      %p182 = scmp.eq.s32.totalorder %s27, 0
      %p183 = por %p181, %p182
      %p184 = scmp.le.s32.totalorder 1, %s21
      %p185 = scmp.lt.s32.totalorder %s21, 5
      %p186 = pnand %p184, %p185
      %p187 = pneg %p186
      // Predicated region
      $region9: #{tpu_custom_call.1} parent=5 // pred_check
        _
      $region10: #{tpu_custom_call.1} parent=5 // pred_check_branch
        %189 = sbr.rel (%p186) target = $region12
      $region11: #{tpu_custom_call.1} parent=5 // pred_region
        %s190 = ssub.s32 %s21, 1
        // Predicated region
        $region13: #{tpu_custom_call.1} parent=11 // pred_check
          %p191 = pneg %p54
        $region14: #{tpu_custom_call.1} parent=11 // pred_check_branch
          %193 = sbr.rel (%p191) target = $region16
        $region15: #{tpu_custom_call.1} parent=11 // pred_region
          %s195 = ssub.s32 16384, 16384
          %196 = vsyncadd [#allocation7], %s195
          %s197 = sshll.u32 [#allocation6], 4
          %s198 = int_to_ptr.vmem [resolvable:$true] %s197
          %203 = dma.hbm_to_vmem [thread:$0]  %s1, 16384, %s198, [#allocation7], 128, 128, 8
        $region16: #{tpu_custom_call.1} parent=11 // pred_fallthru
          _
        // Predicated region
        $region17: #{tpu_custom_call.1} parent=11 // pred_check
          %p204 = pneg %p75
        $region18: #{tpu_custom_call.1} parent=11 // pred_check_branch
          %206 = sbr.rel (%p204) target = $region20
        $region19: #{tpu_custom_call.1} parent=11 // pred_region
          %s208 = ssub.s32 1024, 1024
          %209 = vsyncadd [#allocation10], %s208
          %s210 = sshll.u32 [#allocation9], 4
          %s211 = int_to_ptr.vmem [resolvable:$true] %s210
          %216 = dma.hbm_to_vmem [thread:$0]  %s2, 1024, %s211, [#allocation10], 64, 64, 4
        $region20: #{tpu_custom_call.1} parent=11 // pred_fallthru
          _
        // Predicated region
        $region21: #{tpu_custom_call.1} parent=11 // pred_check
          %p217 = pneg %p96
        $region22: #{tpu_custom_call.1} parent=11 // pred_check_branch
          %219 = sbr.rel (%p217) target = $region24
        $region23: #{tpu_custom_call.1} parent=11 // pred_region
          _
        $region24: #{tpu_custom_call.1} parent=11 // pred_fallthru
          _
      $region12: #{tpu_custom_call.1} parent=5 // pred_fallthru
        _
      %p220 = scmp.lt.s32.totalorder %s21, 4
      // Predicated region
      $region25: #{tpu_custom_call.1} parent=5 // pred_check
        %p221 = pneg %p220
      $region26: #{tpu_custom_call.1} parent=5 // pred_check_branch
        %223 = sbr.rel (%p221) target = $region28
      $region27: #{tpu_custom_call.1} parent=5 // pred_region
        // Predicated region
        $region29: #{tpu_custom_call.1} parent=27 // pred_check
          %p224 = pneg %p116
        $region30: #{tpu_custom_call.1} parent=27 // pred_check_branch
          %226 = sbr.rel (%p224) target = $region32
        $region31: #{tpu_custom_call.1} parent=27 // pred_region
          %s227 = sand.u32 %s21, 1
          %s228 = scalar_lea.sflag [#allocation7], %s227
          %s229 = sand.u32 %s106, 1
          %s230 = smul.addr %s229, 256
          %s231 = scalar_lea.vmem [#allocation11], %s230
          %s232 = smul.u32 4, %s29
          %s234 = ssub.s32 4096, 4096
          %235 = vsyncadd %s228, %s234
          %s236 = smul.addr %s232, 64
          %s237 = scalar_lea.hbm %s4, %s236
          %s238 = sshll.u32 %s231, 4
          %s239 = int_to_ptr.vmem [resolvable:$true] %s238
          %244 = dma.hbm_to_vmem [thread:$0]  %s237, 4096, %s239, %s228, 512, 256, 16
        $region32: #{tpu_custom_call.1} parent=27 // pred_fallthru
          _
        // Predicated region
        $region33: #{tpu_custom_call.1} parent=27 // pred_check
          %p245 = pneg %p142
        $region34: #{tpu_custom_call.1} parent=27 // pred_check_branch
          %247 = sbr.rel (%p245) target = $region36
        $region35: #{tpu_custom_call.1} parent=27 // pred_region
          %s248 = smul.u32 4, %s29
          %p249 = scmp.lt.s32.totalorder %s248, 7
          %s250 = scalar_select %p249, %s248, 7
          %s251 = scalar_lea.vmem %s5, %s250
          %s252 = smul.u32 4, %s29
        $region36: #{tpu_custom_call.1} parent=27 // pred_fallthru
          _
      $region28: #{tpu_custom_call.1} parent=5 // pred_fallthru
        _
      %p253 = scmp.le.s32.totalorder 1, %s21
      %p254 = scmp.lt.s32.totalorder %s21, 5
      %p255 = pnand %p253, %p254
      %p256 = pneg %p255
      // Predicated region
      $region37: #{tpu_custom_call.1} parent=5 // pred_check
        _
      $region38: #{tpu_custom_call.1} parent=5 // pred_check_branch
        %258 = sbr.rel (%p255) target = $region40
      $region39: #{tpu_custom_call.1} parent=5 // pred_region
        %s259 = ssub.s32 %s21, 1
        // Predicated region
        $region41: #{tpu_custom_call.1} parent=39 // pred_check
          %p260 = pneg %p54
        $region42: #{tpu_custom_call.1} parent=39 // pred_check_branch
          %262 = sbr.rel (%p260) target = $region44
        $region43: #{tpu_custom_call.1} parent=39 // pred_region
          %263 = dma.done [#allocation7], 16384
        $region44: #{tpu_custom_call.1} parent=39 // pred_fallthru
          _
        // Predicated region
        $region45: #{tpu_custom_call.1} parent=39 // pred_check
          %p264 = pneg %p75
        $region46: #{tpu_custom_call.1} parent=39 // pred_check_branch
          %266 = sbr.rel (%p264) target = $region48
        $region47: #{tpu_custom_call.1} parent=39 // pred_region
          %267 = dma.done [#allocation10], 1024
        $region48: #{tpu_custom_call.1} parent=39 // pred_fallthru
          _
        %s268 = sand.u32 %s26, 1
        %s269 = scalar_lea.sflag [#allocation7], %s268
        %s270 = sand.u32 %s109, 1
        %s271 = smul.addr %s270, 256
        %s272 = scalar_lea.vmem [#allocation11], %s271
        // Predicated region
        $region49: #{tpu_custom_call.1} parent=39 // pred_check
          %p273 = pneg %p122
        $region50: #{tpu_custom_call.1} parent=39 // pred_check_branch
          %275 = sbr.rel (%p273) target = $region52
        $region51: #{tpu_custom_call.1} parent=39 // pred_region
          %276 = dma.done %s269, 4096
        $region52: #{tpu_custom_call.1} parent=39 // pred_fallthru
          _
        %p277 = pneg %p54
        %p278 = pneg %p51
        %p279 = pneg %p75
        %p280 = pneg %p72
        %p281 = pneg %p96
        %p282 = pneg %p93
        %s283 = sand.u32 %s26, 1
        %s284 = scalar_lea.sflag [#allocation7], %s283
        %s285 = sand.u32 %s109, 1
        %s286 = smul.addr %s285, 256
        %s287 = scalar_lea.vmem [#allocation11], %s286
        %p288 = pneg %p122
        %p289 = pneg %p119
        %s290 = smul.u32 4, %s31
        %p291 = scmp.lt.s32.totalorder %s290, 7
        %s292 = scalar_select %p291, %s290, 7
        %s293 = scalar_lea.vmem %s5, %s292
        %p294 = pneg %p148
        %p295 = pneg %p145
        %p296 = pneg %p176
        %p297 = pneg %p173
        %s298 = sand.u32 %s163, 1
        %s299 = scalar_lea.sflag [#allocation8], %s298
        %s300 = sand.u32 %s163, 1
        %s301 = smul.addr %s300, 256
        %s302 = scalar_lea.vmem [#allocation12], %s301
        %s303 = smul.u32 4, %s31
        %s304 = smul.u32 4, %s31
        %p305 = scmp.lt.s32.totalorder %s304, 7
        %s306 = scalar_select %p305, %s304, 7
        %s307 = scalar_lea.vmem %s5, %s306
        %s308 = smul.u32 4, %s31
        %s309 = smul.u32 8, %s30
        %s310 = smul.u32 4, %s31
        %p312 = scmp.eq.s32.totalorder %s31, 0
        // Predicated region
        $region53: #{tpu_custom_call.1} parent=39 // pred_check
          %p313 = pneg %p312
        $region54: #{tpu_custom_call.1} parent=39 // pred_check_branch
          %315 = sbr.rel (%p313) target = $region56
        $region55: #{tpu_custom_call.1} parent=39 // pred_region
          %s316 = smul.u32 %s30, 64
          %s317 = smul.u32 %s30, 256
          %s318 = sld [smem:[#allocation5 + %s317]]
          %s319 = scalar_lea.vmem [#allocation6], %s318
          %v320 = vld [vmem:[%s319] sm:$0x1]
          %s321 = sadd.s32 %s317, 1
          %s322 = sld [smem:[#allocation5 + %s321]]
          %s323 = scalar_lea.vmem [#allocation6], %s322
          %v324 = vld [vmem:[%s323] sm:$0x1]
          %v325 = vadd.f32 %v320, %v324
          %s326 = sadd.s32 %s317, 2
          %s327 = sld [smem:[#allocation5 + %s326]]
          %s328 = scalar_lea.vmem [#allocation6], %s327
          %v329 = vld [vmem:[%s328] sm:$0x1]
          %v330 = vadd.f32 %v325, %v329
          %s331 = sadd.s32 %s317, 3
          %s332 = sld [smem:[#allocation5 + %s331]]
          %s333 = scalar_lea.vmem [#allocation6], %s332
          %v334 = vld [vmem:[%s333] sm:$0x1]
          %v335 = vadd.f32 %v330, %v334
          %s336 = sadd.s32 %s316, 1
          %s337 = smul.u32 %s336, 4
          %s338 = sld [smem:[#allocation5 + %s337]]
          %s339 = scalar_lea.vmem [#allocation6], %s338
          %v340 = vld [vmem:[%s339] sm:$0x1]
          %s341 = sadd.s32 %s337, 1
          %s342 = sld [smem:[#allocation5 + %s341]]
          %s343 = scalar_lea.vmem [#allocation6], %s342
          %v344 = vld [vmem:[%s343] sm:$0x1]
          %v345 = vadd.f32 %v340, %v344
          %s346 = sadd.s32 %s337, 2
          %s347 = sld [smem:[#allocation5 + %s346]]
          %s348 = scalar_lea.vmem [#allocation6], %s347
          %v349 = vld [vmem:[%s348] sm:$0x1]
          %v350 = vadd.f32 %v345, %v349
          %s351 = sadd.s32 %s337, 3
          %s352 = sld [smem:[#allocation5 + %s351]]
          %s353 = scalar_lea.vmem [#allocation6], %s352
          %v354 = vld [vmem:[%s353] sm:$0x1]
          %v355 = vadd.f32 %v350, %v354
          %s356 = sadd.s32 %s316, 2
          %s357 = smul.u32 %s356, 4
          %s358 = sld [smem:[#allocation5 + %s357]]
          %s359 = scalar_lea.vmem [#allocation6], %s358
          %v360 = vld [vmem:[%s359] sm:$0x1]
          %s361 = sadd.s32 %s357, 1
          %s362 = sld [smem:[#allocation5 + %s361]]
          %s363 = scalar_lea.vmem [#allocation6], %s362
          %v364 = vld [vmem:[%s363] sm:$0x1]
          %v365 = vadd.f32 %v360, %v364
          %s366 = sadd.s32 %s357, 2
          %s367 = sld [smem:[#allocation5 + %s366]]
          %s368 = scalar_lea.vmem [#allocation6], %s367
          %v369 = vld [vmem:[%s368] sm:$0x1]
          %v370 = vadd.f32 %v365, %v369
          %s371 = sadd.s32 %s357, 3
          %s372 = sld [smem:[#allocation5 + %s371]]
          %s373 = scalar_lea.vmem [#allocation6], %s372
          %v374 = vld [vmem:[%s373] sm:$0x1]
          %v375 = vadd.f32 %v370, %v374
          %s376 = sadd.s32 %s316, 3
          %s377 = smul.u32 %s376, 4
          %s378 = sld [smem:[#allocation5 + %s377]]
          %s379 = scalar_lea.vmem [#allocation6], %s378
          %v380 = vld [vmem:[%s379] sm:$0x1]
          %s381 = sadd.s32 %s377, 1
          %s382 = sld [smem:[#allocation5 + %s381]]
          %s383 = scalar_lea.vmem [#allocation6], %s382
          %v384 = vld [vmem:[%s383] sm:$0x1]
          %v385 = vadd.f32 %v380, %v384
          %s386 = sadd.s32 %s377, 2
          %s387 = sld [smem:[#allocation5 + %s386]]
          %s388 = scalar_lea.vmem [#allocation6], %s387
          %v389 = vld [vmem:[%s388] sm:$0x1]
          %v390 = vadd.f32 %v385, %v389
          %s391 = sadd.s32 %s377, 3
          %s392 = sld [smem:[#allocation5 + %s391]]
          %s393 = scalar_lea.vmem [#allocation6], %s392
          %v394 = vld [vmem:[%s393] sm:$0x1]
          %v395 = vadd.f32 %v390, %v394
          %s396 = sadd.s32 %s316, 4
          %s397 = smul.u32 %s396, 4
          %s398 = sld [smem:[#allocation5 + %s397]]
          %s399 = scalar_lea.vmem [#allocation6], %s398
          %v400 = vld [vmem:[%s399] sm:$0x1]
          %s401 = sadd.s32 %s397, 1
          %s402 = sld [smem:[#allocation5 + %s401]]
          %s403 = scalar_lea.vmem [#allocation6], %s402
          %v404 = vld [vmem:[%s403] sm:$0x1]
          %v405 = vadd.f32 %v400, %v404
          %s406 = sadd.s32 %s397, 2
          %s407 = sld [smem:[#allocation5 + %s406]]
          %s408 = scalar_lea.vmem [#allocation6], %s407
          %v409 = vld [vmem:[%s408] sm:$0x1]
          %v410 = vadd.f32 %v405, %v409
          %s411 = sadd.s32 %s397, 3
          %s412 = sld [smem:[#allocation5 + %s411]]
          %s413 = scalar_lea.vmem [#allocation6], %s412
          %v414 = vld [vmem:[%s413] sm:$0x1]
          %v415 = vadd.f32 %v410, %v414
          %s416 = sadd.s32 %s316, 5
          %s417 = smul.u32 %s416, 4
          %s418 = sld [smem:[#allocation5 + %s417]]
          %s419 = scalar_lea.vmem [#allocation6], %s418
          %v420 = vld [vmem:[%s419] sm:$0x1]
          %s421 = sadd.s32 %s417, 1
          %s422 = sld [smem:[#allocation5 + %s421]]
          %s423 = scalar_lea.vmem [#allocation6], %s422
          %v424 = vld [vmem:[%s423] sm:$0x1]
          %v425 = vadd.f32 %v420, %v424
          %s426 = sadd.s32 %s417, 2
          %s427 = sld [smem:[#allocation5 + %s426]]
          %s428 = scalar_lea.vmem [#allocation6], %s427
          %v429 = vld [vmem:[%s428] sm:$0x1]
          %v430 = vadd.f32 %v425, %v429
          %s431 = sadd.s32 %s417, 3
          %s432 = sld [smem:[#allocation5 + %s431]]
          %s433 = scalar_lea.vmem [#allocation6], %s432
          %v434 = vld [vmem:[%s433] sm:$0x1]
          %v435 = vadd.f32 %v430, %v434
          %s436 = sadd.s32 %s316, 6
          %s437 = smul.u32 %s436, 4
          %s438 = sld [smem:[#allocation5 + %s437]]
          %s439 = scalar_lea.vmem [#allocation6], %s438
          %v440 = vld [vmem:[%s439] sm:$0x1]
          %s441 = sadd.s32 %s437, 1
          %s442 = sld [smem:[#allocation5 + %s441]]
          %s443 = scalar_lea.vmem [#allocation6], %s442
          %v444 = vld [vmem:[%s443] sm:$0x1]
          %v445 = vadd.f32 %v440, %v444
          %s446 = sadd.s32 %s437, 2
          %s447 = sld [smem:[#allocation5 + %s446]]
          %s448 = scalar_lea.vmem [#allocation6], %s447
          %v449 = vld [vmem:[%s448] sm:$0x1]
          %v450 = vadd.f32 %v445, %v449
          %s451 = sadd.s32 %s437, 3
          %s452 = sld [smem:[#allocation5 + %s451]]
          %s453 = scalar_lea.vmem [#allocation6], %s452
          %v454 = vld [vmem:[%s453] sm:$0x1]
          %v455 = vadd.f32 %v450, %v454
          %s456 = sadd.s32 %s316, 7
          %s457 = smul.u32 %s456, 4
          %s458 = sld [smem:[#allocation5 + %s457]]
          %s459 = scalar_lea.vmem [#allocation6], %s458
          %v460 = vld [vmem:[%s459] sm:$0x1]
          %s461 = sadd.s32 %s457, 1
          %s462 = sld [smem:[#allocation5 + %s461]]
          %s463 = scalar_lea.vmem [#allocation6], %s462
          %v464 = vld [vmem:[%s463] sm:$0x1]
          %v465 = vadd.f32 %v460, %v464
          %s466 = sadd.s32 %s457, 2
          %s467 = sld [smem:[#allocation5 + %s466]]
          %s468 = scalar_lea.vmem [#allocation6], %s467
          %v469 = vld [vmem:[%s468] sm:$0x1]
          %v470 = vadd.f32 %v465, %v469
          %s471 = sadd.s32 %s457, 3
          %s472 = sld [smem:[#allocation5 + %s471]]
          %s473 = scalar_lea.vmem [#allocation6], %s472
          %v474 = vld [vmem:[%s473] sm:$0x1]
          %v475 = vadd.f32 %v470, %v474
          %v477 = vrot.slane %v355, 7
          %v480 = vrot.slane %v375, 6
          %v483 = vrot.slane %v395, 5
          %v486 = vrot.slane %v415, 4
          %v489 = vrot.slane %v435, 3
          %v492 = vrot.slane %v455, 2
          %v495 = vrot.slane %v475, 1
          %vm497 = vcmask 1040384
          %v498 = vsel %vm497, %v335, %v477
          %vm499 = vcmask 1041408
          %v500 = vsel %vm499, %v498, %v480
          %vm501 = vcmask 1042432
          %v502 = vsel %vm501, %v500, %v483
          %vm503 = vcmask 1043456
          %v504 = vsel %vm503, %v502, %v486
          %vm505 = vcmask 1044480
          %v506 = vsel %vm505, %v504, %v489
          %vm507 = vcmask 1045504
          %v508 = vsel %vm507, %v506, %v492
          %vm509 = vcmask 1046528
          %v510 = vsel %vm509, %v508, %v495
          %v511 = vmul.f32 %v510, 0.25
          %512 = vst [vmem:[#allocation2] sm:$0xff] %v511
          %s513 = sadd.s32 %s316, 8
          %s514 = smul.u32 %s513, 4
          %s515 = sld [smem:[#allocation5 + %s514]]
          %s516 = scalar_lea.vmem [#allocation6], %s515
          %v517 = vld [vmem:[%s516] sm:$0x1]
          %s518 = sadd.s32 %s514, 1
          %s519 = sld [smem:[#allocation5 + %s518]]
          %s520 = scalar_lea.vmem [#allocation6], %s519
          %v521 = vld [vmem:[%s520] sm:$0x1]
          %v522 = vadd.f32 %v517, %v521
          %s523 = sadd.s32 %s514, 2
          %s524 = sld [smem:[#allocation5 + %s523]]
          %s525 = scalar_lea.vmem [#allocation6], %s524
          %v526 = vld [vmem:[%s525] sm:$0x1]
          %v527 = vadd.f32 %v522, %v526
          %s528 = sadd.s32 %s514, 3
          %s529 = sld [smem:[#allocation5 + %s528]]
          %s530 = scalar_lea.vmem [#allocation6], %s529
          %v531 = vld [vmem:[%s530] sm:$0x1]
          %v532 = vadd.f32 %v527, %v531
          %s533 = sadd.s32 %s316, 9
          %s534 = smul.u32 %s533, 4
          %s535 = sld [smem:[#allocation5 + %s534]]
          %s536 = scalar_lea.vmem [#allocation6], %s535
          %v537 = vld [vmem:[%s536] sm:$0x1]
          %s538 = sadd.s32 %s534, 1
          %s539 = sld [smem:[#allocation5 + %s538]]
          %s540 = scalar_lea.vmem [#allocation6], %s539
          %v541 = vld [vmem:[%s540] sm:$0x1]
          %v542 = vadd.f32 %v537, %v541
          %s543 = sadd.s32 %s534, 2
          %s544 = sld [smem:[#allocation5 + %s543]]
          %s545 = scalar_lea.vmem [#allocation6], %s544
          %v546 = vld [vmem:[%s545] sm:$0x1]
          %v547 = vadd.f32 %v542, %v546
          %s548 = sadd.s32 %s534, 3
          %s549 = sld [smem:[#allocation5 + %s548]]
          %s550 = scalar_lea.vmem [#allocation6], %s549
          %v551 = vld [vmem:[%s550] sm:$0x1]
          %v552 = vadd.f32 %v547, %v551
          %s553 = sadd.s32 %s316, 10
          %s554 = smul.u32 %s553, 4
          %s555 = sld [smem:[#allocation5 + %s554]]
          %s556 = scalar_lea.vmem [#allocation6], %s555
          %v557 = vld [vmem:[%s556] sm:$0x1]
          %s558 = sadd.s32 %s554, 1
          %s559 = sld [smem:[#allocation5 + %s558]]
          %s560 = scalar_lea.vmem [#allocation6], %s559
          %v561 = vld [vmem:[%s560] sm:$0x1]
          %v562 = vadd.f32 %v557, %v561
          %s563 = sadd.s32 %s554, 2
          %s564 = sld [smem:[#allocation5 + %s563]]
          %s565 = scalar_lea.vmem [#allocation6], %s564
          %v566 = vld [vmem:[%s565] sm:$0x1]
          %v567 = vadd.f32 %v562, %v566
          %s568 = sadd.s32 %s554, 3
          %s569 = sld [smem:[#allocation5 + %s568]]
          %s570 = scalar_lea.vmem [#allocation6], %s569
          %v571 = vld [vmem:[%s570] sm:$0x1]
          %v572 = vadd.f32 %v567, %v571
          %s573 = sadd.s32 %s316, 11
          %s574 = smul.u32 %s573, 4
          %s575 = sld [smem:[#allocation5 + %s574]]
          %s576 = scalar_lea.vmem [#allocation6], %s575
          %v577 = vld [vmem:[%s576] sm:$0x1]
          %s578 = sadd.s32 %s574, 1
          %s579 = sld [smem:[#allocation5 + %s578]]
          %s580 = scalar_lea.vmem [#allocation6], %s579
          %v581 = vld [vmem:[%s580] sm:$0x1]
          %v582 = vadd.f32 %v577, %v581
          %s583 = sadd.s32 %s574, 2
          %s584 = sld [smem:[#allocation5 + %s583]]
          %s585 = scalar_lea.vmem [#allocation6], %s584
          %v586 = vld [vmem:[%s585] sm:$0x1]
          %v587 = vadd.f32 %v582, %v586
          %s588 = sadd.s32 %s574, 3
          %s589 = sld [smem:[#allocation5 + %s588]]
          %s590 = scalar_lea.vmem [#allocation6], %s589
          %v591 = vld [vmem:[%s590] sm:$0x1]
          %v592 = vadd.f32 %v587, %v591
          %s593 = sadd.s32 %s316, 12
          %s594 = smul.u32 %s593, 4
          %s595 = sld [smem:[#allocation5 + %s594]]
          %s596 = scalar_lea.vmem [#allocation6], %s595
          %v597 = vld [vmem:[%s596] sm:$0x1]
          %s598 = sadd.s32 %s594, 1
          %s599 = sld [smem:[#allocation5 + %s598]]
          %s600 = scalar_lea.vmem [#allocation6], %s599
          %v601 = vld [vmem:[%s600] sm:$0x1]
          %v602 = vadd.f32 %v597, %v601
          %s603 = sadd.s32 %s594, 2
          %s604 = sld [smem:[#allocation5 + %s603]]
          %s605 = scalar_lea.vmem [#allocation6], %s604
          %v606 = vld [vmem:[%s605] sm:$0x1]
          %v607 = vadd.f32 %v602, %v606
          %s608 = sadd.s32 %s594, 3
          %s609 = sld [smem:[#allocation5 + %s608]]
          %s610 = scalar_lea.vmem [#allocation6], %s609
          %v611 = vld [vmem:[%s610] sm:$0x1]
          %v612 = vadd.f32 %v607, %v611
          %s613 = sadd.s32 %s316, 13
          %s614 = smul.u32 %s613, 4
          %s615 = sld [smem:[#allocation5 + %s614]]
          %s616 = scalar_lea.vmem [#allocation6], %s615
          %v617 = vld [vmem:[%s616] sm:$0x1]
          %s618 = sadd.s32 %s614, 1
          %s619 = sld [smem:[#allocation5 + %s618]]
          %s620 = scalar_lea.vmem [#allocation6], %s619
          %v621 = vld [vmem:[%s620] sm:$0x1]
          %v622 = vadd.f32 %v617, %v621
          %s623 = sadd.s32 %s614, 2
          %s624 = sld [smem:[#allocation5 + %s623]]
          %s625 = scalar_lea.vmem [#allocation6], %s624
          %v626 = vld [vmem:[%s625] sm:$0x1]
          %v627 = vadd.f32 %v622, %v626
          %s628 = sadd.s32 %s614, 3
          %s629 = sld [smem:[#allocation5 + %s628]]
          %s630 = scalar_lea.vmem [#allocation6], %s629
          %v631 = vld [vmem:[%s630] sm:$0x1]
          %v632 = vadd.f32 %v627, %v631
          %s633 = sadd.s32 %s316, 14
          %s634 = smul.u32 %s633, 4
          %s635 = sld [smem:[#allocation5 + %s634]]
          %s636 = scalar_lea.vmem [#allocation6], %s635
          %v637 = vld [vmem:[%s636] sm:$0x1]
          %s638 = sadd.s32 %s634, 1
          %s639 = sld [smem:[#allocation5 + %s638]]
          %s640 = scalar_lea.vmem [#allocation6], %s639
          %v641 = vld [vmem:[%s640] sm:$0x1]
          %v642 = vadd.f32 %v637, %v641
          %s643 = sadd.s32 %s634, 2
          %s644 = sld [smem:[#allocation5 + %s643]]
          %s645 = scalar_lea.vmem [#allocation6], %s644
          %v646 = vld [vmem:[%s645] sm:$0x1]
          %v647 = vadd.f32 %v642, %v646
          %s648 = sadd.s32 %s634, 3
          %s649 = sld [smem:[#allocation5 + %s648]]
          %s650 = scalar_lea.vmem [#allocation6], %s649
          %v651 = vld [vmem:[%s650] sm:$0x1]
          %v652 = vadd.f32 %v647, %v651
          %s653 = sadd.s32 %s316, 15
          %s654 = smul.u32 %s653, 4
          %s655 = sld [smem:[#allocation5 + %s654]]
          %s656 = scalar_lea.vmem [#allocation6], %s655
          %v657 = vld [vmem:[%s656] sm:$0x1]
          %s658 = sadd.s32 %s654, 1
          %s659 = sld [smem:[#allocation5 + %s658]]
          %s660 = scalar_lea.vmem [#allocation6], %s659
          %v661 = vld [vmem:[%s660] sm:$0x1]
          %v662 = vadd.f32 %v657, %v661
          %s663 = sadd.s32 %s654, 2
          %s664 = sld [smem:[#allocation5 + %s663]]
          %s665 = scalar_lea.vmem [#allocation6], %s664
          %v666 = vld [vmem:[%s665] sm:$0x1]
          %v667 = vadd.f32 %v662, %v666
          %s668 = sadd.s32 %s654, 3
          %s669 = sld [smem:[#allocation5 + %s668]]
          %s670 = scalar_lea.vmem [#allocation6], %s669
          %v671 = vld [vmem:[%s670] sm:$0x1]
          %v672 = vadd.f32 %v667, %v671
          %v674 = vrot.slane %v552, 7
          %v677 = vrot.slane %v572, 6
          %v680 = vrot.slane %v592, 5
          %v683 = vrot.slane %v612, 4
          %v686 = vrot.slane %v632, 3
          %v689 = vrot.slane %v652, 2
          %v692 = vrot.slane %v672, 1
          %v694 = vsel %vm497, %v532, %v674
          %v695 = vsel %vm499, %v694, %v677
          %v696 = vsel %vm501, %v695, %v680
          %v697 = vsel %vm503, %v696, %v683
          %v698 = vsel %vm505, %v697, %v686
          %v699 = vsel %vm507, %v698, %v689
          %v700 = vsel %vm509, %v699, %v692
          %v701 = vmul.f32 %v700, 0.25
          %702 = vst [vmem:[#allocation2 + $0x8] sm:$0xff] %v701
          %s703 = sadd.s32 %s316, 16
          %s704 = smul.u32 %s703, 4
          %s705 = sld [smem:[#allocation5 + %s704]]
          %s706 = scalar_lea.vmem [#allocation6], %s705
          %v707 = vld [vmem:[%s706] sm:$0x1]
          %s708 = sadd.s32 %s704, 1
          %s709 = sld [smem:[#allocation5 + %s708]]
          %s710 = scalar_lea.vmem [#allocation6], %s709
          %v711 = vld [vmem:[%s710] sm:$0x1]
          %v712 = vadd.f32 %v707, %v711
          %s713 = sadd.s32 %s704, 2
          %s714 = sld [smem:[#allocation5 + %s713]]
          %s715 = scalar_lea.vmem [#allocation6], %s714
          %v716 = vld [vmem:[%s715] sm:$0x1]
          %v717 = vadd.f32 %v712, %v716
          %s718 = sadd.s32 %s704, 3
          %s719 = sld [smem:[#allocation5 + %s718]]
          %s720 = scalar_lea.vmem [#allocation6], %s719
          %v721 = vld [vmem:[%s720] sm:$0x1]
          %v722 = vadd.f32 %v717, %v721
          %s723 = sadd.s32 %s316, 17
          %s724 = smul.u32 %s723, 4
          %s725 = sld [smem:[#allocation5 + %s724]]
          %s726 = scalar_lea.vmem [#allocation6], %s725
          %v727 = vld [vmem:[%s726] sm:$0x1]
          %s728 = sadd.s32 %s724, 1
          %s729 = sld [smem:[#allocation5 + %s728]]
          %s730 = scalar_lea.vmem [#allocation6], %s729
          %v731 = vld [vmem:[%s730] sm:$0x1]
          %v732 = vadd.f32 %v727, %v731
          %s733 = sadd.s32 %s724, 2
          %s734 = sld [smem:[#allocation5 + %s733]]
          %s735 = scalar_lea.vmem [#allocation6], %s734
          %v736 = vld [vmem:[%s735] sm:$0x1]
          %v737 = vadd.f32 %v732, %v736
          %s738 = sadd.s32 %s724, 3
          %s739 = sld [smem:[#allocation5 + %s738]]
          %s740 = scalar_lea.vmem [#allocation6], %s739
          %v741 = vld [vmem:[%s740] sm:$0x1]
          %v742 = vadd.f32 %v737, %v741
          %s743 = sadd.s32 %s316, 18
          %s744 = smul.u32 %s743, 4
          %s745 = sld [smem:[#allocation5 + %s744]]
          %s746 = scalar_lea.vmem [#allocation6], %s745
          %v747 = vld [vmem:[%s746] sm:$0x1]
          %s748 = sadd.s32 %s744, 1
          %s749 = sld [smem:[#allocation5 + %s748]]
          %s750 = scalar_lea.vmem [#allocation6], %s749
          %v751 = vld [vmem:[%s750] sm:$0x1]
          %v752 = vadd.f32 %v747, %v751
          %s753 = sadd.s32 %s744, 2
          %s754 = sld [smem:[#allocation5 + %s753]]
          %s755 = scalar_lea.vmem [#allocation6], %s754
          %v756 = vld [vmem:[%s755] sm:$0x1]
          %v757 = vadd.f32 %v752, %v756
          %s758 = sadd.s32 %s744, 3
          %s759 = sld [smem:[#allocation5 + %s758]]
          %s760 = scalar_lea.vmem [#allocation6], %s759
          %v761 = vld [vmem:[%s760] sm:$0x1]
          %v762 = vadd.f32 %v757, %v761
          %s763 = sadd.s32 %s316, 19
          %s764 = smul.u32 %s763, 4
          %s765 = sld [smem:[#allocation5 + %s764]]
          %s766 = scalar_lea.vmem [#allocation6], %s765
          %v767 = vld [vmem:[%s766] sm:$0x1]
          %s768 = sadd.s32 %s764, 1
          %s769 = sld [smem:[#allocation5 + %s768]]
          %s770 = scalar_lea.vmem [#allocation6], %s769
          %v771 = vld [vmem:[%s770] sm:$0x1]
          %v772 = vadd.f32 %v767, %v771
          %s773 = sadd.s32 %s764, 2
          %s774 = sld [smem:[#allocation5 + %s773]]
          %s775 = scalar_lea.vmem [#allocation6], %s774
          %v776 = vld [vmem:[%s775] sm:$0x1]
          %v777 = vadd.f32 %v772, %v776
          %s778 = sadd.s32 %s764, 3
          %s779 = sld [smem:[#allocation5 + %s778]]
          %s780 = scalar_lea.vmem [#allocation6], %s779
          %v781 = vld [vmem:[%s780] sm:$0x1]
          %v782 = vadd.f32 %v777, %v781
          %s783 = sadd.s32 %s316, 20
          %s784 = smul.u32 %s783, 4
          %s785 = sld [smem:[#allocation5 + %s784]]
          %s786 = scalar_lea.vmem [#allocation6], %s785
          %v787 = vld [vmem:[%s786] sm:$0x1]
          %s788 = sadd.s32 %s784, 1
          %s789 = sld [smem:[#allocation5 + %s788]]
          %s790 = scalar_lea.vmem [#allocation6], %s789
          %v791 = vld [vmem:[%s790] sm:$0x1]
          %v792 = vadd.f32 %v787, %v791
          %s793 = sadd.s32 %s784, 2
          %s794 = sld [smem:[#allocation5 + %s793]]
          %s795 = scalar_lea.vmem [#allocation6], %s794
          %v796 = vld [vmem:[%s795] sm:$0x1]
          %v797 = vadd.f32 %v792, %v796
          %s798 = sadd.s32 %s784, 3
          %s799 = sld [smem:[#allocation5 + %s798]]
          %s800 = scalar_lea.vmem [#allocation6], %s799
          %v801 = vld [vmem:[%s800] sm:$0x1]
          %v802 = vadd.f32 %v797, %v801
          %s803 = sadd.s32 %s316, 21
          %s804 = smul.u32 %s803, 4
          %s805 = sld [smem:[#allocation5 + %s804]]
          %s806 = scalar_lea.vmem [#allocation6], %s805
          %v807 = vld [vmem:[%s806] sm:$0x1]
          %s808 = sadd.s32 %s804, 1
          %s809 = sld [smem:[#allocation5 + %s808]]
          %s810 = scalar_lea.vmem [#allocation6], %s809
          %v811 = vld [vmem:[%s810] sm:$0x1]
          %v812 = vadd.f32 %v807, %v811
          %s813 = sadd.s32 %s804, 2
          %s814 = sld [smem:[#allocation5 + %s813]]
          %s815 = scalar_lea.vmem [#allocation6], %s814
          %v816 = vld [vmem:[%s815] sm:$0x1]
          %v817 = vadd.f32 %v812, %v816
          %s818 = sadd.s32 %s804, 3
          %s819 = sld [smem:[#allocation5 + %s818]]
          %s820 = scalar_lea.vmem [#allocation6], %s819
          %v821 = vld [vmem:[%s820] sm:$0x1]
          %v822 = vadd.f32 %v817, %v821
          %s823 = sadd.s32 %s316, 22
          %s824 = smul.u32 %s823, 4
          %s825 = sld [smem:[#allocation5 + %s824]]
          %s826 = scalar_lea.vmem [#allocation6], %s825
          %v827 = vld [vmem:[%s826] sm:$0x1]
          %s828 = sadd.s32 %s824, 1
          %s829 = sld [smem:[#allocation5 + %s828]]
          %s830 = scalar_lea.vmem [#allocation6], %s829
          %v831 = vld [vmem:[%s830] sm:$0x1]
          %v832 = vadd.f32 %v827, %v831
          %s833 = sadd.s32 %s824, 2
          %s834 = sld [smem:[#allocation5 + %s833]]
          %s835 = scalar_lea.vmem [#allocation6], %s834
          %v836 = vld [vmem:[%s835] sm:$0x1]
          %v837 = vadd.f32 %v832, %v836
          %s838 = sadd.s32 %s824, 3
          %s839 = sld [smem:[#allocation5 + %s838]]
          %s840 = scalar_lea.vmem [#allocation6], %s839
          %v841 = vld [vmem:[%s840] sm:$0x1]
          %v842 = vadd.f32 %v837, %v841
          %s843 = sadd.s32 %s316, 23
          %s844 = smul.u32 %s843, 4
          %s845 = sld [smem:[#allocation5 + %s844]]
          %s846 = scalar_lea.vmem [#allocation6], %s845
          %v847 = vld [vmem:[%s846] sm:$0x1]
          %s848 = sadd.s32 %s844, 1
          %s849 = sld [smem:[#allocation5 + %s848]]
          %s850 = scalar_lea.vmem [#allocation6], %s849
          %v851 = vld [vmem:[%s850] sm:$0x1]
          %v852 = vadd.f32 %v847, %v851
          %s853 = sadd.s32 %s844, 2
          %s854 = sld [smem:[#allocation5 + %s853]]
          %s855 = scalar_lea.vmem [#allocation6], %s854
          %v856 = vld [vmem:[%s855] sm:$0x1]
          %v857 = vadd.f32 %v852, %v856
          %s858 = sadd.s32 %s844, 3
          %s859 = sld [smem:[#allocation5 + %s858]]
          %s860 = scalar_lea.vmem [#allocation6], %s859
          %v861 = vld [vmem:[%s860] sm:$0x1]
          %v862 = vadd.f32 %v857, %v861
          %v864 = vrot.slane %v742, 7
          %v867 = vrot.slane %v762, 6
          %v870 = vrot.slane %v782, 5
          %v873 = vrot.slane %v802, 4
          %v876 = vrot.slane %v822, 3
          %v879 = vrot.slane %v842, 2
          %v882 = vrot.slane %v862, 1
          %v884 = vsel %vm497, %v722, %v864
          %v885 = vsel %vm499, %v884, %v867
          %v886 = vsel %vm501, %v885, %v870
          %v887 = vsel %vm503, %v886, %v873
          %v888 = vsel %vm505, %v887, %v876
          %v889 = vsel %vm507, %v888, %v879
          %v890 = vsel %vm509, %v889, %v882
          %v891 = vmul.f32 %v890, 0.25
          %892 = vst [vmem:[#allocation2 + $0x10] sm:$0xff] %v891
          %s893 = sadd.s32 %s316, 24
          %s894 = smul.u32 %s893, 4
          %s895 = sld [smem:[#allocation5 + %s894]]
          %s896 = scalar_lea.vmem [#allocation6], %s895
          %v897 = vld [vmem:[%s896] sm:$0x1]
          %s898 = sadd.s32 %s894, 1
          %s899 = sld [smem:[#allocation5 + %s898]]
          %s900 = scalar_lea.vmem [#allocation6], %s899
          %v901 = vld [vmem:[%s900] sm:$0x1]
          %v902 = vadd.f32 %v897, %v901
          %s903 = sadd.s32 %s894, 2
          %s904 = sld [smem:[#allocation5 + %s903]]
          %s905 = scalar_lea.vmem [#allocation6], %s904
          %v906 = vld [vmem:[%s905] sm:$0x1]
          %v907 = vadd.f32 %v902, %v906
          %s908 = sadd.s32 %s894, 3
          %s909 = sld [smem:[#allocation5 + %s908]]
          %s910 = scalar_lea.vmem [#allocation6], %s909
          %v911 = vld [vmem:[%s910] sm:$0x1]
          %v912 = vadd.f32 %v907, %v911
          %s913 = sadd.s32 %s316, 25
          %s914 = smul.u32 %s913, 4
          %s915 = sld [smem:[#allocation5 + %s914]]
          %s916 = scalar_lea.vmem [#allocation6], %s915
          %v917 = vld [vmem:[%s916] sm:$0x1]
          %s918 = sadd.s32 %s914, 1
          %s919 = sld [smem:[#allocation5 + %s918]]
          %s920 = scalar_lea.vmem [#allocation6], %s919
          %v921 = vld [vmem:[%s920] sm:$0x1]
          %v922 = vadd.f32 %v917, %v921
          %s923 = sadd.s32 %s914, 2
          %s924 = sld [smem:[#allocation5 + %s923]]
          %s925 = scalar_lea.vmem [#allocation6], %s924
          %v926 = vld [vmem:[%s925] sm:$0x1]
          %v927 = vadd.f32 %v922, %v926
          %s928 = sadd.s32 %s914, 3
          %s929 = sld [smem:[#allocation5 + %s928]]
          %s930 = scalar_lea.vmem [#allocation6], %s929
          %v931 = vld [vmem:[%s930] sm:$0x1]
          %v932 = vadd.f32 %v927, %v931
          %s933 = sadd.s32 %s316, 26
          %s934 = smul.u32 %s933, 4
          %s935 = sld [smem:[#allocation5 + %s934]]
          %s936 = scalar_lea.vmem [#allocation6], %s935
          %v937 = vld [vmem:[%s936] sm:$0x1]
          %s938 = sadd.s32 %s934, 1
          %s939 = sld [smem:[#allocation5 + %s938]]
          %s940 = scalar_lea.vmem [#allocation6], %s939
          %v941 = vld [vmem:[%s940] sm:$0x1]
          %v942 = vadd.f32 %v937, %v941
          %s943 = sadd.s32 %s934, 2
          %s944 = sld [smem:[#allocation5 + %s943]]
          %s945 = scalar_lea.vmem [#allocation6], %s944
          %v946 = vld [vmem:[%s945] sm:$0x1]
          %v947 = vadd.f32 %v942, %v946
          %s948 = sadd.s32 %s934, 3
          %s949 = sld [smem:[#allocation5 + %s948]]
          %s950 = scalar_lea.vmem [#allocation6], %s949
          %v951 = vld [vmem:[%s950] sm:$0x1]
          %v952 = vadd.f32 %v947, %v951
          %s953 = sadd.s32 %s316, 27
          %s954 = smul.u32 %s953, 4
          %s955 = sld [smem:[#allocation5 + %s954]]
          %s956 = scalar_lea.vmem [#allocation6], %s955
          %v957 = vld [vmem:[%s956] sm:$0x1]
          %s958 = sadd.s32 %s954, 1
          %s959 = sld [smem:[#allocation5 + %s958]]
          %s960 = scalar_lea.vmem [#allocation6], %s959
          %v961 = vld [vmem:[%s960] sm:$0x1]
          %v962 = vadd.f32 %v957, %v961
          %s963 = sadd.s32 %s954, 2
          %s964 = sld [smem:[#allocation5 + %s963]]
          %s965 = scalar_lea.vmem [#allocation6], %s964
          %v966 = vld [vmem:[%s965] sm:$0x1]
          %v967 = vadd.f32 %v962, %v966
          %s968 = sadd.s32 %s954, 3
          %s969 = sld [smem:[#allocation5 + %s968]]
          %s970 = scalar_lea.vmem [#allocation6], %s969
          %v971 = vld [vmem:[%s970] sm:$0x1]
          %v972 = vadd.f32 %v967, %v971
          %s973 = sadd.s32 %s316, 28
          %s974 = smul.u32 %s973, 4
          %s975 = sld [smem:[#allocation5 + %s974]]
          %s976 = scalar_lea.vmem [#allocation6], %s975
          %v977 = vld [vmem:[%s976] sm:$0x1]
          %s978 = sadd.s32 %s974, 1
          %s979 = sld [smem:[#allocation5 + %s978]]
          %s980 = scalar_lea.vmem [#allocation6], %s979
          %v981 = vld [vmem:[%s980] sm:$0x1]
          %v982 = vadd.f32 %v977, %v981
          %s983 = sadd.s32 %s974, 2
          %s984 = sld [smem:[#allocation5 + %s983]]
          %s985 = scalar_lea.vmem [#allocation6], %s984
          %v986 = vld [vmem:[%s985] sm:$0x1]
          %v987 = vadd.f32 %v982, %v986
          %s988 = sadd.s32 %s974, 3
          %s989 = sld [smem:[#allocation5 + %s988]]
          %s990 = scalar_lea.vmem [#allocation6], %s989
          %v991 = vld [vmem:[%s990] sm:$0x1]
          %v992 = vadd.f32 %v987, %v991
          %s993 = sadd.s32 %s316, 29
          %s994 = smul.u32 %s993, 4
          %s995 = sld [smem:[#allocation5 + %s994]]
          %s996 = scalar_lea.vmem [#allocation6], %s995
          %v997 = vld [vmem:[%s996] sm:$0x1]
          %s998 = sadd.s32 %s994, 1
          %s999 = sld [smem:[#allocation5 + %s998]]
          %s1000 = scalar_lea.vmem [#allocation6], %s999
          %v1001 = vld [vmem:[%s1000] sm:$0x1]
          %v1002 = vadd.f32 %v997, %v1001
          %s1003 = sadd.s32 %s994, 2
          %s1004 = sld [smem:[#allocation5 + %s1003]]
          %s1005 = scalar_lea.vmem [#allocation6], %s1004
          %v1006 = vld [vmem:[%s1005] sm:$0x1]
          %v1007 = vadd.f32 %v1002, %v1006
          %s1008 = sadd.s32 %s994, 3
          %s1009 = sld [smem:[#allocation5 + %s1008]]
          %s1010 = scalar_lea.vmem [#allocation6], %s1009
          %v1011 = vld [vmem:[%s1010] sm:$0x1]
          %v1012 = vadd.f32 %v1007, %v1011
          %s1013 = sadd.s32 %s316, 30
          %s1014 = smul.u32 %s1013, 4
          %s1015 = sld [smem:[#allocation5 + %s1014]]
          %s1016 = scalar_lea.vmem [#allocation6], %s1015
          %v1017 = vld [vmem:[%s1016] sm:$0x1]
          %s1018 = sadd.s32 %s1014, 1
          %s1019 = sld [smem:[#allocation5 + %s1018]]
          %s1020 = scalar_lea.vmem [#allocation6], %s1019
          %v1021 = vld [vmem:[%s1020] sm:$0x1]
          %v1022 = vadd.f32 %v1017, %v1021
          %s1023 = sadd.s32 %s1014, 2
          %s1024 = sld [smem:[#allocation5 + %s1023]]
          %s1025 = scalar_lea.vmem [#allocation6], %s1024
          %v1026 = vld [vmem:[%s1025] sm:$0x1]
          %v1027 = vadd.f32 %v1022, %v1026
          %s1028 = sadd.s32 %s1014, 3
          %s1029 = sld [smem:[#allocation5 + %s1028]]
          %s1030 = scalar_lea.vmem [#allocation6], %s1029
          %v1031 = vld [vmem:[%s1030] sm:$0x1]
          %v1032 = vadd.f32 %v1027, %v1031
          %s1033 = sadd.s32 %s316, 31
          %s1034 = smul.u32 %s1033, 4
          %s1035 = sld [smem:[#allocation5 + %s1034]]
          %s1036 = scalar_lea.vmem [#allocation6], %s1035
          %v1037 = vld [vmem:[%s1036] sm:$0x1]
          %s1038 = sadd.s32 %s1034, 1
          %s1039 = sld [smem:[#allocation5 + %s1038]]
          %s1040 = scalar_lea.vmem [#allocation6], %s1039
          %v1041 = vld [vmem:[%s1040] sm:$0x1]
          %v1042 = vadd.f32 %v1037, %v1041
          %s1043 = sadd.s32 %s1034, 2
          %s1044 = sld [smem:[#allocation5 + %s1043]]
          %s1045 = scalar_lea.vmem [#allocation6], %s1044
          %v1046 = vld [vmem:[%s1045] sm:$0x1]
          %v1047 = vadd.f32 %v1042, %v1046
          %s1048 = sadd.s32 %s1034, 3
          %s1049 = sld [smem:[#allocation5 + %s1048]]
          %s1050 = scalar_lea.vmem [#allocation6], %s1049
          %v1051 = vld [vmem:[%s1050] sm:$0x1]
          %v1052 = vadd.f32 %v1047, %v1051
          %v1054 = vrot.slane %v932, 7
          %v1057 = vrot.slane %v952, 6
          %v1060 = vrot.slane %v972, 5
          %v1063 = vrot.slane %v992, 4
          %v1066 = vrot.slane %v1012, 3
          %v1069 = vrot.slane %v1032, 2
          %v1072 = vrot.slane %v1052, 1
          %v1074 = vsel %vm497, %v912, %v1054
          %v1075 = vsel %vm499, %v1074, %v1057
          %v1076 = vsel %vm501, %v1075, %v1060
          %v1077 = vsel %vm503, %v1076, %v1063
          %v1078 = vsel %vm505, %v1077, %v1066
          %v1079 = vsel %vm507, %v1078, %v1069
          %v1080 = vsel %vm509, %v1079, %v1072
          %v1081 = vmul.f32 %v1080, 0.25
          %1082 = vst [vmem:[#allocation2 + $0x18] sm:$0xff] %v1081
          %s1083 = sadd.s32 %s316, 32
          %s1084 = smul.u32 %s1083, 4
          %s1085 = sld [smem:[#allocation5 + %s1084]]
          %s1086 = scalar_lea.vmem [#allocation6], %s1085
          %v1087 = vld [vmem:[%s1086] sm:$0x1]
          %s1088 = sadd.s32 %s1084, 1
          %s1089 = sld [smem:[#allocation5 + %s1088]]
          %s1090 = scalar_lea.vmem [#allocation6], %s1089
          %v1091 = vld [vmem:[%s1090] sm:$0x1]
          %v1092 = vadd.f32 %v1087, %v1091
          %s1093 = sadd.s32 %s1084, 2
          %s1094 = sld [smem:[#allocation5 + %s1093]]
          %s1095 = scalar_lea.vmem [#allocation6], %s1094
          %v1096 = vld [vmem:[%s1095] sm:$0x1]
          %v1097 = vadd.f32 %v1092, %v1096
          %s1098 = sadd.s32 %s1084, 3
          %s1099 = sld [smem:[#allocation5 + %s1098]]
          %s1100 = scalar_lea.vmem [#allocation6], %s1099
          %v1101 = vld [vmem:[%s1100] sm:$0x1]
          %v1102 = vadd.f32 %v1097, %v1101
          %s1103 = sadd.s32 %s316, 33
          %s1104 = smul.u32 %s1103, 4
          %s1105 = sld [smem:[#allocation5 + %s1104]]
          %s1106 = scalar_lea.vmem [#allocation6], %s1105
          %v1107 = vld [vmem:[%s1106] sm:$0x1]
          %s1108 = sadd.s32 %s1104, 1
          %s1109 = sld [smem:[#allocation5 + %s1108]]
          %s1110 = scalar_lea.vmem [#allocation6], %s1109
          %v1111 = vld [vmem:[%s1110] sm:$0x1]
          %v1112 = vadd.f32 %v1107, %v1111
          %s1113 = sadd.s32 %s1104, 2
          %s1114 = sld [smem:[#allocation5 + %s1113]]
          %s1115 = scalar_lea.vmem [#allocation6], %s1114
          %v1116 = vld [vmem:[%s1115] sm:$0x1]
          %v1117 = vadd.f32 %v1112, %v1116
          %s1118 = sadd.s32 %s1104, 3
          %s1119 = sld [smem:[#allocation5 + %s1118]]
          %s1120 = scalar_lea.vmem [#allocation6], %s1119
          %v1121 = vld [vmem:[%s1120] sm:$0x1]
          %v1122 = vadd.f32 %v1117, %v1121
          %s1123 = sadd.s32 %s316, 34
          %s1124 = smul.u32 %s1123, 4
          %s1125 = sld [smem:[#allocation5 + %s1124]]
          %s1126 = scalar_lea.vmem [#allocation6], %s1125
          %v1127 = vld [vmem:[%s1126] sm:$0x1]
          %s1128 = sadd.s32 %s1124, 1
          %s1129 = sld [smem:[#allocation5 + %s1128]]
          %s1130 = scalar_lea.vmem [#allocation6], %s1129
          %v1131 = vld [vmem:[%s1130] sm:$0x1]
          %v1132 = vadd.f32 %v1127, %v1131
          %s1133 = sadd.s32 %s1124, 2
          %s1134 = sld [smem:[#allocation5 + %s1133]]
          %s1135 = scalar_lea.vmem [#allocation6], %s1134
          %v1136 = vld [vmem:[%s1135] sm:$0x1]
          %v1137 = vadd.f32 %v1132, %v1136
          %s1138 = sadd.s32 %s1124, 3
          %s1139 = sld [smem:[#allocation5 + %s1138]]
          %s1140 = scalar_lea.vmem [#allocation6], %s1139
          %v1141 = vld [vmem:[%s1140] sm:$0x1]
          %v1142 = vadd.f32 %v1137, %v1141
          %s1143 = sadd.s32 %s316, 35
          %s1144 = smul.u32 %s1143, 4
          %s1145 = sld [smem:[#allocation5 + %s1144]]
          %s1146 = scalar_lea.vmem [#allocation6], %s1145
          %v1147 = vld [vmem:[%s1146] sm:$0x1]
          %s1148 = sadd.s32 %s1144, 1
          %s1149 = sld [smem:[#allocation5 + %s1148]]
          %s1150 = scalar_lea.vmem [#allocation6], %s1149
          %v1151 = vld [vmem:[%s1150] sm:$0x1]
          %v1152 = vadd.f32 %v1147, %v1151
          %s1153 = sadd.s32 %s1144, 2
          %s1154 = sld [smem:[#allocation5 + %s1153]]
          %s1155 = scalar_lea.vmem [#allocation6], %s1154
          %v1156 = vld [vmem:[%s1155] sm:$0x1]
          %v1157 = vadd.f32 %v1152, %v1156
          %s1158 = sadd.s32 %s1144, 3
          %s1159 = sld [smem:[#allocation5 + %s1158]]
          %s1160 = scalar_lea.vmem [#allocation6], %s1159
          %v1161 = vld [vmem:[%s1160] sm:$0x1]
          %v1162 = vadd.f32 %v1157, %v1161
          %s1163 = sadd.s32 %s316, 36
          %s1164 = smul.u32 %s1163, 4
          %s1165 = sld [smem:[#allocation5 + %s1164]]
          %s1166 = scalar_lea.vmem [#allocation6], %s1165
          %v1167 = vld [vmem:[%s1166] sm:$0x1]
          %s1168 = sadd.s32 %s1164, 1
          %s1169 = sld [smem:[#allocation5 + %s1168]]
          %s1170 = scalar_lea.vmem [#allocation6], %s1169
          %v1171 = vld [vmem:[%s1170] sm:$0x1]
          %v1172 = vadd.f32 %v1167, %v1171
          %s1173 = sadd.s32 %s1164, 2
          %s1174 = sld [smem:[#allocation5 + %s1173]]
          %s1175 = scalar_lea.vmem [#allocation6], %s1174
          %v1176 = vld [vmem:[%s1175] sm:$0x1]
          %v1177 = vadd.f32 %v1172, %v1176
          %s1178 = sadd.s32 %s1164, 3
          %s1179 = sld [smem:[#allocation5 + %s1178]]
          %s1180 = scalar_lea.vmem [#allocation6], %s1179
          %v1181 = vld [vmem:[%s1180] sm:$0x1]
          %v1182 = vadd.f32 %v1177, %v1181
          %s1183 = sadd.s32 %s316, 37
          %s1184 = smul.u32 %s1183, 4
          %s1185 = sld [smem:[#allocation5 + %s1184]]
          %s1186 = scalar_lea.vmem [#allocation6], %s1185
          %v1187 = vld [vmem:[%s1186] sm:$0x1]
          %s1188 = sadd.s32 %s1184, 1
          %s1189 = sld [smem:[#allocation5 + %s1188]]
          %s1190 = scalar_lea.vmem [#allocation6], %s1189
          %v1191 = vld [vmem:[%s1190] sm:$0x1]
          %v1192 = vadd.f32 %v1187, %v1191
          %s1193 = sadd.s32 %s1184, 2
          %s1194 = sld [smem:[#allocation5 + %s1193]]
          %s1195 = scalar_lea.vmem [#allocation6], %s1194
          %v1196 = vld [vmem:[%s1195] sm:$0x1]
          %v1197 = vadd.f32 %v1192, %v1196
          %s1198 = sadd.s32 %s1184, 3
          %s1199 = sld [smem:[#allocation5 + %s1198]]
          %s1200 = scalar_lea.vmem [#allocation6], %s1199
          %v1201 = vld [vmem:[%s1200] sm:$0x1]
          %v1202 = vadd.f32 %v1197, %v1201
          %s1203 = sadd.s32 %s316, 38
          %s1204 = smul.u32 %s1203, 4
          %s1205 = sld [smem:[#allocation5 + %s1204]]
          %s1206 = scalar_lea.vmem [#allocation6], %s1205
          %v1207 = vld [vmem:[%s1206] sm:$0x1]
          %s1208 = sadd.s32 %s1204, 1
          %s1209 = sld [smem:[#allocation5 + %s1208]]
          %s1210 = scalar_lea.vmem [#allocation6], %s1209
          %v1211 = vld [vmem:[%s1210] sm:$0x1]
          %v1212 = vadd.f32 %v1207, %v1211
          %s1213 = sadd.s32 %s1204, 2
          %s1214 = sld [smem:[#allocation5 + %s1213]]
          %s1215 = scalar_lea.vmem [#allocation6], %s1214
          %v1216 = vld [vmem:[%s1215] sm:$0x1]
          %v1217 = vadd.f32 %v1212, %v1216
          %s1218 = sadd.s32 %s1204, 3
          %s1219 = sld [smem:[#allocation5 + %s1218]]
          %s1220 = scalar_lea.vmem [#allocation6], %s1219
          %v1221 = vld [vmem:[%s1220] sm:$0x1]
          %v1222 = vadd.f32 %v1217, %v1221
          %s1223 = sadd.s32 %s316, 39
          %s1224 = smul.u32 %s1223, 4
          %s1225 = sld [smem:[#allocation5 + %s1224]]
          %s1226 = scalar_lea.vmem [#allocation6], %s1225
          %v1227 = vld [vmem:[%s1226] sm:$0x1]
          %s1228 = sadd.s32 %s1224, 1
          %s1229 = sld [smem:[#allocation5 + %s1228]]
          %s1230 = scalar_lea.vmem [#allocation6], %s1229
          %v1231 = vld [vmem:[%s1230] sm:$0x1]
          %v1232 = vadd.f32 %v1227, %v1231
          %s1233 = sadd.s32 %s1224, 2
          %s1234 = sld [smem:[#allocation5 + %s1233]]
          %s1235 = scalar_lea.vmem [#allocation6], %s1234
          %v1236 = vld [vmem:[%s1235] sm:$0x1]
          %v1237 = vadd.f32 %v1232, %v1236
          %s1238 = sadd.s32 %s1224, 3
          %s1239 = sld [smem:[#allocation5 + %s1238]]
          %s1240 = scalar_lea.vmem [#allocation6], %s1239
          %v1241 = vld [vmem:[%s1240] sm:$0x1]
          %v1242 = vadd.f32 %v1237, %v1241
          %v1244 = vrot.slane %v1122, 7
          %v1247 = vrot.slane %v1142, 6
          %v1250 = vrot.slane %v1162, 5
          %v1253 = vrot.slane %v1182, 4
          %v1256 = vrot.slane %v1202, 3
          %v1259 = vrot.slane %v1222, 2
          %v1262 = vrot.slane %v1242, 1
          %v1264 = vsel %vm497, %v1102, %v1244
          %v1265 = vsel %vm499, %v1264, %v1247
          %v1266 = vsel %vm501, %v1265, %v1250
          %v1267 = vsel %vm503, %v1266, %v1253
          %v1268 = vsel %vm505, %v1267, %v1256
          %v1269 = vsel %vm507, %v1268, %v1259
          %v1270 = vsel %vm509, %v1269, %v1262
          %v1271 = vmul.f32 %v1270, 0.25
          %1272 = vst [vmem:[#allocation2 + $0x20] sm:$0xff] %v1271
          %s1273 = sadd.s32 %s316, 40
          %s1274 = smul.u32 %s1273, 4
          %s1275 = sld [smem:[#allocation5 + %s1274]]
          %s1276 = scalar_lea.vmem [#allocation6], %s1275
          %v1277 = vld [vmem:[%s1276] sm:$0x1]
          %s1278 = sadd.s32 %s1274, 1
          %s1279 = sld [smem:[#allocation5 + %s1278]]
          %s1280 = scalar_lea.vmem [#allocation6], %s1279
          %v1281 = vld [vmem:[%s1280] sm:$0x1]
          %v1282 = vadd.f32 %v1277, %v1281
          %s1283 = sadd.s32 %s1274, 2
          %s1284 = sld [smem:[#allocation5 + %s1283]]
          %s1285 = scalar_lea.vmem [#allocation6], %s1284
          %v1286 = vld [vmem:[%s1285] sm:$0x1]
          %v1287 = vadd.f32 %v1282, %v1286
          %s1288 = sadd.s32 %s1274, 3
          %s1289 = sld [smem:[#allocation5 + %s1288]]
          %s1290 = scalar_lea.vmem [#allocation6], %s1289
          %v1291 = vld [vmem:[%s1290] sm:$0x1]
          %v1292 = vadd.f32 %v1287, %v1291
          %s1293 = sadd.s32 %s316, 41
          %s1294 = smul.u32 %s1293, 4
          %s1295 = sld [smem:[#allocation5 + %s1294]]
          %s1296 = scalar_lea.vmem [#allocation6], %s1295
          %v1297 = vld [vmem:[%s1296] sm:$0x1]
          %s1298 = sadd.s32 %s1294, 1
          %s1299 = sld [smem:[#allocation5 + %s1298]]
          %s1300 = scalar_lea.vmem [#allocation6], %s1299
          %v1301 = vld [vmem:[%s1300] sm:$0x1]
          %v1302 = vadd.f32 %v1297, %v1301
          %s1303 = sadd.s32 %s1294, 2
          %s1304 = sld [smem:[#allocation5 + %s1303]]
          %s1305 = scalar_lea.vmem [#allocation6], %s1304
          %v1306 = vld [vmem:[%s1305] sm:$0x1]
          %v1307 = vadd.f32 %v1302, %v1306
          %s1308 = sadd.s32 %s1294, 3
          %s1309 = sld [smem:[#allocation5 + %s1308]]
          %s1310 = scalar_lea.vmem [#allocation6], %s1309
          %v1311 = vld [vmem:[%s1310] sm:$0x1]
          %v1312 = vadd.f32 %v1307, %v1311
          %s1313 = sadd.s32 %s316, 42
          %s1314 = smul.u32 %s1313, 4
          %s1315 = sld [smem:[#allocation5 + %s1314]]
          %s1316 = scalar_lea.vmem [#allocation6], %s1315
          %v1317 = vld [vmem:[%s1316] sm:$0x1]
          %s1318 = sadd.s32 %s1314, 1
          %s1319 = sld [smem:[#allocation5 + %s1318]]
          %s1320 = scalar_lea.vmem [#allocation6], %s1319
          %v1321 = vld [vmem:[%s1320] sm:$0x1]
          %v1322 = vadd.f32 %v1317, %v1321
          %s1323 = sadd.s32 %s1314, 2
          %s1324 = sld [smem:[#allocation5 + %s1323]]
          %s1325 = scalar_lea.vmem [#allocation6], %s1324
          %v1326 = vld [vmem:[%s1325] sm:$0x1]
          %v1327 = vadd.f32 %v1322, %v1326
          %s1328 = sadd.s32 %s1314, 3
          %s1329 = sld [smem:[#allocation5 + %s1328]]
          %s1330 = scalar_lea.vmem [#allocation6], %s1329
          %v1331 = vld [vmem:[%s1330] sm:$0x1]
          %v1332 = vadd.f32 %v1327, %v1331
          %s1333 = sadd.s32 %s316, 43
          %s1334 = smul.u32 %s1333, 4
          %s1335 = sld [smem:[#allocation5 + %s1334]]
          %s1336 = scalar_lea.vmem [#allocation6], %s1335
          %v1337 = vld [vmem:[%s1336] sm:$0x1]
          %s1338 = sadd.s32 %s1334, 1
          %s1339 = sld [smem:[#allocation5 + %s1338]]
          %s1340 = scalar_lea.vmem [#allocation6], %s1339
          %v1341 = vld [vmem:[%s1340] sm:$0x1]
          %v1342 = vadd.f32 %v1337, %v1341
          %s1343 = sadd.s32 %s1334, 2
          %s1344 = sld [smem:[#allocation5 + %s1343]]
          %s1345 = scalar_lea.vmem [#allocation6], %s1344
          %v1346 = vld [vmem:[%s1345] sm:$0x1]
          %v1347 = vadd.f32 %v1342, %v1346
          %s1348 = sadd.s32 %s1334, 3
          %s1349 = sld [smem:[#allocation5 + %s1348]]
          %s1350 = scalar_lea.vmem [#allocation6], %s1349
          %v1351 = vld [vmem:[%s1350] sm:$0x1]
          %v1352 = vadd.f32 %v1347, %v1351
          %s1353 = sadd.s32 %s316, 44
          %s1354 = smul.u32 %s1353, 4
          %s1355 = sld [smem:[#allocation5 + %s1354]]
          %s1356 = scalar_lea.vmem [#allocation6], %s1355
          %v1357 = vld [vmem:[%s1356] sm:$0x1]
          %s1358 = sadd.s32 %s1354, 1
          %s1359 = sld [smem:[#allocation5 + %s1358]]
          %s1360 = scalar_lea.vmem [#allocation6], %s1359
          %v1361 = vld [vmem:[%s1360] sm:$0x1]
          %v1362 = vadd.f32 %v1357, %v1361
          %s1363 = sadd.s32 %s1354, 2
          %s1364 = sld [smem:[#allocation5 + %s1363]]
          %s1365 = scalar_lea.vmem [#allocation6], %s1364
          %v1366 = vld [vmem:[%s1365] sm:$0x1]
          %v1367 = vadd.f32 %v1362, %v1366
          %s1368 = sadd.s32 %s1354, 3
          %s1369 = sld [smem:[#allocation5 + %s1368]]
          %s1370 = scalar_lea.vmem [#allocation6], %s1369
          %v1371 = vld [vmem:[%s1370] sm:$0x1]
          %v1372 = vadd.f32 %v1367, %v1371
          %s1373 = sadd.s32 %s316, 45
          %s1374 = smul.u32 %s1373, 4
          %s1375 = sld [smem:[#allocation5 + %s1374]]
          %s1376 = scalar_lea.vmem [#allocation6], %s1375
          %v1377 = vld [vmem:[%s1376] sm:$0x1]
          %s1378 = sadd.s32 %s1374, 1
          %s1379 = sld [smem:[#allocation5 + %s1378]]
          %s1380 = scalar_lea.vmem [#allocation6], %s1379
          %v1381 = vld [vmem:[%s1380] sm:$0x1]
          %v1382 = vadd.f32 %v1377, %v1381
          %s1383 = sadd.s32 %s1374, 2
          %s1384 = sld [smem:[#allocation5 + %s1383]]
          %s1385 = scalar_lea.vmem [#allocation6], %s1384
          %v1386 = vld [vmem:[%s1385] sm:$0x1]
          %v1387 = vadd.f32 %v1382, %v1386
          %s1388 = sadd.s32 %s1374, 3
          %s1389 = sld [smem:[#allocation5 + %s1388]]
          %s1390 = scalar_lea.vmem [#allocation6], %s1389
          %v1391 = vld [vmem:[%s1390] sm:$0x1]
          %v1392 = vadd.f32 %v1387, %v1391
          %s1393 = sadd.s32 %s316, 46
          %s1394 = smul.u32 %s1393, 4
          %s1395 = sld [smem:[#allocation5 + %s1394]]
          %s1396 = scalar_lea.vmem [#allocation6], %s1395
          %v1397 = vld [vmem:[%s1396] sm:$0x1]
          %s1398 = sadd.s32 %s1394, 1
          %s1399 = sld [smem:[#allocation5 + %s1398]]
          %s1400 = scalar_lea.vmem [#allocation6], %s1399
          %v1401 = vld [vmem:[%s1400] sm:$0x1]
          %v1402 = vadd.f32 %v1397, %v1401
          %s1403 = sadd.s32 %s1394, 2
          %s1404 = sld [smem:[#allocation5 + %s1403]]
          %s1405 = scalar_lea.vmem [#allocation6], %s1404
          %v1406 = vld [vmem:[%s1405] sm:$0x1]
          %v1407 = vadd.f32 %v1402, %v1406
          %s1408 = sadd.s32 %s1394, 3
          %s1409 = sld [smem:[#allocation5 + %s1408]]
          %s1410 = scalar_lea.vmem [#allocation6], %s1409
          %v1411 = vld [vmem:[%s1410] sm:$0x1]
          %v1412 = vadd.f32 %v1407, %v1411
          %s1413 = sadd.s32 %s316, 47
          %s1414 = smul.u32 %s1413, 4
          %s1415 = sld [smem:[#allocation5 + %s1414]]
          %s1416 = scalar_lea.vmem [#allocation6], %s1415
          %v1417 = vld [vmem:[%s1416] sm:$0x1]
          %s1418 = sadd.s32 %s1414, 1
          %s1419 = sld [smem:[#allocation5 + %s1418]]
          %s1420 = scalar_lea.vmem [#allocation6], %s1419
          %v1421 = vld [vmem:[%s1420] sm:$0x1]
          %v1422 = vadd.f32 %v1417, %v1421
          %s1423 = sadd.s32 %s1414, 2
          %s1424 = sld [smem:[#allocation5 + %s1423]]
          %s1425 = scalar_lea.vmem [#allocation6], %s1424
          %v1426 = vld [vmem:[%s1425] sm:$0x1]
          %v1427 = vadd.f32 %v1422, %v1426
          %s1428 = sadd.s32 %s1414, 3
          %s1429 = sld [smem:[#allocation5 + %s1428]]
          %s1430 = scalar_lea.vmem [#allocation6], %s1429
          %v1431 = vld [vmem:[%s1430] sm:$0x1]
          %v1432 = vadd.f32 %v1427, %v1431
          %v1434 = vrot.slane %v1312, 7
          %v1437 = vrot.slane %v1332, 6
          %v1440 = vrot.slane %v1352, 5
          %v1443 = vrot.slane %v1372, 4
          %v1446 = vrot.slane %v1392, 3
          %v1449 = vrot.slane %v1412, 2
          %v1452 = vrot.slane %v1432, 1
          %v1454 = vsel %vm497, %v1292, %v1434
          %v1455 = vsel %vm499, %v1454, %v1437
          %v1456 = vsel %vm501, %v1455, %v1440
          %v1457 = vsel %vm503, %v1456, %v1443
          %v1458 = vsel %vm505, %v1457, %v1446
          %v1459 = vsel %vm507, %v1458, %v1449
          %v1460 = vsel %vm509, %v1459, %v1452
          %v1461 = vmul.f32 %v1460, 0.25
          %1462 = vst [vmem:[#allocation2 + $0x28] sm:$0xff] %v1461
          %s1463 = sadd.s32 %s316, 48
          %s1464 = smul.u32 %s1463, 4
          %s1465 = sld [smem:[#allocation5 + %s1464]]
          %s1466 = scalar_lea.vmem [#allocation6], %s1465
          %v1467 = vld [vmem:[%s1466] sm:$0x1]
          %s1468 = sadd.s32 %s1464, 1
          %s1469 = sld [smem:[#allocation5 + %s1468]]
          %s1470 = scalar_lea.vmem [#allocation6], %s1469
          %v1471 = vld [vmem:[%s1470] sm:$0x1]
          %v1472 = vadd.f32 %v1467, %v1471
          %s1473 = sadd.s32 %s1464, 2
          %s1474 = sld [smem:[#allocation5 + %s1473]]
          %s1475 = scalar_lea.vmem [#allocation6], %s1474
          %v1476 = vld [vmem:[%s1475] sm:$0x1]
          %v1477 = vadd.f32 %v1472, %v1476
          %s1478 = sadd.s32 %s1464, 3
          %s1479 = sld [smem:[#allocation5 + %s1478]]
          %s1480 = scalar_lea.vmem [#allocation6], %s1479
          %v1481 = vld [vmem:[%s1480] sm:$0x1]
          %v1482 = vadd.f32 %v1477, %v1481
          %s1483 = sadd.s32 %s316, 49
          %s1484 = smul.u32 %s1483, 4
          %s1485 = sld [smem:[#allocation5 + %s1484]]
          %s1486 = scalar_lea.vmem [#allocation6], %s1485
          %v1487 = vld [vmem:[%s1486] sm:$0x1]
          %s1488 = sadd.s32 %s1484, 1
          %s1489 = sld [smem:[#allocation5 + %s1488]]
          %s1490 = scalar_lea.vmem [#allocation6], %s1489
          %v1491 = vld [vmem:[%s1490] sm:$0x1]
          %v1492 = vadd.f32 %v1487, %v1491
          %s1493 = sadd.s32 %s1484, 2
          %s1494 = sld [smem:[#allocation5 + %s1493]]
          %s1495 = scalar_lea.vmem [#allocation6], %s1494
          %v1496 = vld [vmem:[%s1495] sm:$0x1]
          %v1497 = vadd.f32 %v1492, %v1496
          %s1498 = sadd.s32 %s1484, 3
          %s1499 = sld [smem:[#allocation5 + %s1498]]
          %s1500 = scalar_lea.vmem [#allocation6], %s1499
          %v1501 = vld [vmem:[%s1500] sm:$0x1]
          %v1502 = vadd.f32 %v1497, %v1501
          %s1503 = sadd.s32 %s316, 50
          %s1504 = smul.u32 %s1503, 4
          %s1505 = sld [smem:[#allocation5 + %s1504]]
          %s1506 = scalar_lea.vmem [#allocation6], %s1505
          %v1507 = vld [vmem:[%s1506] sm:$0x1]
          %s1508 = sadd.s32 %s1504, 1
          %s1509 = sld [smem:[#allocation5 + %s1508]]
          %s1510 = scalar_lea.vmem [#allocation6], %s1509
          %v1511 = vld [vmem:[%s1510] sm:$0x1]
          %v1512 = vadd.f32 %v1507, %v1511
          %s1513 = sadd.s32 %s1504, 2
          %s1514 = sld [smem:[#allocation5 + %s1513]]
          %s1515 = scalar_lea.vmem [#allocation6], %s1514
          %v1516 = vld [vmem:[%s1515] sm:$0x1]
          %v1517 = vadd.f32 %v1512, %v1516
          %s1518 = sadd.s32 %s1504, 3
          %s1519 = sld [smem:[#allocation5 + %s1518]]
          %s1520 = scalar_lea.vmem [#allocation6], %s1519
          %v1521 = vld [vmem:[%s1520] sm:$0x1]
          %v1522 = vadd.f32 %v1517, %v1521
          %s1523 = sadd.s32 %s316, 51
          %s1524 = smul.u32 %s1523, 4
          %s1525 = sld [smem:[#allocation5 + %s1524]]
          %s1526 = scalar_lea.vmem [#allocation6], %s1525
          %v1527 = vld [vmem:[%s1526] sm:$0x1]
          %s1528 = sadd.s32 %s1524, 1
          %s1529 = sld [smem:[#allocation5 + %s1528]]
          %s1530 = scalar_lea.vmem [#allocation6], %s1529
          %v1531 = vld [vmem:[%s1530] sm:$0x1]
          %v1532 = vadd.f32 %v1527, %v1531
          %s1533 = sadd.s32 %s1524, 2
          %s1534 = sld [smem:[#allocation5 + %s1533]]
          %s1535 = scalar_lea.vmem [#allocation6], %s1534
          %v1536 = vld [vmem:[%s1535] sm:$0x1]
          %v1537 = vadd.f32 %v1532, %v1536
          %s1538 = sadd.s32 %s1524, 3
          %s1539 = sld [smem:[#allocation5 + %s1538]]
          %s1540 = scalar_lea.vmem [#allocation6], %s1539
          %v1541 = vld [vmem:[%s1540] sm:$0x1]
          %v1542 = vadd.f32 %v1537, %v1541
          %s1543 = sadd.s32 %s316, 52
          %s1544 = smul.u32 %s1543, 4
          %s1545 = sld [smem:[#allocation5 + %s1544]]
          %s1546 = scalar_lea.vmem [#allocation6], %s1545
          %v1547 = vld [vmem:[%s1546] sm:$0x1]
          %s1548 = sadd.s32 %s1544, 1
          %s1549 = sld [smem:[#allocation5 + %s1548]]
          %s1550 = scalar_lea.vmem [#allocation6], %s1549
          %v1551 = vld [vmem:[%s1550] sm:$0x1]
          %v1552 = vadd.f32 %v1547, %v1551
          %s1553 = sadd.s32 %s1544, 2
          %s1554 = sld [smem:[#allocation5 + %s1553]]
          %s1555 = scalar_lea.vmem [#allocation6], %s1554
          %v1556 = vld [vmem:[%s1555] sm:$0x1]
          %v1557 = vadd.f32 %v1552, %v1556
          %s1558 = sadd.s32 %s1544, 3
          %s1559 = sld [smem:[#allocation5 + %s1558]]
          %s1560 = scalar_lea.vmem [#allocation6], %s1559
          %v1561 = vld [vmem:[%s1560] sm:$0x1]
          %v1562 = vadd.f32 %v1557, %v1561
          %s1563 = sadd.s32 %s316, 53
          %s1564 = smul.u32 %s1563, 4
          %s1565 = sld [smem:[#allocation5 + %s1564]]
          %s1566 = scalar_lea.vmem [#allocation6], %s1565
          %v1567 = vld [vmem:[%s1566] sm:$0x1]
          %s1568 = sadd.s32 %s1564, 1
          %s1569 = sld [smem:[#allocation5 + %s1568]]
          %s1570 = scalar_lea.vmem [#allocation6], %s1569
          %v1571 = vld [vmem:[%s1570] sm:$0x1]
          %v1572 = vadd.f32 %v1567, %v1571
          %s1573 = sadd.s32 %s1564, 2
          %s1574 = sld [smem:[#allocation5 + %s1573]]
          %s1575 = scalar_lea.vmem [#allocation6], %s1574
          %v1576 = vld [vmem:[%s1575] sm:$0x1]
          %v1577 = vadd.f32 %v1572, %v1576
          %s1578 = sadd.s32 %s1564, 3
          %s1579 = sld [smem:[#allocation5 + %s1578]]
          %s1580 = scalar_lea.vmem [#allocation6], %s1579
          %v1581 = vld [vmem:[%s1580] sm:$0x1]
          %v1582 = vadd.f32 %v1577, %v1581
          %s1583 = sadd.s32 %s316, 54
          %s1584 = smul.u32 %s1583, 4
          %s1585 = sld [smem:[#allocation5 + %s1584]]
          %s1586 = scalar_lea.vmem [#allocation6], %s1585
          %v1587 = vld [vmem:[%s1586] sm:$0x1]
          %s1588 = sadd.s32 %s1584, 1
          %s1589 = sld [smem:[#allocation5 + %s1588]]
          %s1590 = scalar_lea.vmem [#allocation6], %s1589
          %v1591 = vld [vmem:[%s1590] sm:$0x1]
          %v1592 = vadd.f32 %v1587, %v1591
          %s1593 = sadd.s32 %s1584, 2
          %s1594 = sld [smem:[#allocation5 + %s1593]]
          %s1595 = scalar_lea.vmem [#allocation6], %s1594
          %v1596 = vld [vmem:[%s1595] sm:$0x1]
          %v1597 = vadd.f32 %v1592, %v1596
          %s1598 = sadd.s32 %s1584, 3
          %s1599 = sld [smem:[#allocation5 + %s1598]]
          %s1600 = scalar_lea.vmem [#allocation6], %s1599
          %v1601 = vld [vmem:[%s1600] sm:$0x1]
          %v1602 = vadd.f32 %v1597, %v1601
          %s1603 = sadd.s32 %s316, 55
          %s1604 = smul.u32 %s1603, 4
          %s1605 = sld [smem:[#allocation5 + %s1604]]
          %s1606 = scalar_lea.vmem [#allocation6], %s1605
          %v1607 = vld [vmem:[%s1606] sm:$0x1]
          %s1608 = sadd.s32 %s1604, 1
          %s1609 = sld [smem:[#allocation5 + %s1608]]
          %s1610 = scalar_lea.vmem [#allocation6], %s1609
          %v1611 = vld [vmem:[%s1610] sm:$0x1]
          %v1612 = vadd.f32 %v1607, %v1611
          %s1613 = sadd.s32 %s1604, 2
          %s1614 = sld [smem:[#allocation5 + %s1613]]
          %s1615 = scalar_lea.vmem [#allocation6], %s1614
          %v1616 = vld [vmem:[%s1615] sm:$0x1]
          %v1617 = vadd.f32 %v1612, %v1616
          %s1618 = sadd.s32 %s1604, 3
          %s1619 = sld [smem:[#allocation5 + %s1618]]
          %s1620 = scalar_lea.vmem [#allocation6], %s1619
          %v1621 = vld [vmem:[%s1620] sm:$0x1]
          %v1622 = vadd.f32 %v1617, %v1621
          %v1624 = vrot.slane %v1502, 7
          %v1627 = vrot.slane %v1522, 6
          %v1630 = vrot.slane %v1542, 5
          %v1633 = vrot.slane %v1562, 4
          %v1636 = vrot.slane %v1582, 3
          %v1639 = vrot.slane %v1602, 2
          %v1642 = vrot.slane %v1622, 1
          %v1644 = vsel %vm497, %v1482, %v1624
          %v1645 = vsel %vm499, %v1644, %v1627
          %v1646 = vsel %vm501, %v1645, %v1630
          %v1647 = vsel %vm503, %v1646, %v1633
          %v1648 = vsel %vm505, %v1647, %v1636
          %v1649 = vsel %vm507, %v1648, %v1639
          %v1650 = vsel %vm509, %v1649, %v1642
          %v1651 = vmul.f32 %v1650, 0.25
          %1652 = vst [vmem:[#allocation2 + $0x30] sm:$0xff] %v1651
          %s1653 = sadd.s32 %s316, 56
          %s1654 = smul.u32 %s1653, 4
          %s1655 = sld [smem:[#allocation5 + %s1654]]
          %s1656 = scalar_lea.vmem [#allocation6], %s1655
          %v1657 = vld [vmem:[%s1656] sm:$0x1]
          %s1658 = sadd.s32 %s1654, 1
          %s1659 = sld [smem:[#allocation5 + %s1658]]
          %s1660 = scalar_lea.vmem [#allocation6], %s1659
          %v1661 = vld [vmem:[%s1660] sm:$0x1]
          %v1662 = vadd.f32 %v1657, %v1661
          %s1663 = sadd.s32 %s1654, 2
          %s1664 = sld [smem:[#allocation5 + %s1663]]
          %s1665 = scalar_lea.vmem [#allocation6], %s1664
          %v1666 = vld [vmem:[%s1665] sm:$0x1]
          %v1667 = vadd.f32 %v1662, %v1666
          %s1668 = sadd.s32 %s1654, 3
          %s1669 = sld [smem:[#allocation5 + %s1668]]
          %s1670 = scalar_lea.vmem [#allocation6], %s1669
          %v1671 = vld [vmem:[%s1670] sm:$0x1]
          %v1672 = vadd.f32 %v1667, %v1671
          %s1673 = sadd.s32 %s316, 57
          %s1674 = smul.u32 %s1673, 4
          %s1675 = sld [smem:[#allocation5 + %s1674]]
          %s1676 = scalar_lea.vmem [#allocation6], %s1675
          %v1677 = vld [vmem:[%s1676] sm:$0x1]
          %s1678 = sadd.s32 %s1674, 1
          %s1679 = sld [smem:[#allocation5 + %s1678]]
          %s1680 = scalar_lea.vmem [#allocation6], %s1679
          %v1681 = vld [vmem:[%s1680] sm:$0x1]
          %v1682 = vadd.f32 %v1677, %v1681
          %s1683 = sadd.s32 %s1674, 2
          %s1684 = sld [smem:[#allocation5 + %s1683]]
          %s1685 = scalar_lea.vmem [#allocation6], %s1684
          %v1686 = vld [vmem:[%s1685] sm:$0x1]
          %v1687 = vadd.f32 %v1682, %v1686
          %s1688 = sadd.s32 %s1674, 3
          %s1689 = sld [smem:[#allocation5 + %s1688]]
          %s1690 = scalar_lea.vmem [#allocation6], %s1689
          %v1691 = vld [vmem:[%s1690] sm:$0x1]
          %v1692 = vadd.f32 %v1687, %v1691
          %s1693 = sadd.s32 %s316, 58
          %s1694 = smul.u32 %s1693, 4
          %s1695 = sld [smem:[#allocation5 + %s1694]]
          %s1696 = scalar_lea.vmem [#allocation6], %s1695
          %v1697 = vld [vmem:[%s1696] sm:$0x1]
          %s1698 = sadd.s32 %s1694, 1
          %s1699 = sld [smem:[#allocation5 + %s1698]]
          %s1700 = scalar_lea.vmem [#allocation6], %s1699
          %v1701 = vld [vmem:[%s1700] sm:$0x1]
          %v1702 = vadd.f32 %v1697, %v1701
          %s1703 = sadd.s32 %s1694, 2
          %s1704 = sld [smem:[#allocation5 + %s1703]]
          %s1705 = scalar_lea.vmem [#allocation6], %s1704
          %v1706 = vld [vmem:[%s1705] sm:$0x1]
          %v1707 = vadd.f32 %v1702, %v1706
          %s1708 = sadd.s32 %s1694, 3
          %s1709 = sld [smem:[#allocation5 + %s1708]]
          %s1710 = scalar_lea.vmem [#allocation6], %s1709
          %v1711 = vld [vmem:[%s1710] sm:$0x1]
          %v1712 = vadd.f32 %v1707, %v1711
          %s1713 = sadd.s32 %s316, 59
          %s1714 = smul.u32 %s1713, 4
          %s1715 = sld [smem:[#allocation5 + %s1714]]
          %s1716 = scalar_lea.vmem [#allocation6], %s1715
          %v1717 = vld [vmem:[%s1716] sm:$0x1]
          %s1718 = sadd.s32 %s1714, 1
          %s1719 = sld [smem:[#allocation5 + %s1718]]
          %s1720 = scalar_lea.vmem [#allocation6], %s1719
          %v1721 = vld [vmem:[%s1720] sm:$0x1]
          %v1722 = vadd.f32 %v1717, %v1721
          %s1723 = sadd.s32 %s1714, 2
          %s1724 = sld [smem:[#allocation5 + %s1723]]
          %s1725 = scalar_lea.vmem [#allocation6], %s1724
          %v1726 = vld [vmem:[%s1725] sm:$0x1]
          %v1727 = vadd.f32 %v1722, %v1726
          %s1728 = sadd.s32 %s1714, 3
          %s1729 = sld [smem:[#allocation5 + %s1728]]
          %s1730 = scalar_lea.vmem [#allocation6], %s1729
          %v1731 = vld [vmem:[%s1730] sm:$0x1]
          %v1732 = vadd.f32 %v1727, %v1731
          %s1733 = sadd.s32 %s316, 60
          %s1734 = smul.u32 %s1733, 4
          %s1735 = sld [smem:[#allocation5 + %s1734]]
          %s1736 = scalar_lea.vmem [#allocation6], %s1735
          %v1737 = vld [vmem:[%s1736] sm:$0x1]
          %s1738 = sadd.s32 %s1734, 1
          %s1739 = sld [smem:[#allocation5 + %s1738]]
          %s1740 = scalar_lea.vmem [#allocation6], %s1739
          %v1741 = vld [vmem:[%s1740] sm:$0x1]
          %v1742 = vadd.f32 %v1737, %v1741
          %s1743 = sadd.s32 %s1734, 2
          %s1744 = sld [smem:[#allocation5 + %s1743]]
          %s1745 = scalar_lea.vmem [#allocation6], %s1744
          %v1746 = vld [vmem:[%s1745] sm:$0x1]
          %v1747 = vadd.f32 %v1742, %v1746
          %s1748 = sadd.s32 %s1734, 3
          %s1749 = sld [smem:[#allocation5 + %s1748]]
          %s1750 = scalar_lea.vmem [#allocation6], %s1749
          %v1751 = vld [vmem:[%s1750] sm:$0x1]
          %v1752 = vadd.f32 %v1747, %v1751
          %s1753 = sadd.s32 %s316, 61
          %s1754 = smul.u32 %s1753, 4
          %s1755 = sld [smem:[#allocation5 + %s1754]]
          %s1756 = scalar_lea.vmem [#allocation6], %s1755
          %v1757 = vld [vmem:[%s1756] sm:$0x1]
          %s1758 = sadd.s32 %s1754, 1
          %s1759 = sld [smem:[#allocation5 + %s1758]]
          %s1760 = scalar_lea.vmem [#allocation6], %s1759
          %v1761 = vld [vmem:[%s1760] sm:$0x1]
          %v1762 = vadd.f32 %v1757, %v1761
          %s1763 = sadd.s32 %s1754, 2
          %s1764 = sld [smem:[#allocation5 + %s1763]]
          %s1765 = scalar_lea.vmem [#allocation6], %s1764
          %v1766 = vld [vmem:[%s1765] sm:$0x1]
          %v1767 = vadd.f32 %v1762, %v1766
          %s1768 = sadd.s32 %s1754, 3
          %s1769 = sld [smem:[#allocation5 + %s1768]]
          %s1770 = scalar_lea.vmem [#allocation6], %s1769
          %v1771 = vld [vmem:[%s1770] sm:$0x1]
          %v1772 = vadd.f32 %v1767, %v1771
          %s1773 = sadd.s32 %s316, 62
          %s1774 = smul.u32 %s1773, 4
          %s1775 = sld [smem:[#allocation5 + %s1774]]
          %s1776 = scalar_lea.vmem [#allocation6], %s1775
          %v1777 = vld [vmem:[%s1776] sm:$0x1]
          %s1778 = sadd.s32 %s1774, 1
          %s1779 = sld [smem:[#allocation5 + %s1778]]
          %s1780 = scalar_lea.vmem [#allocation6], %s1779
          %v1781 = vld [vmem:[%s1780] sm:$0x1]
          %v1782 = vadd.f32 %v1777, %v1781
          %s1783 = sadd.s32 %s1774, 2
          %s1784 = sld [smem:[#allocation5 + %s1783]]
          %s1785 = scalar_lea.vmem [#allocation6], %s1784
          %v1786 = vld [vmem:[%s1785] sm:$0x1]
          %v1787 = vadd.f32 %v1782, %v1786
          %s1788 = sadd.s32 %s1774, 3
          %s1789 = sld [smem:[#allocation5 + %s1788]]
          %s1790 = scalar_lea.vmem [#allocation6], %s1789
          %v1791 = vld [vmem:[%s1790] sm:$0x1]
          %v1792 = vadd.f32 %v1787, %v1791
          %s1793 = sadd.s32 %s316, 63
          %s1794 = smul.u32 %s1793, 4
          %s1795 = sld [smem:[#allocation5 + %s1794]]
          %s1796 = scalar_lea.vmem [#allocation6], %s1795
          %v1797 = vld [vmem:[%s1796] sm:$0x1]
          %s1798 = sadd.s32 %s1794, 1
          %s1799 = sld [smem:[#allocation5 + %s1798]]
          %s1800 = scalar_lea.vmem [#allocation6], %s1799
          %v1801 = vld [vmem:[%s1800] sm:$0x1]
          %v1802 = vadd.f32 %v1797, %v1801
          %s1803 = sadd.s32 %s1794, 2
          %s1804 = sld [smem:[#allocation5 + %s1803]]
          %s1805 = scalar_lea.vmem [#allocation6], %s1804
          %v1806 = vld [vmem:[%s1805] sm:$0x1]
          %v1807 = vadd.f32 %v1802, %v1806
          %s1808 = sadd.s32 %s1794, 3
          %s1809 = sld [smem:[#allocation5 + %s1808]]
          %s1810 = scalar_lea.vmem [#allocation6], %s1809
          %v1811 = vld [vmem:[%s1810] sm:$0x1]
          %v1812 = vadd.f32 %v1807, %v1811
          %v1814 = vrot.slane %v1692, 7
          %v1817 = vrot.slane %v1712, 6
          %v1820 = vrot.slane %v1732, 5
          %v1823 = vrot.slane %v1752, 4
          %v1826 = vrot.slane %v1772, 3
          %v1829 = vrot.slane %v1792, 2
          %v1832 = vrot.slane %v1812, 1
          %v1834 = vsel %vm497, %v1672, %v1814
          %v1835 = vsel %vm499, %v1834, %v1817
          %v1836 = vsel %vm501, %v1835, %v1820
          %v1837 = vsel %vm503, %v1836, %v1823
          %v1838 = vsel %vm505, %v1837, %v1826
          %v1839 = vsel %vm507, %v1838, %v1829
          %v1840 = vsel %vm509, %v1839, %v1832
          %v1841 = vmul.f32 %v1840, 0.25
          %1842 = vst [vmem:[#allocation2 + $0x38] sm:$0xff] %v1841
          %v1843 = vld [vmem:[#allocation2] sm:$0xff]
          %v1844 = vld [vmem:[#allocation2 + $0x8] sm:$0xff]
          %v1845 = vld [vmem:[#allocation2 + $0x10] sm:$0xff]
          %v1846 = vld [vmem:[#allocation2 + $0x18] sm:$0xff]
          %v1847 = vld [vmem:[#allocation2 + $0x20] sm:$0xff]
          %v1848 = vld [vmem:[#allocation2 + $0x28] sm:$0xff]
          %v1849 = vld [vmem:[#allocation2 + $0x30] sm:$0xff]
          %v1850 = vld [vmem:[#allocation2 + $0x38] sm:$0xff]
          %v1851 = vpack.c.bf16 %v1844, %v1843
          %v1852 = vpack.c.bf16 %v1846, %v1845
          %v1853 = vpack.c.bf16 %v1848, %v1847
          %v1854 = vpack.c.bf16 %v1850, %v1849
          %v1855 = vld [vmem:[#allocation9] sm:$0xf]
          %v1856 = vld [vmem:[#allocation9 + $0x4] sm:$0xf]
          %v1857 = vld [vmem:[#allocation9 + $0x8] sm:$0xf]
          %v1858 = vld [vmem:[#allocation9 + $0xc] sm:$0xf]
          %v1859 = vld [vmem:[#allocation9 + $0x10] sm:$0xf]
          %v1860 = vld [vmem:[#allocation9 + $0x14] sm:$0xf]
          %v1861 = vld [vmem:[#allocation9 + $0x18] sm:$0xf]
          %v1862 = vld [vmem:[#allocation9 + $0x1c] sm:$0xf]
          %v1863 = vld [vmem:[#allocation9 + $0x20] sm:$0xf]
          %v1864 = vld [vmem:[#allocation9 + $0x24] sm:$0xf]
          %v1865 = vld [vmem:[#allocation9 + $0x28] sm:$0xf]
          %v1866 = vld [vmem:[#allocation9 + $0x2c] sm:$0xf]
          %v1867 = vld [vmem:[#allocation9 + $0x30] sm:$0xf]
          %v1868 = vld [vmem:[#allocation9 + $0x34] sm:$0xf]
          %v1869 = vld [vmem:[#allocation9 + $0x38] sm:$0xf]
          %v1870 = vld [vmem:[#allocation9 + $0x3c] sm:$0xf]
          %v1871 = vld [vmem:[%s3] sm:$0x1]
          %v1873 = vlaneseq
          %v1874 = vshrl.u32 %v1873, 7
          %v1875 = vsub.s32 0, %v1874
          %v1876 = vrot.slane %v1871, %v1875
          %v1894 = vunpack.c.l.b16 %v1855
          %v1895 = vunpack.c.l.b16 %v1856
          %v1896 = vunpack.c.l.b16 %v1857
          %v1897 = vunpack.c.l.b16 %v1858
          %v1898 = vunpack.c.l.b16 %v1859
          %v1899 = vunpack.c.l.b16 %v1860
          %v1900 = vunpack.c.l.b16 %v1861
          %v1901 = vunpack.c.l.b16 %v1862
          %v1902 = vunpack.c.l.b16 %v1863
          %v1903 = vunpack.c.l.b16 %v1864
          %v1904 = vunpack.c.l.b16 %v1865
          %v1905 = vunpack.c.l.b16 %v1866
          %v1906 = vunpack.c.l.b16 %v1867
          %v1907 = vunpack.c.l.b16 %v1868
          %v1908 = vunpack.c.l.b16 %v1869
          %v1909 = vunpack.c.l.b16 %v1870
          %v1910 = vpack.c.b16 %v1895, %v1894
          %v1911 = vpack.c.b16 %v1897, %v1896
          %v1912 = vpack.c.b16 %v1899, %v1898
          %v1913 = vpack.c.b16 %v1901, %v1900
          %v1914 = vpack.c.b16 %v1903, %v1902
          %v1915 = vpack.c.b16 %v1905, %v1904
          %v1916 = vpack.c.b16 %v1907, %v1906
          %v1917 = vpack.c.b16 %v1909, %v1908
          %1926 = vmatprep.subr.bf16.mxu0 0
          %1927 = vmatpush1.bf16.msra.mxu0 %v1910
          %1928 = vmatprep.subr.bf16.mxu0 0
          %1929 = vmatpush1.bf16.msra.mxu0 %v1911
          %1930 = vmatprep.subr.bf16.mxu0 0
          %1931 = vmatpush1.bf16.msra.mxu0 %v1912
          %1932 = vmatprep.subr.bf16.mxu0 0
          %1933 = vmatpush1.bf16.msra.mxu0 %v1913
          %1934 = vmatprep.subr.bf16.mxu0 0
          %1935 = vmatpush1.bf16.msra.mxu0 %v1914
          %1936 = vmatprep.subr.bf16.mxu0 0
          %1937 = vmatpush1.bf16.msra.mxu0 %v1915
          %1938 = vmatprep.subr.bf16.mxu0 0
          %1939 = vmatpush1.bf16.msra.mxu0 %v1916
          %1940 = vmatprep.subr.bf16.mxu0 0
          %1941 = vmatpush1.bf16.msra.mxu0 %v1917
          %1942 = vmatprep.subr.bf16.mxu0 0
          %1943 = vmatpush1.bf16.msra.mxu0 0
          %1944 = vmatprep.subr.bf16.mxu0 0
          %1945 = vmatpush1.bf16.msra.mxu0 0
          %1946 = vmatprep.subr.bf16.mxu0 0
          %1947 = vmatpush1.bf16.msra.mxu0 0
          %1948 = vmatprep.subr.bf16.mxu0 0
          %1949 = vmatpush1.bf16.msra.mxu0 0
          %1950 = vmatprep.subr.bf16.mxu0 0
          %1951 = vmatpush1.bf16.msra.mxu0 0
          %1952 = vmatprep.subr.bf16.mxu0 0
          %1953 = vmatpush1.bf16.msra.mxu0 0
          %1954 = vmatprep.subr.bf16.mxu0 0
          %1955 = vmatpush1.bf16.msra.mxu0 0
          %1956 = vmatprep.subr.bf16.mxu0 0
          %1957 = vmatpush1.bf16.msra.mxu0 0
          %1958 = vmatprep.mubr.bf16.mxu0 0
          %1959 = vmatmul.mubr.bf16.gmra.mrb[0].mxu0 %v1851
          %v1960 = vpop.f32.mrb[0].mxu0
          %v1961 = vadd.f32 %v1876, %v1960
          %v1962 = vpop.f32.mrb[0].mxu0
          %v1963 = vpop.f32.mrb[0].mxu0
          %v1964 = vadd.f32 %v1876, %v1963
          %v1965 = vpop.f32.mrb[0].mxu0
          %1966 = vmatprep.mubr.bf16.mxu0 0
          %1967 = vmatmul.mubr.bf16.gmra.mrb[0].mxu0 %v1852
          %v1968 = vpop.f32.mrb[0].mxu0
          %v1969 = vadd.f32 %v1876, %v1968
          %v1970 = vpop.f32.mrb[0].mxu0
          %v1971 = vpop.f32.mrb[0].mxu0
          %v1972 = vadd.f32 %v1876, %v1971
          %v1973 = vpop.f32.mrb[0].mxu0
          %1974 = vmatprep.mubr.bf16.mxu0 0
          %1975 = vmatmul.mubr.bf16.gmra.mrb[0].mxu0 %v1853
          %v1976 = vpop.f32.mrb[0].mxu0
          %v1977 = vadd.f32 %v1876, %v1976
          %v1978 = vpop.f32.mrb[0].mxu0
          %v1979 = vpop.f32.mrb[0].mxu0
          %v1980 = vadd.f32 %v1876, %v1979
          %v1981 = vpop.f32.mrb[0].mxu0
          %1982 = vmatprep.mubr.bf16.mxu0 0
          %1983 = vmatmul.mubr.bf16.gmra.mrb[0].mxu0 %v1854
          %v1984 = vpop.f32.mrb[0].mxu0
          %v1985 = vadd.f32 %v1876, %v1984
          %v1986 = vpop.f32.mrb[0].mxu0
          %v1987 = vpop.f32.mrb[0].mxu0
          %v1988 = vadd.f32 %v1876, %v1987
          %v1989 = vpop.f32.mrb[0].mxu0
          %1990 = vdwg.mxu0
          %v1991 = vmax.f32 %v1961, 0.0
          %v1992 = vmax.f32 %v1964, 0.0
          %v1993 = vmax.f32 %v1969, 0.0
          %v1994 = vmax.f32 %v1972, 0.0
          %v1995 = vmax.f32 %v1977, 0.0
          %v1996 = vmax.f32 %v1980, 0.0
          %v1997 = vmax.f32 %v1985, 0.0
          %v1998 = vmax.f32 %v1988, 0.0
          %1999 = vst [vmem:[#allocation3] sm:$0xff] %v1991
          %2000 = vst [vmem:[#allocation3 + $0x8] sm:$0xff] %v1992
          %2001 = vst [vmem:[#allocation3 + $0x10] sm:$0xff] %v1993
          %2002 = vst [vmem:[#allocation3 + $0x18] sm:$0xff] %v1994
          %2003 = vst [vmem:[#allocation3 + $0x20] sm:$0xff] %v1995
          %2004 = vst [vmem:[#allocation3 + $0x28] sm:$0xff] %v1996
          %2005 = vst [vmem:[#allocation3 + $0x30] sm:$0xff] %v1997
          %2006 = vst [vmem:[#allocation3 + $0x38] sm:$0xff] %v1998
        $region56: #{tpu_custom_call.1} parent=39 // pred_fallthru
          _
        %v2007 = vld [vmem:[#allocation3] sm:$0xff]
        %v2008 = vld [vmem:[#allocation3 + $0x8] sm:$0xff]
        %v2009 = vld [vmem:[#allocation3 + $0x10] sm:$0xff]
        %v2010 = vld [vmem:[#allocation3 + $0x18] sm:$0xff]
        %v2011 = vld [vmem:[#allocation3 + $0x20] sm:$0xff]
        %v2012 = vld [vmem:[#allocation3 + $0x28] sm:$0xff]
        %v2013 = vld [vmem:[#allocation3 + $0x30] sm:$0xff]
        %v2014 = vld [vmem:[#allocation3 + $0x38] sm:$0xff]
        %v2015 = vpack.c.bf16 %v2008, %v2007
        %v2016 = vpack.c.bf16 %v2010, %v2009
        %v2017 = vpack.c.bf16 %v2012, %v2011
        %v2018 = vpack.c.bf16 %v2014, %v2013
        %v2019 = vld [vmem:[%s272] sm:$0xff]
        %v2020 = vld [vmem:[%s272 + $0x8] sm:$0xff]
        %v2021 = vld [vmem:[%s272 + $0x10] sm:$0xff]
        %v2022 = vld [vmem:[%s272 + $0x18] sm:$0xff]
        %v2023 = vld [vmem:[%s272 + $0x20] sm:$0xff]
        %v2024 = vld [vmem:[%s272 + $0x28] sm:$0xff]
        %v2025 = vld [vmem:[%s272 + $0x30] sm:$0xff]
        %v2026 = vld [vmem:[%s272 + $0x38] sm:$0xff]
        %v2027 = vld [vmem:[%s272 + $0x40] sm:$0xff]
        %v2028 = vld [vmem:[%s272 + $0x48] sm:$0xff]
        %v2029 = vld [vmem:[%s272 + $0x50] sm:$0xff]
        %v2030 = vld [vmem:[%s272 + $0x58] sm:$0xff]
        %v2031 = vld [vmem:[%s272 + $0x60] sm:$0xff]
        %v2032 = vld [vmem:[%s272 + $0x68] sm:$0xff]
        %v2033 = vld [vmem:[%s272 + $0x70] sm:$0xff]
        %v2034 = vld [vmem:[%s272 + $0x78] sm:$0xff]
        %v2035 = vld [vmem:[%s272 + $0x80] sm:$0xff]
        %v2036 = vld [vmem:[%s272 + $0x88] sm:$0xff]
        %v2037 = vld [vmem:[%s272 + $0x90] sm:$0xff]
        %v2038 = vld [vmem:[%s272 + $0x98] sm:$0xff]
        %v2039 = vld [vmem:[%s272 + $0xa0] sm:$0xff]
        %v2040 = vld [vmem:[%s272 + $0xa8] sm:$0xff]
        %v2041 = vld [vmem:[%s272 + $0xb0] sm:$0xff]
        %v2042 = vld [vmem:[%s272 + $0xb8] sm:$0xff]
        %v2043 = vld [vmem:[%s272 + $0xc0] sm:$0xff]
        %v2044 = vld [vmem:[%s272 + $0xc8] sm:$0xff]
        %v2045 = vld [vmem:[%s272 + $0xd0] sm:$0xff]
        %v2046 = vld [vmem:[%s272 + $0xd8] sm:$0xff]
        %v2047 = vld [vmem:[%s272 + $0xe0] sm:$0xff]
        %v2048 = vld [vmem:[%s272 + $0xe8] sm:$0xff]
        %v2049 = vld [vmem:[%s272 + $0xf0] sm:$0xff]
        %v2050 = vld [vmem:[%s272 + $0xf8] sm:$0xff]
        %v2051 = vld [vmem:[%s307] sm:$0xf]
        %v2053 = vlaneseq
        %v2054 = vshrl.u32 %v2053, 7
        %v2055 = vsub.s32 0, %v2054
        %v2056 = vrot.slane %v2051, %v2055
        %v2057 = vlaneseq
        %v2058 = vshrl.u32 %v2057, 7
        %v2059 = vsub.s32 1, %v2058
        %v2060 = vrot.slane %v2051, %v2059
        %v2061 = vlaneseq
        %v2062 = vshrl.u32 %v2061, 7
        %v2063 = vsub.s32 2, %v2062
        %v2064 = vrot.slane %v2051, %v2063
        %v2065 = vlaneseq
        %v2066 = vshrl.u32 %v2065, 7
        %v2067 = vsub.s32 3, %v2066
        %v2068 = vrot.slane %v2051, %v2067
        %v2105 = vunpack.c.l.b16 %v2019
        %v2106 = vunpack.c.h.b16 %v2019
        %v2107 = vunpack.c.l.b16 %v2020
        %v2108 = vunpack.c.h.b16 %v2020
        %v2109 = vunpack.c.l.b16 %v2021
        %v2110 = vunpack.c.h.b16 %v2021
        %v2111 = vunpack.c.l.b16 %v2022
        %v2112 = vunpack.c.h.b16 %v2022
        %v2113 = vunpack.c.l.b16 %v2023
        %v2114 = vunpack.c.h.b16 %v2023
        %v2115 = vunpack.c.l.b16 %v2024
        %v2116 = vunpack.c.h.b16 %v2024
        %v2117 = vunpack.c.l.b16 %v2025
        %v2118 = vunpack.c.h.b16 %v2025
        %v2119 = vunpack.c.l.b16 %v2026
        %v2120 = vunpack.c.h.b16 %v2026
        %v2121 = vunpack.c.l.b16 %v2027
        %v2122 = vunpack.c.h.b16 %v2027
        %v2123 = vunpack.c.l.b16 %v2028
        %v2124 = vunpack.c.h.b16 %v2028
        %v2125 = vunpack.c.l.b16 %v2029
        %v2126 = vunpack.c.h.b16 %v2029
        %v2127 = vunpack.c.l.b16 %v2030
        %v2128 = vunpack.c.h.b16 %v2030
        %v2129 = vunpack.c.l.b16 %v2031
        %v2130 = vunpack.c.h.b16 %v2031
        %v2131 = vunpack.c.l.b16 %v2032
        %v2132 = vunpack.c.h.b16 %v2032
        %v2133 = vunpack.c.l.b16 %v2033
        %v2134 = vunpack.c.h.b16 %v2033
        %v2135 = vunpack.c.l.b16 %v2034
        %v2136 = vunpack.c.h.b16 %v2034
        %v2137 = vunpack.c.l.b16 %v2035
        %v2138 = vunpack.c.h.b16 %v2035
        %v2139 = vunpack.c.l.b16 %v2036
        %v2140 = vunpack.c.h.b16 %v2036
        %v2141 = vunpack.c.l.b16 %v2037
        %v2142 = vunpack.c.h.b16 %v2037
        %v2143 = vunpack.c.l.b16 %v2038
        %v2144 = vunpack.c.h.b16 %v2038
        %v2145 = vunpack.c.l.b16 %v2039
        %v2146 = vunpack.c.h.b16 %v2039
        %v2147 = vunpack.c.l.b16 %v2040
        %v2148 = vunpack.c.h.b16 %v2040
        %v2149 = vunpack.c.l.b16 %v2041
        %v2150 = vunpack.c.h.b16 %v2041
        %v2151 = vunpack.c.l.b16 %v2042
        %v2152 = vunpack.c.h.b16 %v2042
        %v2153 = vunpack.c.l.b16 %v2043
        %v2154 = vunpack.c.h.b16 %v2043
        %v2155 = vunpack.c.l.b16 %v2044
        %v2156 = vunpack.c.h.b16 %v2044
        %v2157 = vunpack.c.l.b16 %v2045
        %v2158 = vunpack.c.h.b16 %v2045
        %v2159 = vunpack.c.l.b16 %v2046
        %v2160 = vunpack.c.h.b16 %v2046
        %v2161 = vunpack.c.l.b16 %v2047
        %v2162 = vunpack.c.h.b16 %v2047
        %v2163 = vunpack.c.l.b16 %v2048
        %v2164 = vunpack.c.h.b16 %v2048
        %v2165 = vunpack.c.l.b16 %v2049
        %v2166 = vunpack.c.h.b16 %v2049
        %v2167 = vunpack.c.l.b16 %v2050
        %v2168 = vunpack.c.h.b16 %v2050
        %v2169 = vpack.c.b16 %v2109, %v2105
        %v2170 = vpack.c.b16 %v2110, %v2106
        %v2171 = vpack.c.b16 %v2111, %v2107
        %v2172 = vpack.c.b16 %v2112, %v2108
        %v2173 = vpack.c.b16 %v2117, %v2113
        %v2174 = vpack.c.b16 %v2118, %v2114
        %v2175 = vpack.c.b16 %v2119, %v2115
        %v2176 = vpack.c.b16 %v2120, %v2116
        %v2177 = vpack.c.b16 %v2125, %v2121
        %v2178 = vpack.c.b16 %v2126, %v2122
        %v2179 = vpack.c.b16 %v2127, %v2123
        %v2180 = vpack.c.b16 %v2128, %v2124
        %v2181 = vpack.c.b16 %v2133, %v2129
        %v2182 = vpack.c.b16 %v2134, %v2130
        %v2183 = vpack.c.b16 %v2135, %v2131
        %v2184 = vpack.c.b16 %v2136, %v2132
        %v2185 = vpack.c.b16 %v2141, %v2137
        %v2186 = vpack.c.b16 %v2142, %v2138
        %v2187 = vpack.c.b16 %v2143, %v2139
        %v2188 = vpack.c.b16 %v2144, %v2140
        %v2189 = vpack.c.b16 %v2149, %v2145
        %v2190 = vpack.c.b16 %v2150, %v2146
        %v2191 = vpack.c.b16 %v2151, %v2147
        %v2192 = vpack.c.b16 %v2152, %v2148
        %v2193 = vpack.c.b16 %v2157, %v2153
        %v2194 = vpack.c.b16 %v2158, %v2154
        %v2195 = vpack.c.b16 %v2159, %v2155
        %v2196 = vpack.c.b16 %v2160, %v2156
        %v2197 = vpack.c.b16 %v2165, %v2161
        %v2198 = vpack.c.b16 %v2166, %v2162
        %v2199 = vpack.c.b16 %v2167, %v2163
        %v2200 = vpack.c.b16 %v2168, %v2164
        %2233 = vmatprep.subr.bf16.mxu0 %v2170
        %2234 = vmatpush1.bf16.msra.mxu0 %v2169
        %2235 = vmatprep.subr.bf16.mxu0 %v2174
        %2236 = vmatpush1.bf16.msra.mxu0 %v2173
        %2237 = vmatprep.subr.bf16.mxu0 %v2178
        %2238 = vmatpush1.bf16.msra.mxu0 %v2177
        %2239 = vmatprep.subr.bf16.mxu0 %v2182
        %2240 = vmatpush1.bf16.msra.mxu0 %v2181
        %2241 = vmatprep.subr.bf16.mxu0 %v2186
        %2242 = vmatpush1.bf16.msra.mxu0 %v2185
        %2243 = vmatprep.subr.bf16.mxu0 %v2190
        %2244 = vmatpush1.bf16.msra.mxu0 %v2189
        %2245 = vmatprep.subr.bf16.mxu0 %v2194
        %2246 = vmatpush1.bf16.msra.mxu0 %v2193
        %2247 = vmatprep.subr.bf16.mxu0 %v2198
        %2248 = vmatpush1.bf16.msra.mxu0 %v2197
        %2249 = vmatprep.subr.bf16.mxu0 0
        %2250 = vmatpush1.bf16.msra.mxu0 0
        %2251 = vmatprep.subr.bf16.mxu0 0
        %2252 = vmatpush1.bf16.msra.mxu0 0
        %2253 = vmatprep.subr.bf16.mxu0 0
        %2254 = vmatpush1.bf16.msra.mxu0 0
        %2255 = vmatprep.subr.bf16.mxu0 0
        %2256 = vmatpush1.bf16.msra.mxu0 0
        %2257 = vmatprep.subr.bf16.mxu0 0
        %2258 = vmatpush1.bf16.msra.mxu0 0
        %2259 = vmatprep.subr.bf16.mxu0 0
        %2260 = vmatpush1.bf16.msra.mxu0 0
        %2261 = vmatprep.subr.bf16.mxu0 0
        %2262 = vmatpush1.bf16.msra.mxu0 0
        %2263 = vmatprep.subr.bf16.mxu0 0
        %2264 = vmatpush1.bf16.msra.mxu0 0
        %2265 = vmatprep.mubr.bf16.mxu0 0
        %2266 = vmatmul.mubr.bf16.gmra.mrb[0].mxu0 %v2015
        %v2267 = vpop.f32.mrb[0].mxu0
        %v2268 = vadd.f32 %v2056, %v2267
        %v2269 = vpop.f32.mrb[0].mxu0
        %v2270 = vadd.f32 %v2060, %v2269
        %v2271 = vpop.f32.mrb[0].mxu0
        %v2272 = vadd.f32 %v2056, %v2271
        %v2273 = vpop.f32.mrb[0].mxu0
        %v2274 = vadd.f32 %v2060, %v2273
        %2275 = vmatprep.mubr.bf16.mxu0 0
        %2276 = vmatmul.mubr.bf16.gmra.mrb[0].mxu0 %v2016
        %v2277 = vpop.f32.mrb[0].mxu0
        %v2278 = vadd.f32 %v2056, %v2277
        %v2279 = vpop.f32.mrb[0].mxu0
        %v2280 = vadd.f32 %v2060, %v2279
        %v2281 = vpop.f32.mrb[0].mxu0
        %v2282 = vadd.f32 %v2056, %v2281
        %v2283 = vpop.f32.mrb[0].mxu0
        %v2284 = vadd.f32 %v2060, %v2283
        %2285 = vmatprep.mubr.bf16.mxu0 0
        %2286 = vmatmul.mubr.bf16.gmra.mrb[0].mxu0 %v2017
        %v2287 = vpop.f32.mrb[0].mxu0
        %v2288 = vadd.f32 %v2056, %v2287
        %v2289 = vpop.f32.mrb[0].mxu0
        %v2290 = vadd.f32 %v2060, %v2289
        %v2291 = vpop.f32.mrb[0].mxu0
        %v2292 = vadd.f32 %v2056, %v2291
        %v2293 = vpop.f32.mrb[0].mxu0
        %v2294 = vadd.f32 %v2060, %v2293
        %2295 = vmatprep.mubr.bf16.mxu0 0
        %2296 = vmatmul.mubr.bf16.gmra.mrb[0].mxu0 %v2018
        %v2297 = vpop.f32.mrb[0].mxu0
        %v2298 = vadd.f32 %v2056, %v2297
        %v2299 = vpop.f32.mrb[0].mxu0
        %v2300 = vadd.f32 %v2060, %v2299
        %v2301 = vpop.f32.mrb[0].mxu0
        %v2302 = vadd.f32 %v2056, %v2301
        %v2303 = vpop.f32.mrb[0].mxu0
        %v2304 = vadd.f32 %v2060, %v2303
        %2305 = vdwg.mxu0
        %2306 = vmatprep.subr.bf16.mxu0 %v2172
        %2307 = vmatpush1.bf16.msra.mxu0 %v2171
        %2308 = vmatprep.subr.bf16.mxu0 %v2176
        %2309 = vmatpush1.bf16.msra.mxu0 %v2175
        %2310 = vmatprep.subr.bf16.mxu0 %v2180
        %2311 = vmatpush1.bf16.msra.mxu0 %v2179
        %2312 = vmatprep.subr.bf16.mxu0 %v2184
        %2313 = vmatpush1.bf16.msra.mxu0 %v2183
        %2314 = vmatprep.subr.bf16.mxu0 %v2188
        %2315 = vmatpush1.bf16.msra.mxu0 %v2187
        %2316 = vmatprep.subr.bf16.mxu0 %v2192
        %2317 = vmatpush1.bf16.msra.mxu0 %v2191
        %2318 = vmatprep.subr.bf16.mxu0 %v2196
        %2319 = vmatpush1.bf16.msra.mxu0 %v2195
        %2320 = vmatprep.subr.bf16.mxu0 %v2200
        %2321 = vmatpush1.bf16.msra.mxu0 %v2199
        %2322 = vmatprep.subr.bf16.mxu0 0
        %2323 = vmatpush1.bf16.msra.mxu0 0
        %2324 = vmatprep.subr.bf16.mxu0 0
        %2325 = vmatpush1.bf16.msra.mxu0 0
        %2326 = vmatprep.subr.bf16.mxu0 0
        %2327 = vmatpush1.bf16.msra.mxu0 0
        %2328 = vmatprep.subr.bf16.mxu0 0
        %2329 = vmatpush1.bf16.msra.mxu0 0
        %2330 = vmatprep.subr.bf16.mxu0 0
        %2331 = vmatpush1.bf16.msra.mxu0 0
        %2332 = vmatprep.subr.bf16.mxu0 0
        %2333 = vmatpush1.bf16.msra.mxu0 0
        %2334 = vmatprep.subr.bf16.mxu0 0
        %2335 = vmatpush1.bf16.msra.mxu0 0
        %2336 = vmatprep.subr.bf16.mxu0 0
        %2337 = vmatpush1.bf16.msra.mxu0 0
        %2338 = vmatprep.mubr.bf16.mxu0 0
        %2339 = vmatmul.mubr.bf16.gmra.mrb[0].mxu0 %v2015
        %v2340 = vpop.f32.mrb[0].mxu0
        %v2341 = vadd.f32 %v2064, %v2340
        %v2342 = vpop.f32.mrb[0].mxu0
        %v2343 = vadd.f32 %v2068, %v2342
        %v2344 = vpop.f32.mrb[0].mxu0
        %v2345 = vadd.f32 %v2064, %v2344
        %v2346 = vpop.f32.mrb[0].mxu0
        %v2347 = vadd.f32 %v2068, %v2346
        %2348 = vmatprep.mubr.bf16.mxu0 0
        %2349 = vmatmul.mubr.bf16.gmra.mrb[0].mxu0 %v2016
        %v2350 = vpop.f32.mrb[0].mxu0
        %v2351 = vadd.f32 %v2064, %v2350
        %v2352 = vpop.f32.mrb[0].mxu0
        %v2353 = vadd.f32 %v2068, %v2352
        %v2354 = vpop.f32.mrb[0].mxu0
        %v2355 = vadd.f32 %v2064, %v2354
        %v2356 = vpop.f32.mrb[0].mxu0
        %v2357 = vadd.f32 %v2068, %v2356
        %2358 = vmatprep.mubr.bf16.mxu0 0
        %2359 = vmatmul.mubr.bf16.gmra.mrb[0].mxu0 %v2017
        %v2360 = vpop.f32.mrb[0].mxu0
        %v2361 = vadd.f32 %v2064, %v2360
        %v2362 = vpop.f32.mrb[0].mxu0
        %v2363 = vadd.f32 %v2068, %v2362
        %v2364 = vpop.f32.mrb[0].mxu0
        %v2365 = vadd.f32 %v2064, %v2364
        %v2366 = vpop.f32.mrb[0].mxu0
        %v2367 = vadd.f32 %v2068, %v2366
        %2368 = vmatprep.mubr.bf16.mxu0 0
        %2369 = vmatmul.mubr.bf16.gmra.mrb[0].mxu0 %v2018
        %v2370 = vpop.f32.mrb[0].mxu0
        %v2371 = vadd.f32 %v2064, %v2370
        %v2372 = vpop.f32.mrb[0].mxu0
        %v2373 = vadd.f32 %v2068, %v2372
        %v2374 = vpop.f32.mrb[0].mxu0
        %v2375 = vadd.f32 %v2064, %v2374
        %v2376 = vpop.f32.mrb[0].mxu0
        %v2377 = vadd.f32 %v2068, %v2376
        %2378 = vdwg.mxu0
        %2379 = vst [vmem:[%s302] sm:$0xff] %v2268
        %2380 = vst [vmem:[%s302 + $0x8] sm:$0xff] %v2270
        %2381 = vst [vmem:[%s302 + $0x10] sm:$0xff] %v2341
        %2382 = vst [vmem:[%s302 + $0x18] sm:$0xff] %v2343
        %2383 = vst [vmem:[%s302 + $0x20] sm:$0xff] %v2272
        %2384 = vst [vmem:[%s302 + $0x28] sm:$0xff] %v2274
        %2385 = vst [vmem:[%s302 + $0x30] sm:$0xff] %v2345
        %2386 = vst [vmem:[%s302 + $0x38] sm:$0xff] %v2347
        %2387 = vst [vmem:[%s302 + $0x40] sm:$0xff] %v2278
        %2388 = vst [vmem:[%s302 + $0x48] sm:$0xff] %v2280
        %2389 = vst [vmem:[%s302 + $0x50] sm:$0xff] %v2351
        %2390 = vst [vmem:[%s302 + $0x58] sm:$0xff] %v2353
        %2391 = vst [vmem:[%s302 + $0x60] sm:$0xff] %v2282
        %2392 = vst [vmem:[%s302 + $0x68] sm:$0xff] %v2284
        %2393 = vst [vmem:[%s302 + $0x70] sm:$0xff] %v2355
        %2394 = vst [vmem:[%s302 + $0x78] sm:$0xff] %v2357
        %2395 = vst [vmem:[%s302 + $0x80] sm:$0xff] %v2288
        %2396 = vst [vmem:[%s302 + $0x88] sm:$0xff] %v2290
        %2397 = vst [vmem:[%s302 + $0x90] sm:$0xff] %v2361
        %2398 = vst [vmem:[%s302 + $0x98] sm:$0xff] %v2363
        %2399 = vst [vmem:[%s302 + $0xa0] sm:$0xff] %v2292
        %2400 = vst [vmem:[%s302 + $0xa8] sm:$0xff] %v2294
        %2401 = vst [vmem:[%s302 + $0xb0] sm:$0xff] %v2365
        %2402 = vst [vmem:[%s302 + $0xb8] sm:$0xff] %v2367
        %2403 = vst [vmem:[%s302 + $0xc0] sm:$0xff] %v2298
        %2404 = vst [vmem:[%s302 + $0xc8] sm:$0xff] %v2300
        %2405 = vst [vmem:[%s302 + $0xd0] sm:$0xff] %v2371
        %2406 = vst [vmem:[%s302 + $0xd8] sm:$0xff] %v2373
        %2407 = vst [vmem:[%s302 + $0xe0] sm:$0xff] %v2302
        %2408 = vst [vmem:[%s302 + $0xe8] sm:$0xff] %v2304
        %2409 = vst [vmem:[%s302 + $0xf0] sm:$0xff] %v2375
        %2410 = vst [vmem:[%s302 + $0xf8] sm:$0xff] %v2377
        %s2411 = sand.u32 %s163, 1
        %s2412 = scalar_lea.sflag [#allocation8], %s2411
        %s2413 = sand.u32 %s163, 1
        %s2414 = smul.addr %s2413, 256
        %s2415 = scalar_lea.vmem [#allocation12], %s2414
        // Predicated region
        $region57: #{tpu_custom_call.1} parent=39 // pred_check
          %p2416 = pneg %p173
        $region58: #{tpu_custom_call.1} parent=39 // pred_check_branch
          %2418 = sbr.rel (%p2416) target = $region60
        $region59: #{tpu_custom_call.1} parent=39 // pred_region
          %s2419 = smul.u32 8, %s30
          %s2420 = smul.u32 4, %s31
          %s2422 = ssub.s32 4096, 4096
          %2423 = vsyncadd %s2412, %s2422
          %s2424 = smul.addr %s2419, 8
          %s2425 = sadd.s32 %s2420, %s2424
          %s2426 = smul.addr %s2425, 128
          %s2427 = scalar_lea.hbm %s6, %s2426
          %s2428 = sshll.u32 %s2415, 4
          %s2429 = int_to_ptr.vmem [resolvable:$true] %s2428
          %2434 = dma.vmem_to_hbm [thread:$0]  %s2429, 4096, %s2427, %s2412, 512, 1024, 32
        $region60: #{tpu_custom_call.1} parent=39 // pred_fallthru
          _
      $region40: #{tpu_custom_call.1} parent=5 // pred_fallthru
        _
      %p2435 = scmp.le.s32.totalorder 2, %s21
      // Predicated region
      $region61: #{tpu_custom_call.1} parent=5 // pred_check
        %p2436 = pneg %p2435
      $region62: #{tpu_custom_call.1} parent=5 // pred_check_branch
        %2438 = sbr.rel (%p2436) target = $region64
      $region63: #{tpu_custom_call.1} parent=5 // pred_region
        %s2439 = ssub.s32 %s21, 2
        // Predicated region
        $region65: #{tpu_custom_call.1} parent=63 // pred_check
          %p2440 = pneg %p179
        $region66: #{tpu_custom_call.1} parent=63 // pred_check_branch
          %2442 = sbr.rel (%p2440) target = $region68
        $region67: #{tpu_custom_call.1} parent=63 // pred_region
          %s2443 = sand.u32 %s164, 1
          %s2444 = scalar_lea.sflag [#allocation8], %s2443
          %s2445 = sand.u32 %s164, 1
          %s2446 = smul.addr %s2445, 256
          %s2447 = scalar_lea.vmem [#allocation12], %s2446
          %2448 = dma.done %s2444, 4096
        $region68: #{tpu_custom_call.1} parent=63 // pred_fallthru
          _
      $region64: #{tpu_custom_call.1} parent=5 // pred_fallthru
        _
    $region6: #{tpu_custom_call.1} parent=1 // loop_footer
      %s25 = sadd.s32 1, %s21
    $region7: #{tpu_custom_call.1} parent=1 // loop_footer_branch
      %20 = sbr.rel target = $region3
    $region8: #{tpu_custom_call.1} parent=1 // loop_exit
      _
    %2449 = vsyncpa [#allocation7], 1
    %s2450 = scalar_lea.sflag [#allocation7], 1
    %2451 = vsyncpa %s2450, 1
    %2452 = vsyncpa [#allocation10], 1
    %2453 = vsyncpa [#allocation8], 1
    %s2454 = scalar_lea.sflag [#allocation8], 1
    %2455 = vsyncpa %s2454, 1

</llo_original>
